<compile_context>
chip_gen: v7x
topology: tpu7x:2x2x1
jax: 0.10.0
libtpu: 0.0.40
codegen_flags: <defaults>
</compile_context>

<pallas_src>
import jax
import jax.numpy as jnp
import numpy as np
from jax import lax
from jax.experimental import pallas as pl
from jax.experimental.pallas import tpu as pltpu


def _round_up(x, m):
    return (x + m - 1) // m * m


# ----------------------------------------------------------------------------
# Small parallel dense kernel: (M, K) @ (K, N) + b.  Used ONCE, to project the
# embedding table (hoists the RNN input projection out of the recurrence).
# ----------------------------------------------------------------------------
def _dense_bias_kernel(x_ref, w_ref, b_ref, o_ref):
    o_ref[...] = (
        jnp.dot(x_ref[...], w_ref[...], preferred_element_type=jnp.float32)
        + b_ref[...]
    ).astype(o_ref.dtype)


def pallas_dense(x, w, b, *, tile_m=256):
    """x: (M, K), w: (K, N), b: (1, N).  K and N already multiples of 128."""
    M, K = x.shape
    N = w.shape[1]
    Mp = _round_up(M, 8)
    tm = min(tile_m, Mp)
    Mp = _round_up(Mp, tm)
    if Mp != M:
        x = jnp.pad(x, ((0, Mp - M), (0, 0)))
    out = pl.pallas_call(
        _dense_bias_kernel,
        out_shape=jax.ShapeDtypeStruct((Mp, N), jnp.float32),
        grid_spec=pltpu.PrefetchScalarGridSpec(
            num_scalar_prefetch=0,
            grid=(Mp // tm,),
            in_specs=[
                pl.BlockSpec((tm, K), lambda i: (i, 0)),
                pl.BlockSpec((K, N), lambda i: (0, 0)),
                pl.BlockSpec((1, N), lambda i: (0, 0)),
            ],
            out_specs=pl.BlockSpec((tm, N), lambda i: (i, 0)),
        ),
        compiler_params=pltpu.CompilerParams(dimension_semantics=("parallel",)),
    )(x, w, b)
    return out[:M]


# ----------------------------------------------------------------------------
# Fused recurrence + output-Linear kernel.
# Grid = (batch blocks, time chunks); hidden state of the current batch block
# lives in VMEM scratch and is carried across the minor "arbitrary" time axis.
# Per grid step:
#   1) gather TT*BB pre-projected input rows from the VMEM-resident table
#      using SMEM-prefetched token ids (no HBM x_proj tensor),
#   2) run the statically-unrolled TT-step tanh recurrence (only in-loop
#      matmul: h @ W_hh^T), writing each h into a VMEM scratch chunk,
#   3) one fused (TT*BB, Hp) @ (Hp, Op) FC matmul -> pipelined logits output,
#   4) on the last chunk, emit the final hidden state as a second output.
# ----------------------------------------------------------------------------
def _make_fused_rnn_kernel(tt, bb, bp, t_valid):
    guard_tail = (t_valid % tt) != 0   # only emit per-step validity selects if needed

    def kernel(ids_ref, proj_ref, h0_ref, whh_ref, wfc_ref, bfc_ref,
               out_ref, hlast_ref, h_scr, xp_scr, hs_scr):
        b = pl.program_id(0)
        c = pl.program_id(1)
        base_t = c * tt
        base_b = b * bb

        # (1) In-kernel gather of projected-embedding rows for this chunk.
        #     ids_ref is the flat (Tp*Bp,) int32 scalar-prefetch array in SMEM;
        #     proj_ref is (V, 1, Hp) so the gather is a leading-dim dynamic index.
        for i in range(tt):
            for r in range(bb):
                tok = ids_ref[(base_t + i) * bp + base_b + r]
                xp_scr[pl.ds(i * bb + r, 1), :] = proj_ref[tok]

        # (2) Serial tanh recurrence over the chunk.
        @pl.when(c == 0)
        def _():
            h_scr[...] = h0_ref[...]

        h = h_scr[...]
        whh = whh_ref[...]                      # weight-resident (constant index_map)
        for i in range(tt):
            xp = xp_scr[pl.ds(i * bb, bb), :]
            h_new = jnp.tanh(
                xp + jnp.dot(h, whh, preferred_element_type=jnp.float32))
            if guard_tail:
                # padded tail steps must not advance the hidden state
                h_new = jnp.where(base_t + i < t_valid, h_new, h)
            h = h_new
            hs_scr[pl.ds(i * bb, bb), :] = h    # full-tile (8,128) store
        h_scr[...] = h

        # (3) Fused output Linear on the VMEM-resident hidden chunk.
        logits = (
            jnp.dot(hs_scr[...], wfc_ref[...], preferred_element_type=jnp.float32)
            + bfc_ref[...]
        )
        for i in range(tt):
            out_ref[i] = logits[i * bb:(i + 1) * bb, :]   # lane-dense stores

        # (4) Final hidden state, written once on the last time chunk.
        @pl.when(c == pl.num_programs(1) - 1)
        def _():
            hlast_ref[...] = h

    return kernel


def char_rnn_forward(x_ids, hidden, params, *, time_chunk=32):
    """x_ids: (B, T) int32 token ids, hidden: (1, B, H) f32 -> (out, hidden)."""
    emb_table = params["embedding"]                     # (V, H)
    B, T = x_ids.shape
    V, H = emb_table.shape
    O = params["w_fc"].shape[0]

    # Padded sizes: batch to sublane multiple, feature dims to lane multiple.
    if B > 8:
        Bp = _round_up(B, 16)
        BB = Bp // 2          # 2 batch blocks -> "parallel" axis shards across v7x's 2 TCs
    else:
        Bp = _round_up(B, 8)
        BB = Bp               # single batch block: whole batch per MXU step
    Hp = _round_up(H, 128)
    Op = _round_up(O, 128)
    TT = max(1, min(time_chunk, T))
    Tp = _round_up(T, TT)

    pad2 = lambda a, r, c: jnp.pad(a, ((0, r - a.shape[0]), (0, c - a.shape[1])))

    emb_p = pad2(emb_table, V, Hp)                      # (V, Hp)
    wih_t = pad2(params["w_ih"].T, Hp, Hp)              # (Hp, Hp)
    whh_t = pad2(params["w_hh"].T, Hp, Hp)              # (Hp, Hp)
    b_rnn = pad2((params["b_ih"] + params["b_hh"])[None, :], 1, Hp)
    wfc_t = pad2(params["w_fc"].T, Hp, Op)              # (Hp, Op)
    bfc = pad2(params["b_fc"][None, :], 1, Op)          # (1, Op)

    # Hoisted input projection: project the embedding TABLE once.
    proj_table = pallas_dense(emb_p, wih_t, b_rnn)      # (V, Hp)
    proj3 = proj_table.reshape(V, 1, Hp)                # leading-dim gatherable

    # Token ids, time-major, flattened for SMEM scalar prefetch.
    ids_pad = jnp.pad(x_ids, ((0, Bp - B), (0, Tp - T))).T.astype(jnp.int32)  # (Tp, Bp)
    ids_flat = ids_pad.reshape(-1)                       # (Tp*Bp,)

    h0 = jnp.pad(hidden[0], ((0, Bp - B), (0, Hp - H)))  # (Bp, Hp)

    logits_tm, h_last = pl.pallas_call(
        _make_fused_rnn_kernel(TT, BB, Bp, T),
        out_shape=(
            jax.ShapeDtypeStruct((Tp, Bp, Op), jnp.float32),
            jax.ShapeDtypeStruct((Bp, Hp), jnp.float32),
        ),
        grid_spec=pltpu.PrefetchScalarGridSpec(
            num_scalar_prefetch=1,
            grid=(Bp // BB, Tp // TT),
            in_specs=[
                pl.BlockSpec((V, 1, Hp), lambda b, c, _: (0, 0, 0)),    # proj table
                pl.BlockSpec((BB, Hp), lambda b, c, _: (b, 0)),         # h0
                pl.BlockSpec((Hp, Hp), lambda b, c, _: (0, 0)),         # W_hh^T
                pl.BlockSpec((Hp, Op), lambda b, c, _: (0, 0)),         # W_fc^T
                pl.BlockSpec((1, Op), lambda b, c, _: (0, 0)),          # b_fc
            ],
            out_specs=[
                pl.BlockSpec((TT, BB, Op), lambda b, c, _: (c, b, 0)),  # logits
                pl.BlockSpec((BB, Hp), lambda b, c, _: (b, 0)),         # final h
            ],
            scratch_shapes=[
                pltpu.VMEM((BB, Hp), jnp.float32),        # carried hidden state
                pltpu.VMEM((TT * BB, Hp), jnp.float32),   # gathered inputs
                pltpu.VMEM((TT * BB, Hp), jnp.float32),   # hidden chunk for FC
            ],
        ),
        compiler_params=pltpu.CompilerParams(
            dimension_semantics=("parallel", "arbitrary")),
    )(ids_flat, proj3, h0, whh_t, wfc_t, bfc)

    # Batch-major output to match PyTorch (B, T, O).  (Tiny trailing transpose;
    # kept in the wrapper — minor vs. the fused-kernel savings.)
    output = jnp.transpose(logits_tm[:T, :B, :O], (1, 0, 2))   # (B, T, O)
    hidden_out = h_last[None, :B, :H]                           # (1, B, H)
    return output, hidden_out


def reference_forward(x_ids, hidden, params):
    """Pure-JAX reference matching PyTorch CharRNN(model_type='RNN')."""
    emb = jnp.take(params["embedding"], x_ids, axis=0)       # (B, T, H)
    w_ih, w_hh = params["w_ih"], params["w_hh"]
    b_ih, b_hh = params["b_ih"], params["b_hh"]

    def step(h, x_t):
        h_new = jnp.tanh(x_t @ w_ih.T + b_ih + h @ w_hh.T + b_hh)
        return h_new, h_new

    h_final, hs = lax.scan(step, hidden[0], jnp.transpose(emb, (1, 0, 2)))
    hs = jnp.transpose(hs, (1, 0, 2))                        # (B, T, H)
    out = hs @ params["w_fc"].T + params["b_fc"]
    return out, h_final[None]


def init_params(key, vocab_size, hidden_size, output_size):
    ks = jax.random.split(key, 7)
    bound = 1.0 / np.sqrt(hidden_size)
    u = lambda k, shape: jax.random.uniform(k, shape, jnp.float32, -bound, bound)
    return {
        "embedding": jax.random.normal(ks[0], (vocab_size, hidden_size), jnp.float32),
        "w_ih": u(ks[1], (hidden_size, hidden_size)),
        "w_hh": u(ks[2], (hidden_size, hidden_size)),
        "b_ih": u(ks[3], (hidden_size,)),
        "b_hh": u(ks[4], (hidden_size,)),
        "w_fc": u(ks[5], (output_size, hidden_size)),
        "b_fc": u(ks[6], (output_size,)),
    }
    # TODO(synk): LSTM/GRU model_type variants not implemented (default 'RNN' path only).


if __name__ == "__main__":
    V, H, O = 16, 32, 16       # input_size (vocab), hidden_size, output_size
    B, T = 2, 8                # batch, sequence length

    key = jax.random.PRNGKey(0)
    kp, kx = jax.random.split(key)
    params = init_params(kp, V, H, O)
    x_ids = jax.random.randint(kx, (B, T), 0, V, dtype=jnp.int32)
    hidden0 = jnp.zeros((1, B, H), jnp.float32)   # init_hidden(batch_size)

    fwd = jax.jit(char_rnn_forward)
    out, hidden = fwd(x_ids, hidden0, params)
    out, hidden = jax.block_until_ready((out, hidden))

    out_ref, hidden_ref = reference_forward(x_ids, hidden0, params)
    assert out.shape == (B, T, O) and hidden.shape == (1, B, H)
    np.testing.assert_allclose(np.asarray(out), np.asarray(out_ref),
                               rtol=1e-5, atol=1e-5)
    np.testing.assert_allclose(np.asarray(hidden), np.asarray(hidden_ref),
                               rtol=1e-5, atol=1e-5)
    print("KERNEL_OK")
</pallas_src>

<mosaic_0001>
module attributes {stable_mosaic.version = 11 : i64} {
  func.func @_dense_bias_kernel(%arg0: i32, %arg1: memref<16x128xf32, #tpu.memory_space<vmem>>, %arg2: memref<128x128xf32, #tpu.memory_space<vmem>>, %arg3: memref<1x128xf32, #tpu.memory_space<vmem>>, %arg4: memref<16x128xf32, #tpu.memory_space<vmem>>) attributes {dimension_semantics = [#tpu.dimension_semantics<parallel>], iteration_bounds = array<i64: 1>, scalar_prefetch = 0 : i64, scratch_operands = 0 : i64, tpu.core_type = #tpu.core_type<tc>, window_params = [{transform_indices = @transform_0, window_bounds = array<i64: 16, 128>}, {pipeline_mode = #tpu.pipeline_mode<synchronous>, transform_indices = @transform_1, window_bounds = array<i64: 128, 128>}, {pipeline_mode = #tpu.pipeline_mode<synchronous>, transform_indices = @transform_2, window_bounds = array<i64: 1, 128>}, {transform_indices = @transform_3, window_bounds = array<i64: 16, 128>}]} {
    %c0 = arith.constant 0 : index
    %c0_0 = arith.constant 0 : index
    %0 = vector.load %arg1[%c0, %c0_0] : memref<16x128xf32, #tpu.memory_space<vmem>>, vector<16x128xf32>
    %c0_1 = arith.constant 0 : index
    %c0_2 = arith.constant 0 : index
    %1 = vector.load %arg2[%c0_1, %c0_2] : memref<128x128xf32, #tpu.memory_space<vmem>>, vector<128x128xf32>
    %cst = arith.constant dense<0.000000e+00> : vector<16x128xf32>
    %2 = tpu.matmul %0, %1, %cst {dimension_numbers = #tpu.dot_dimension_numbers<[1], [0], [0], [1], [0, 0, 1, 1], [], []>} : vector<16x128xf32>, vector<128x128xf32>, vector<16x128xf32> -> vector<16x128xf32>
    %c0_3 = arith.constant 0 : index
    %c0_4 = arith.constant 0 : index
    %3 = vector.load %arg3[%c0_3, %c0_4] : memref<1x128xf32, #tpu.memory_space<vmem>>, vector<1x128xf32>
    %4 = vector.broadcast %3 : vector<1x128xf32> to vector<16x128xf32>
    %5 = arith.addf %2, %4 : vector<16x128xf32>
    %c0_5 = arith.constant 0 : index
    %c0_6 = arith.constant 0 : index
    %6 = vector.load %arg4[%c0_5, %c0_6] : memref<16x128xf32, #tpu.memory_space<vmem>>, vector<16x128xf32>
    tpu.vector_store %arg4[%c0_5, %c0_6], %5 {strides = array<i32>} : memref<16x128xf32, #tpu.memory_space<vmem>>, vector<16x128xf32>,
    return
  }
  func.func @transform_0(%arg0: i32) -> (i32, i32) {
    %c0_i32 = arith.constant 0 : i32
    %c0_i32_0 = arith.constant 0 : i32
    return %arg0, %c0_i32 : i32, i32
  }
  func.func @transform_1(%arg0: i32) -> (i32, i32) {
    %c0_i32 = arith.constant 0 : i32
    %c0_i32_0 = arith.constant 0 : i32
    %c0_i32_1 = arith.constant 0 : i32
    return %c0_i32, %c0_i32_0 : i32, i32
  }
  func.func @transform_2(%arg0: i32) -> (i32, i32) {
    %c0_i32 = arith.constant 0 : i32
    %c0_i32_0 = arith.constant 0 : i32
    %c0_i32_1 = arith.constant 0 : i32
    return %c0_i32, %c0_i32_0 : i32, i32
  }
  func.func @transform_3(%arg0: i32) -> (i32, i32) {
    %c0_i32 = arith.constant 0 : i32
    %c0_i32_0 = arith.constant 0 : i32
    return %arg0, %c0_i32 : i32, i32
  }
}

module attributes {stable_mosaic.version = 11 : i64} {
  func.func @kernel(%arg0: i32, %arg1: i32, %arg2: memref<64xi32, #tpu.memory_space<smem>>, %arg3: memref<16x1x128xf32, #tpu.memory_space<vmem>>, %arg4: memref<8x128xf32, #tpu.memory_space<vmem>>, %arg5: memref<128x128xf32, #tpu.memory_space<vmem>>, %arg6: memref<128x128xf32, #tpu.memory_space<vmem>>, %arg7: memref<1x128xf32, #tpu.memory_space<vmem>>, %arg8: memref<8x8x128xf32, #tpu.memory_space<vmem>>, %arg9: memref<8x128xf32, #tpu.memory_space<vmem>>, %arg10: memref<8x128xf32, #tpu.memory_space<vmem>>, %arg11: memref<64x128xf32, #tpu.memory_space<vmem>>, %arg12: memref<64x128xf32, #tpu.memory_space<vmem>>) attributes {dimension_semantics = [#tpu.dimension_semantics<parallel>, #tpu.dimension_semantics<arbitrary>], iteration_bounds = array<i64: 1, 1>, scalar_prefetch = 1 : i64, scratch_operands = 3 : i64, tpu.core_type = #tpu.core_type<tc>, window_params = [{pipeline_mode = #tpu.pipeline_mode<synchronous>, transform_indices = @transform_0, window_bounds = array<i64: 16, 1, 128>}, {transform_indices = @transform_1, window_bounds = array<i64: 8, 128>}, {pipeline_mode = #tpu.pipeline_mode<synchronous>, transform_indices = @transform_2, window_bounds = array<i64: 128, 128>}, {pipeline_mode = #tpu.pipeline_mode<synchronous>, transform_indices = @transform_3, window_bounds = array<i64: 128, 128>}, {pipeline_mode = #tpu.pipeline_mode<synchronous>, transform_indices = @transform_4, window_bounds = array<i64: 1, 128>}, {transform_indices = @transform_5, window_bounds = array<i64: 8, 8, 128>}, {transform_indices = @transform_6, window_bounds = array<i64: 8, 128>}]} {
    %c8_i32 = arith.constant 8 : i32
    %0 = arith.muli %arg1, %c8_i32 : i32
    %c8_i32_0 = arith.constant 8 : i32
    %1 = arith.muli %arg0, %c8_i32_0 : i32
    %c0_i32 = arith.constant 0 : i32
    %2 = arith.addi %0, %c0_i32 : i32
    %c8_i32_1 = arith.constant 8 : i32
    %3 = arith.muli %2, %c8_i32_1 : i32
    %4 = arith.addi %3, %1 : i32
    %c0_i32_2 = arith.constant 0 : i32
    %5 = arith.addi %4, %c0_i32_2 : i32
    %6 = arith.index_cast %5 : i32 to index
    %7 = memref.load %arg2[%6] : memref<64xi32, #tpu.memory_space<smem>>
    %8 = arith.index_cast %7 : i32 to index
    %c0 = arith.constant 0 : index
    %c0_3 = arith.constant 0 : index
    %9 = vector.load %arg3[%8, %c0, %c0_3] : memref<16x1x128xf32, #tpu.memory_space<vmem>>, vector<1x1x128xf32>
    %10 = vector.shape_cast %9 : vector<1x1x128xf32> to vector<1x128xf32>
    %c0_4 = arith.constant 0 : index
    %c0_5 = arith.constant 0 : index
    %11 = vector.load %arg11[%c0_4, %c0_5] : memref<64x128xf32, #tpu.memory_space<vmem>>, vector<1x128xf32>
    tpu.vector_store %arg11[%c0_4, %c0_5], %10 {strides = array<i32>} : memref<64x128xf32, #tpu.memory_space<vmem>>, vector<1x128xf32>,
    %c0_i32_6 = arith.constant 0 : i32
    %12 = arith.addi %0, %c0_i32_6 : i32
    %c8_i32_7 = arith.constant 8 : i32
    %13 = arith.muli %12, %c8_i32_7 : i32
    %14 = arith.addi %13, %1 : i32
    %c1_i32 = arith.constant 1 : i32
    %15 = arith.addi %14, %c1_i32 : i32
    %16 = arith.index_cast %15 : i32 to index
    %17 = memref.load %arg2[%16] : memref<64xi32, #tpu.memory_space<smem>>
    %18 = arith.index_cast %17 : i32 to index
    %c0_8 = arith.constant 0 : index
    %c0_9 = arith.constant 0 : index
    %19 = vector.load %arg3[%18, %c0_8, %c0_9] : memref<16x1x128xf32, #tpu.memory_space<vmem>>, vector<1x1x128xf32>
    %20 = vector.shape_cast %19 : vector<1x1x128xf32> to vector<1x128xf32>
    %c1 = arith.constant 1 : index
    %c0_10 = arith.constant 0 : index
    %21 = vector.load %arg11[%c1, %c0_10] : memref<64x128xf32, #tpu.memory_space<vmem>>, vector<1x128xf32>
    tpu.vector_store %arg11[%c1, %c0_10], %20 {strides = array<i32>} : memref<64x128xf32, #tpu.memory_space<vmem>>, vector<1x128xf32>,
    %c0_i32_11 = arith.constant 0 : i32
    %22 = arith.addi %0, %c0_i32_11 : i32
    %c8_i32_12 = arith.constant 8 : i32
    %23 = arith.muli %22, %c8_i32_12 : i32
    %24 = arith.addi %23, %1 : i32
    %c2_i32 = arith.constant 2 : i32
    %25 = arith.addi %24, %c2_i32 : i32
    %26 = arith.index_cast %25 : i32 to index
    %27 = memref.load %arg2[%26] : memref<64xi32, #tpu.memory_space<smem>>
    %28 = arith.index_cast %27 : i32 to index
    %c0_13 = arith.constant 0 : index
    %c0_14 = arith.constant 0 : index
    %29 = vector.load %arg3[%28, %c0_13, %c0_14] : memref<16x1x128xf32, #tpu.memory_space<vmem>>, vector<1x1x128xf32>
    %30 = vector.shape_cast %29 : vector<1x1x128xf32> to vector<1x128xf32>
    %c2 = arith.constant 2 : index
    %c0_15 = arith.constant 0 : index
    %31 = vector.load %arg11[%c2, %c0_15] : memref<64x128xf32, #tpu.memory_space<vmem>>, vector<1x128xf32>
    tpu.vector_store %arg11[%c2, %c0_15], %30 {strides = array<i32>} : memref<64x128xf32, #tpu.memory_space<vmem>>, vector<1x128xf32>,
    %c0_i32_16 = arith.constant 0 : i32
    %32 = arith.addi %0, %c0_i32_16 : i32
    %c8_i32_17 = arith.constant 8 : i32
    %33 = arith.muli %32, %c8_i32_17 : i32
    %34 = arith.addi %33, %1 : i32
    %c3_i32 = arith.constant 3 : i32
    %35 = arith.addi %34, %c3_i32 : i32
    %36 = arith.index_cast %35 : i32 to index
    %37 = memref.load %arg2[%36] : memref<64xi32, #tpu.memory_space<smem>>
    %38 = arith.index_cast %37 : i32 to index
    %c0_18 = arith.constant 0 : index
    %c0_19 = arith.constant 0 : index
    %39 = vector.load %arg3[%38, %c0_18, %c0_19] : memref<16x1x128xf32, #tpu.memory_space<vmem>>, vector<1x1x128xf32>
    %40 = vector.shape_cast %39 : vector<1x1x128xf32> to vector<1x128xf32>
    %c3 = arith.constant 3 : index
    %c0_20 = arith.constant 0 : index
    %41 = vector.load %arg11[%c3, %c0_20] : memref<64x128xf32, #tpu.memory_space<vmem>>, vector<1x128xf32>
    tpu.vector_store %arg11[%c3, %c0_20], %40 {strides = array<i32>} : memref<64x128xf32, #tpu.memory_space<vmem>>, vector<1x128xf32>,
    %c0_i32_21 = arith.constant 0 : i32
    %42 = arith.addi %0, %c0_i32_21 : i32
    %c8_i32_22 = arith.constant 8 : i32
    %43 = arith.muli %42, %c8_i32_22 : i32
    %44 = arith.addi %43, %1 : i32
    %c4_i32 = arith.constant 4 : i32
    %45 = arith.addi %44, %c4_i32 : i32
    %46 = arith.index_cast %45 : i32 to index
    %47 = memref.load %arg2[%46] : memref<64xi32, #tpu.memory_space<smem>>
    %48 = arith.index_cast %47 : i32 to index
    %c0_23 = arith.constant 0 : index
    %c0_24 = arith.constant 0 : index
    %49 = vector.load %arg3[%48, %c0_23, %c0_24] : memref<16x1x128xf32, #tpu.memory_space<vmem>>, vector<1x1x128xf32>
    %50 = vector.shape_cast %49 : vector<1x1x128xf32> to vector<1x128xf32>
    %c4 = arith.constant 4 : index
    %c0_25 = arith.constant 0 : index
    %51 = vector.load %arg11[%c4, %c0_25] : memref<64x128xf32, #tpu.memory_space<vmem>>, vector<1x128xf32>
    tpu.vector_store %arg11[%c4, %c0_25], %50 {strides = array<i32>} : memref<64x128xf32, #tpu.memory_space<vmem>>, vector<1x128xf32>,
    %c0_i32_26 = arith.constant 0 : i32
    %52 = arith.addi %0, %c0_i32_26 : i32
    %c8_i32_27 = arith.constant 8 : i32
    %53 = arith.muli %52, %c8_i32_27 : i32
    %54 = arith.addi %53, %1 : i32
    %c5_i32 = arith.constant 5 : i32
    %55 = arith.addi %54, %c5_i32 : i32
    %56 = arith.index_cast %55 : i32 to index
    %57 = memref.load %arg2[%56] : memref<64xi32, #tpu.memory_space<smem>>
    %58 = arith.index_cast %57 : i32 to index
    %c0_28 = arith.constant 0 : index
    %c0_29 = arith.constant 0 : index
    %59 = vector.load %arg3[%58, %c0_28, %c0_29] : memref<16x1x128xf32, #tpu.memory_space<vmem>>, vector<1x1x128xf32>
    %60 = vector.shape_cast %59 : vector<1x1x128xf32> to vector<1x128xf32>
    %c5 = arith.constant 5 : index
    %c0_30 = arith.constant 0 : index
    %61 = vector.load %arg11[%c5, %c0_30] : memref<64x128xf32, #tpu.memory_space<vmem>>, vector<1x128xf32>
    tpu.vector_store %arg11[%c5, %c0_30], %60 {strides = array<i32>} : memref<64x128xf32, #tpu.memory_space<vmem>>, vector<1x128xf32>,
    %c0_i32_31 = arith.constant 0 : i32
    %62 = arith.addi %0, %c0_i32_31 : i32
    %c8_i32_32 = arith.constant 8 : i32
    %63 = arith.muli %62, %c8_i32_32 : i32
    %64 = arith.addi %63, %1 : i32
    %c6_i32 = arith.constant 6 : i32
    %65 = arith.addi %64, %c6_i32 : i32
    %66 = arith.index_cast %65 : i32 to index
    %67 = memref.load %arg2[%66] : memref<64xi32, #tpu.memory_space<smem>>
    %68 = arith.index_cast %67 : i32 to index
    %c0_33 = arith.constant 0 : index
    %c0_34 = arith.constant 0 : index
    %69 = vector.load %arg3[%68, %c0_33, %c0_34] : memref<16x1x128xf32, #tpu.memory_space<vmem>>, vector<1x1x128xf32>
    %70 = vector.shape_cast %69 : vector<1x1x128xf32> to vector<1x128xf32>
    %c6 = arith.constant 6 : index
    %c0_35 = arith.constant 0 : index
    %71 = vector.load %arg11[%c6, %c0_35] : memref<64x128xf32, #tpu.memory_space<vmem>>, vector<1x128xf32>
    tpu.vector_store %arg11[%c6, %c0_35], %70 {strides = array<i32>} : memref<64x128xf32, #tpu.memory_space<vmem>>, vector<1x128xf32>,
    %c0_i32_36 = arith.constant 0 : i32
    %72 = arith.addi %0, %c0_i32_36 : i32
    %c8_i32_37 = arith.constant 8 : i32
    %73 = arith.muli %72, %c8_i32_37 : i32
    %74 = arith.addi %73, %1 : i32
    %c7_i32 = arith.constant 7 : i32
    %75 = arith.addi %74, %c7_i32 : i32
    %76 = arith.index_cast %75 : i32 to index
    %77 = memref.load %arg2[%76] : memref<64xi32, #tpu.memory_space<smem>>
    %78 = arith.index_cast %77 : i32 to index
    %c0_38 = arith.constant 0 : index
    %c0_39 = arith.constant 0 : index
    %79 = vector.load %arg3[%78, %c0_38, %c0_39] : memref<16x1x128xf32, #tpu.memory_space<vmem>>, vector<1x1x128xf32>
    %80 = vector.shape_cast %79 : vector<1x1x128xf32> to vector<1x128xf32>
    %c7 = arith.constant 7 : index
    %c0_40 = arith.constant 0 : index
    %81 = vector.load %arg11[%c7, %c0_40] : memref<64x128xf32, #tpu.memory_space<vmem>>, vector<1x128xf32>
    tpu.vector_store %arg11[%c7, %c0_40], %80 {strides = array<i32>} : memref<64x128xf32, #tpu.memory_space<vmem>>, vector<1x128xf32>,
    %c1_i32_41 = arith.constant 1 : i32
    %82 = arith.addi %0, %c1_i32_41 : i32
    %c8_i32_42 = arith.constant 8 : i32
    %83 = arith.muli %82, %c8_i32_42 : i32
    %84 = arith.addi %83, %1 : i32
    %c0_i32_43 = arith.constant 0 : i32
    %85 = arith.addi %84, %c0_i32_43 : i32
    %86 = arith.index_cast %85 : i32 to index
    %87 = memref.load %arg2[%86] : memref<64xi32, #tpu.memory_space<smem>>
    %88 = arith.index_cast %87 : i32 to index
    %c0_44 = arith.constant 0 : index
    %c0_45 = arith.constant 0 : index
    %89 = vector.load %arg3[%88, %c0_44, %c0_45] : memref<16x1x128xf32, #tpu.memory_space<vmem>>, vector<1x1x128xf32>
    %90 = vector.shape_cast %89 : vector<1x1x128xf32> to vector<1x128xf32>
    %c8 = arith.constant 8 : index
    %c0_46 = arith.constant 0 : index
    %91 = vector.load %arg11[%c8, %c0_46] : memref<64x128xf32, #tpu.memory_space<vmem>>, vector<1x128xf32>
    tpu.vector_store %arg11[%c8, %c0_46], %90 {strides = array<i32>} : memref<64x128xf32, #tpu.memory_space<vmem>>, vector<1x128xf32>,
    %c1_i32_47 = arith.constant 1 : i32
    %92 = arith.addi %0, %c1_i32_47 : i32
    %c8_i32_48 = arith.constant 8 : i32
    %93 = arith.muli %92, %c8_i32_48 : i32
    %94 = arith.addi %93, %1 : i32
    %c1_i32_49 = arith.constant 1 : i32
    %95 = arith.addi %94, %c1_i32_49 : i32
    %96 = arith.index_cast %95 : i32 to index
    %97 = memref.load %arg2[%96] : memref<64xi32, #tpu.memory_space<smem>>
    %98 = arith.index_cast %97 : i32 to index
    %c0_50 = arith.constant 0 : index
    %c0_51 = arith.constant 0 : index
    %99 = vector.load %arg3[%98, %c0_50, %c0_51] : memref<16x1x128xf32, #tpu.memory_space<vmem>>, vector<1x1x128xf32>
    %100 = vector.shape_cast %99 : vector<1x1x128xf32> to vector<1x128xf32>
    %c9 = arith.constant 9 : index
    %c0_52 = arith.constant 0 : index
    %101 = vector.load %arg11[%c9, %c0_52] : memref<64x128xf32, #tpu.memory_space<vmem>>, vector<1x128xf32>
    tpu.vector_store %arg11[%c9, %c0_52], %100 {strides = array<i32>} : memref<64x128xf32, #tpu.memory_space<vmem>>, vector<1x128xf32>,
    %c1_i32_53 = arith.constant 1 : i32
    %102 = arith.addi %0, %c1_i32_53 : i32
    %c8_i32_54 = arith.constant 8 : i32
    %103 = arith.muli %102, %c8_i32_54 : i32
    %104 = arith.addi %103, %1 : i32
    %c2_i32_55 = arith.constant 2 : i32
    %105 = arith.addi %104, %c2_i32_55 : i32
    %106 = arith.index_cast %105 : i32 to index
    %107 = memref.load %arg2[%106] : memref<64xi32, #tpu.memory_space<smem>>
    %108 = arith.index_cast %107 : i32 to index
    %c0_56 = arith.constant 0 : index
    %c0_57 = arith.constant 0 : index
    %109 = vector.load %arg3[%108, %c0_56, %c0_57] : memref<16x1x128xf32, #tpu.memory_space<vmem>>, vector<1x1x128xf32>
    %110 = vector.shape_cast %109 : vector<1x1x128xf32> to vector<1x128xf32>
    %c10 = arith.constant 10 : index
    %c0_58 = arith.constant 0 : index
    %111 = vector.load %arg11[%c10, %c0_58] : memref<64x128xf32, #tpu.memory_space<vmem>>, vector<1x128xf32>
    tpu.vector_store %arg11[%c10, %c0_58], %110 {strides = array<i32>} : memref<64x128xf32, #tpu.memory_space<vmem>>, vector<1x128xf32>,
    %c1_i32_59 = arith.constant 1 : i32
    %112 = arith.addi %0, %c1_i32_59 : i32
    %c8_i32_60 = arith.constant 8 : i32
    %113 = arith.muli %112, %c8_i32_60 : i32
    %114 = arith.addi %113, %1 : i32
    %c3_i32_61 = arith.constant 3 : i32
    %115 = arith.addi %114, %c3_i32_61 : i32
    %116 = arith.index_cast %115 : i32 to index
    %117 = memref.load %arg2[%116] : memref<64xi32, #tpu.memory_space<smem>>
    %118 = arith.index_cast %117 : i32 to index
    %c0_62 = arith.constant 0 : index
    %c0_63 = arith.constant 0 : index
    %119 = vector.load %arg3[%118, %c0_62, %c0_63] : memref<16x1x128xf32, #tpu.memory_space<vmem>>, vector<1x1x128xf32>
    %120 = vector.shape_cast %119 : vector<1x1x128xf32> to vector<1x128xf32>
    %c11 = arith.constant 11 : index
    %c0_64 = arith.constant 0 : index
    %121 = vector.load %arg11[%c11, %c0_64] : memref<64x128xf32, #tpu.memory_space<vmem>>, vector<1x128xf32>
    tpu.vector_store %arg11[%c11, %c0_64], %120 {strides = array<i32>} : memref<64x128xf32, #tpu.memory_space<vmem>>, vector<1x128xf32>,
    %c1_i32_65 = arith.constant 1 : i32
    %122 = arith.addi %0, %c1_i32_65 : i32
    %c8_i32_66 = arith.constant 8 : i32
    %123 = arith.muli %122, %c8_i32_66 : i32
    %124 = arith.addi %123, %1 : i32
    %c4_i32_67 = arith.constant 4 : i32
    %125 = arith.addi %124, %c4_i32_67 : i32
    %126 = arith.index_cast %125 : i32 to index
    %127 = memref.load %arg2[%126] : memref<64xi32, #tpu.memory_space<smem>>
    %128 = arith.index_cast %127 : i32 to index
    %c0_68 = arith.constant 0 : index
    %c0_69 = arith.constant 0 : index
    %129 = vector.load %arg3[%128, %c0_68, %c0_69] : memref<16x1x128xf32, #tpu.memory_space<vmem>>, vector<1x1x128xf32>
    %130 = vector.shape_cast %129 : vector<1x1x128xf32> to vector<1x128xf32>
    %c12 = arith.constant 12 : index
    %c0_70 = arith.constant 0 : index
    %131 = vector.load %arg11[%c12, %c0_70] : memref<64x128xf32, #tpu.memory_space<vmem>>, vector<1x128xf32>
    tpu.vector_store %arg11[%c12, %c0_70], %130 {strides = array<i32>} : memref<64x128xf32, #tpu.memory_space<vmem>>, vector<1x128xf32>,
    %c1_i32_71 = arith.constant 1 : i32
    %132 = arith.addi %0, %c1_i32_71 : i32
    %c8_i32_72 = arith.constant 8 : i32
    %133 = arith.muli %132, %c8_i32_72 : i32
    %134 = arith.addi %133, %1 : i32
    %c5_i32_73 = arith.constant 5 : i32
    %135 = arith.addi %134, %c5_i32_73 : i32
    %136 = arith.index_cast %135 : i32 to index
    %137 = memref.load %arg2[%136] : memref<64xi32, #tpu.memory_space<smem>>
    %138 = arith.index_cast %137 : i32 to index
    %c0_74 = arith.constant 0 : index
    %c0_75 = arith.constant 0 : index
    %139 = vector.load %arg3[%138, %c0_74, %c0_75] : memref<16x1x128xf32, #tpu.memory_space<vmem>>, vector<1x1x128xf32>
    %140 = vector.shape_cast %139 : vector<1x1x128xf32> to vector<1x128xf32>
    %c13 = arith.constant 13 : index
    %c0_76 = arith.constant 0 : index
    %141 = vector.load %arg11[%c13, %c0_76] : memref<64x128xf32, #tpu.memory_space<vmem>>, vector<1x128xf32>
    tpu.vector_store %arg11[%c13, %c0_76], %140 {strides = array<i32>} : memref<64x128xf32, #tpu.memory_space<vmem>>, vector<1x128xf32>,
    %c1_i32_77 = arith.constant 1 : i32
    %142 = arith.addi %0, %c1_i32_77 : i32
    %c8_i32_78 = arith.constant 8 : i32
    %143 = arith.muli %142, %c8_i32_78 : i32
    %144 = arith.addi %143, %1 : i32
    %c6_i32_79 = arith.constant 6 : i32
    %145 = arith.addi %144, %c6_i32_79 : i32
    %146 = arith.index_cast %145 : i32 to index
    %147 = memref.load %arg2[%146] : memref<64xi32, #tpu.memory_space<smem>>
    %148 = arith.index_cast %147 : i32 to index
    %c0_80 = arith.constant 0 : index
    %c0_81 = arith.constant 0 : index
    %149 = vector.load %arg3[%148, %c0_80, %c0_81] : memref<16x1x128xf32, #tpu.memory_space<vmem>>, vector<1x1x128xf32>
    %150 = vector.shape_cast %149 : vector<1x1x128xf32> to vector<1x128xf32>
    %c14 = arith.constant 14 : index
    %c0_82 = arith.constant 0 : index
    %151 = vector.load %arg11[%c14, %c0_82] : memref<64x128xf32, #tpu.memory_space<vmem>>, vector<1x128xf32>
    tpu.vector_store %arg11[%c14, %c0_82], %150 {strides = array<i32>} : memref<64x128xf32, #tpu.memory_space<vmem>>, vector<1x128xf32>,
    %c1_i32_83 = arith.constant 1 : i32
    %152 = arith.addi %0, %c1_i32_83 : i32
    %c8_i32_84 = arith.constant 8 : i32
    %153 = arith.muli %152, %c8_i32_84 : i32
    %154 = arith.addi %153, %1 : i32
    %c7_i32_85 = arith.constant 7 : i32
    %155 = arith.addi %154, %c7_i32_85 : i32
    %156 = arith.index_cast %155 : i32 to index
    %157 = memref.load %arg2[%156] : memref<64xi32, #tpu.memory_space<smem>>
    %158 = arith.index_cast %157 : i32 to index
    %c0_86 = arith.constant 0 : index
    %c0_87 = arith.constant 0 : index
    %159 = vector.load %arg3[%158, %c0_86, %c0_87] : memref<16x1x128xf32, #tpu.memory_space<vmem>>, vector<1x1x128xf32>
    %160 = vector.shape_cast %159 : vector<1x1x128xf32> to vector<1x128xf32>
    %c15 = arith.constant 15 : index
    %c0_88 = arith.constant 0 : index
    %161 = vector.load %arg11[%c15, %c0_88] : memref<64x128xf32, #tpu.memory_space<vmem>>, vector<1x128xf32>
    tpu.vector_store %arg11[%c15, %c0_88], %160 {strides = array<i32>} : memref<64x128xf32, #tpu.memory_space<vmem>>, vector<1x128xf32>,
    %c2_i32_89 = arith.constant 2 : i32
    %162 = arith.addi %0, %c2_i32_89 : i32
    %c8_i32_90 = arith.constant 8 : i32
    %163 = arith.muli %162, %c8_i32_90 : i32
    %164 = arith.addi %163, %1 : i32
    %c0_i32_91 = arith.constant 0 : i32
    %165 = arith.addi %164, %c0_i32_91 : i32
    %166 = arith.index_cast %165 : i32 to index
    %167 = memref.load %arg2[%166] : memref<64xi32, #tpu.memory_space<smem>>
    %168 = arith.index_cast %167 : i32 to index
    %c0_92 = arith.constant 0 : index
    %c0_93 = arith.constant 0 : index
    %169 = vector.load %arg3[%168, %c0_92, %c0_93] : memref<16x1x128xf32, #tpu.memory_space<vmem>>, vector<1x1x128xf32>
    %170 = vector.shape_cast %169 : vector<1x1x128xf32> to vector<1x128xf32>
    %c16 = arith.constant 16 : index
    %c0_94 = arith.constant 0 : index
    %171 = vector.load %arg11[%c16, %c0_94] : memref<64x128xf32, #tpu.memory_space<vmem>>, vector<1x128xf32>
    tpu.vector_store %arg11[%c16, %c0_94], %170 {strides = array<i32>} : memref<64x128xf32, #tpu.memory_space<vmem>>, vector<1x128xf32>,
    %c2_i32_95 = arith.constant 2 : i32
    %172 = arith.addi %0, %c2_i32_95 : i32
    %c8_i32_96 = arith.constant 8 : i32
    %173 = arith.muli %172, %c8_i32_96 : i32
    %174 = arith.addi %173, %1 : i32
    %c1_i32_97 = arith.constant 1 : i32
    %175 = arith.addi %174, %c1_i32_97 : i32
    %176 = arith.index_cast %175 : i32 to index
    %177 = memref.load %arg2[%176] : memref<64xi32, #tpu.memory_space<smem>>
    %178 = arith.index_cast %177 : i32 to index
    %c0_98 = arith.constant 0 : index
    %c0_99 = arith.constant 0 : index
    %179 = vector.load %arg3[%178, %c0_98, %c0_99] : memref<16x1x128xf32, #tpu.memory_space<vmem>>, vector<1x1x128xf32>
    %180 = vector.shape_cast %179 : vector<1x1x128xf32> to vector<1x128xf32>
    %c17 = arith.constant 17 : index
    %c0_100 = arith.constant 0 : index
    %181 = vector.load %arg11[%c17, %c0_100] : memref<64x128xf32, #tpu.memory_space<vmem>>, vector<1x128xf32>
    tpu.vector_store %arg11[%c17, %c0_100], %180 {strides = array<i32>} : memref<64x128xf32, #tpu.memory_space<vmem>>, vector<1x128xf32>,
    %c2_i32_101 = arith.constant 2 : i32
    %182 = arith.addi %0, %c2_i32_101 : i32
    %c8_i32_102 = arith.constant 8 : i32
    %183 = arith.muli %182, %c8_i32_102 : i32
    %184 = arith.addi %183, %1 : i32
    %c2_i32_103 = arith.constant 2 : i32
    %185 = arith.addi %184, %c2_i32_103 : i32
    %186 = arith.index_cast %185 : i32 to index
    %187 = memref.load %arg2[%186] : memref<64xi32, #tpu.memory_space<smem>>
    %188 = arith.index_cast %187 : i32 to index
    %c0_104 = arith.constant 0 : index
    %c0_105 = arith.constant 0 : index
    %189 = vector.load %arg3[%188, %c0_104, %c0_105] : memref<16x1x128xf32, #tpu.memory_space<vmem>>, vector<1x1x128xf32>
    %190 = vector.shape_cast %189 : vector<1x1x128xf32> to vector<1x128xf32>
    %c18 = arith.constant 18 : index
    %c0_106 = arith.constant 0 : index
    %191 = vector.load %arg11[%c18, %c0_106] : memref<64x128xf32, #tpu.memory_space<vmem>>, vector<1x128xf32>
    tpu.vector_store %arg11[%c18, %c0_106], %190 {strides = array<i32>} : memref<64x128xf32, #tpu.memory_space<vmem>>, vector<1x128xf32>,
    %c2_i32_107 = arith.constant 2 : i32
    %192 = arith.addi %0, %c2_i32_107 : i32
    %c8_i32_108 = arith.constant 8 : i32
    %193 = arith.muli %192, %c8_i32_108 : i32
    %194 = arith.addi %193, %1 : i32
    %c3_i32_109 = arith.constant 3 : i32
    %195 = arith.addi %194, %c3_i32_109 : i32
    %196 = arith.index_cast %195 : i32 to index
    %197 = memref.load %arg2[%196] : memref<64xi32, #tpu.memory_space<smem>>
    %198 = arith.index_cast %197 : i32 to index
    %c0_110 = arith.constant 0 : index
    %c0_111 = arith.constant 0 : index
    %199 = vector.load %arg3[%198, %c0_110, %c0_111] : memref<16x1x128xf32, #tpu.memory_space<vmem>>, vector<1x1x128xf32>
    %200 = vector.shape_cast %199 : vector<1x1x128xf32> to vector<1x128xf32>
    %c19 = arith.constant 19 : index
    %c0_112 = arith.constant 0 : index
    %201 = vector.load %arg11[%c19, %c0_112] : memref<64x128xf32, #tpu.memory_space<vmem>>, vector<1x128xf32>
    tpu.vector_store %arg11[%c19, %c0_112], %200 {strides = array<i32>} : memref<64x128xf32, #tpu.memory_space<vmem>>, vector<1x128xf32>,
    %c2_i32_113 = arith.constant 2 : i32
    %202 = arith.addi %0, %c2_i32_113 : i32
    %c8_i32_114 = arith.constant 8 : i32
    %203 = arith.muli %202, %c8_i32_114 : i32
    %204 = arith.addi %203, %1 : i32
    %c4_i32_115 = arith.constant 4 : i32
    %205 = arith.addi %204, %c4_i32_115 : i32
    %206 = arith.index_cast %205 : i32 to index
    %207 = memref.load %arg2[%206] : memref<64xi32, #tpu.memory_space<smem>>
    %208 = arith.index_cast %207 : i32 to index
    %c0_116 = arith.constant 0 : index
    %c0_117 = arith.constant 0 : index
    %209 = vector.load %arg3[%208, %c0_116, %c0_117] : memref<16x1x128xf32, #tpu.memory_space<vmem>>, vector<1x1x128xf32>
    %210 = vector.shape_cast %209 : vector<1x1x128xf32> to vector<1x128xf32>
    %c20 = arith.constant 20 : index
    %c0_118 = arith.constant 0 : index
    %211 = vector.load %arg11[%c20, %c0_118] : memref<64x128xf32, #tpu.memory_space<vmem>>, vector<1x128xf32>
    tpu.vector_store %arg11[%c20, %c0_118], %210 {strides = array<i32>} : memref<64x128xf32, #tpu.memory_space<vmem>>, vector<1x128xf32>,
    %c2_i32_119 = arith.constant 2 : i32
    %212 = arith.addi %0, %c2_i32_119 : i32
    %c8_i32_120 = arith.constant 8 : i32
    %213 = arith.muli %212, %c8_i32_120 : i32
    %214 = arith.addi %213, %1 : i32
    %c5_i32_121 = arith.constant 5 : i32
    %215 = arith.addi %214, %c5_i32_121 : i32
    %216 = arith.index_cast %215 : i32 to index
    %217 = memref.load %arg2[%216] : memref<64xi32, #tpu.memory_space<smem>>
    %218 = arith.index_cast %217 : i32 to index
    %c0_122 = arith.constant 0 : index
    %c0_123 = arith.constant 0 : index
    %219 = vector.load %arg3[%218, %c0_122, %c0_123] : memref<16x1x128xf32, #tpu.memory_space<vmem>>, vector<1x1x128xf32>
    %220 = vector.shape_cast %219 : vector<1x1x128xf32> to vector<1x128xf32>
    %c21 = arith.constant 21 : index
    %c0_124 = arith.constant 0 : index
    %221 = vector.load %arg11[%c21, %c0_124] : memref<64x128xf32, #tpu.memory_space<vmem>>, vector<1x128xf32>
    tpu.vector_store %arg11[%c21, %c0_124], %220 {strides = array<i32>} : memref<64x128xf32, #tpu.memory_space<vmem>>, vector<1x128xf32>,
    %c2_i32_125 = arith.constant 2 : i32
    %222 = arith.addi %0, %c2_i32_125 : i32
    %c8_i32_126 = arith.constant 8 : i32
    %223 = arith.muli %222, %c8_i32_126 : i32
    %224 = arith.addi %223, %1 : i32
    %c6_i32_127 = arith.constant 6 : i32
    %225 = arith.addi %224, %c6_i32_127 : i32
    %226 = arith.index_cast %225 : i32 to index
    %227 = memref.load %arg2[%226] : memref<64xi32, #tpu.memory_space<smem>>
    %228 = arith.index_cast %227 : i32 to index
    %c0_128 = arith.constant 0 : index
    %c0_129 = arith.constant 0 : index
    %229 = vector.load %arg3[%228, %c0_128, %c0_129] : memref<16x1x128xf32, #tpu.memory_space<vmem>>, vector<1x1x128xf32>
    %230 = vector.shape_cast %229 : vector<1x1x128xf32> to vector<1x128xf32>
    %c22 = arith.constant 22 : index
    %c0_130 = arith.constant 0 : index
    %231 = vector.load %arg11[%c22, %c0_130] : memref<64x128xf32, #tpu.memory_space<vmem>>, vector<1x128xf32>
    tpu.vector_store %arg11[%c22, %c0_130], %230 {strides = array<i32>} : memref<64x128xf32, #tpu.memory_space<vmem>>, vector<1x128xf32>,
    %c2_i32_131 = arith.constant 2 : i32
    %232 = arith.addi %0, %c2_i32_131 : i32
    %c8_i32_132 = arith.constant 8 : i32
    %233 = arith.muli %232, %c8_i32_132 : i32
    %234 = arith.addi %233, %1 : i32
    %c7_i32_133 = arith.constant 7 : i32
    %235 = arith.addi %234, %c7_i32_133 : i32
    %236 = arith.index_cast %235 : i32 to index
    %237 = memref.load %arg2[%236] : memref<64xi32, #tpu.memory_space<smem>>
    %238 = arith.index_cast %237 : i32 to index
    %c0_134 = arith.constant 0 : index
    %c0_135 = arith.constant 0 : index
    %239 = vector.load %arg3[%238, %c0_134, %c0_135] : memref<16x1x128xf32, #tpu.memory_space<vmem>>, vector<1x1x128xf32>
    %240 = vector.shape_cast %239 : vector<1x1x128xf32> to vector<1x128xf32>
    %c23 = arith.constant 23 : index
    %c0_136 = arith.constant 0 : index
    %241 = vector.load %arg11[%c23, %c0_136] : memref<64x128xf32, #tpu.memory_space<vmem>>, vector<1x128xf32>
    tpu.vector_store %arg11[%c23, %c0_136], %240 {strides = array<i32>} : memref<64x128xf32, #tpu.memory_space<vmem>>, vector<1x128xf32>,
    %c3_i32_137 = arith.constant 3 : i32
    %242 = arith.addi %0, %c3_i32_137 : i32
    %c8_i32_138 = arith.constant 8 : i32
    %243 = arith.muli %242, %c8_i32_138 : i32
    %244 = arith.addi %243, %1 : i32
    %c0_i32_139 = arith.constant 0 : i32
    %245 = arith.addi %244, %c0_i32_139 : i32
    %246 = arith.index_cast %245 : i32 to index
    %247 = memref.load %arg2[%246] : memref<64xi32, #tpu.memory_space<smem>>
    %248 = arith.index_cast %247 : i32 to index
    %c0_140 = arith.constant 0 : index
    %c0_141 = arith.constant 0 : index
    %249 = vector.load %arg3[%248, %c0_140, %c0_141] : memref<16x1x128xf32, #tpu.memory_space<vmem>>, vector<1x1x128xf32>
    %250 = vector.shape_cast %249 : vector<1x1x128xf32> to vector<1x128xf32>
    %c24 = arith.constant 24 : index
    %c0_142 = arith.constant 0 : index
    %251 = vector.load %arg11[%c24, %c0_142] : memref<64x128xf32, #tpu.memory_space<vmem>>, vector<1x128xf32>
    tpu.vector_store %arg11[%c24, %c0_142], %250 {strides = array<i32>} : memref<64x128xf32, #tpu.memory_space<vmem>>, vector<1x128xf32>,
    %c3_i32_143 = arith.constant 3 : i32
    %252 = arith.addi %0, %c3_i32_143 : i32
    %c8_i32_144 = arith.constant 8 : i32
    %253 = arith.muli %252, %c8_i32_144 : i32
    %254 = arith.addi %253, %1 : i32
    %c1_i32_145 = arith.constant 1 : i32
    %255 = arith.addi %254, %c1_i32_145 : i32
    %256 = arith.index_cast %255 : i32 to index
    %257 = memref.load %arg2[%256] : memref<64xi32, #tpu.memory_space<smem>>
    %258 = arith.index_cast %257 : i32 to index
    %c0_146 = arith.constant 0 : index
    %c0_147 = arith.constant 0 : index
    %259 = vector.load %arg3[%258, %c0_146, %c0_147] : memref<16x1x128xf32, #tpu.memory_space<vmem>>, vector<1x1x128xf32>
    %260 = vector.shape_cast %259 : vector<1x1x128xf32> to vector<1x128xf32>
    %c25 = arith.constant 25 : index
    %c0_148 = arith.constant 0 : index
    %261 = vector.load %arg11[%c25, %c0_148] : memref<64x128xf32, #tpu.memory_space<vmem>>, vector<1x128xf32>
    tpu.vector_store %arg11[%c25, %c0_148], %260 {strides = array<i32>} : memref<64x128xf32, #tpu.memory_space<vmem>>, vector<1x128xf32>,
    %c3_i32_149 = arith.constant 3 : i32
    %262 = arith.addi %0, %c3_i32_149 : i32
    %c8_i32_150 = arith.constant 8 : i32
    %263 = arith.muli %262, %c8_i32_150 : i32
    %264 = arith.addi %263, %1 : i32
    %c2_i32_151 = arith.constant 2 : i32
    %265 = arith.addi %264, %c2_i32_151 : i32
    %266 = arith.index_cast %265 : i32 to index
    %267 = memref.load %arg2[%266] : memref<64xi32, #tpu.memory_space<smem>>
    %268 = arith.index_cast %267 : i32 to index
    %c0_152 = arith.constant 0 : index
    %c0_153 = arith.constant 0 : index
    %269 = vector.load %arg3[%268, %c0_152, %c0_153] : memref<16x1x128xf32, #tpu.memory_space<vmem>>, vector<1x1x128xf32>
    %270 = vector.shape_cast %269 : vector<1x1x128xf32> to vector<1x128xf32>
    %c26 = arith.constant 26 : index
    %c0_154 = arith.constant 0 : index
    %271 = vector.load %arg11[%c26, %c0_154] : memref<64x128xf32, #tpu.memory_space<vmem>>, vector<1x128xf32>
    tpu.vector_store %arg11[%c26, %c0_154], %270 {strides = array<i32>} : memref<64x128xf32, #tpu.memory_space<vmem>>, vector<1x128xf32>,
    %c3_i32_155 = arith.constant 3 : i32
    %272 = arith.addi %0, %c3_i32_155 : i32
    %c8_i32_156 = arith.constant 8 : i32
    %273 = arith.muli %272, %c8_i32_156 : i32
    %274 = arith.addi %273, %1 : i32
    %c3_i32_157 = arith.constant 3 : i32
    %275 = arith.addi %274, %c3_i32_157 : i32
    %276 = arith.index_cast %275 : i32 to index
    %277 = memref.load %arg2[%276] : memref<64xi32, #tpu.memory_space<smem>>
    %278 = arith.index_cast %277 : i32 to index
    %c0_158 = arith.constant 0 : index
    %c0_159 = arith.constant 0 : index
    %279 = vector.load %arg3[%278, %c0_158, %c0_159] : memref<16x1x128xf32, #tpu.memory_space<vmem>>, vector<1x1x128xf32>
    %280 = vector.shape_cast %279 : vector<1x1x128xf32> to vector<1x128xf32>
    %c27 = arith.constant 27 : index
    %c0_160 = arith.constant 0 : index
    %281 = vector.load %arg11[%c27, %c0_160] : memref<64x128xf32, #tpu.memory_space<vmem>>, vector<1x128xf32>
    tpu.vector_store %arg11[%c27, %c0_160], %280 {strides = array<i32>} : memref<64x128xf32, #tpu.memory_space<vmem>>, vector<1x128xf32>,
    %c3_i32_161 = arith.constant 3 : i32
    %282 = arith.addi %0, %c3_i32_161 : i32
    %c8_i32_162 = arith.constant 8 : i32
    %283 = arith.muli %282, %c8_i32_162 : i32
    %284 = arith.addi %283, %1 : i32
    %c4_i32_163 = arith.constant 4 : i32
    %285 = arith.addi %284, %c4_i32_163 : i32
    %286 = arith.index_cast %285 : i32 to index
    %287 = memref.load %arg2[%286] : memref<64xi32, #tpu.memory_space<smem>>
    %288 = arith.index_cast %287 : i32 to index
    %c0_164 = arith.constant 0 : index
    %c0_165 = arith.constant 0 : index
    %289 = vector.load %arg3[%288, %c0_164, %c0_165] : memref<16x1x128xf32, #tpu.memory_space<vmem>>, vector<1x1x128xf32>
    %290 = vector.shape_cast %289 : vector<1x1x128xf32> to vector<1x128xf32>
    %c28 = arith.constant 28 : index
    %c0_166 = arith.constant 0 : index
    %291 = vector.load %arg11[%c28, %c0_166] : memref<64x128xf32, #tpu.memory_space<vmem>>, vector<1x128xf32>
    tpu.vector_store %arg11[%c28, %c0_166], %290 {strides = array<i32>} : memref<64x128xf32, #tpu.memory_space<vmem>>, vector<1x128xf32>,
    %c3_i32_167 = arith.constant 3 : i32
    %292 = arith.addi %0, %c3_i32_167 : i32
    %c8_i32_168 = arith.constant 8 : i32
    %293 = arith.muli %292, %c8_i32_168 : i32
    %294 = arith.addi %293, %1 : i32
    %c5_i32_169 = arith.constant 5 : i32
    %295 = arith.addi %294, %c5_i32_169 : i32
    %296 = arith.index_cast %295 : i32 to index
    %297 = memref.load %arg2[%296] : memref<64xi32, #tpu.memory_space<smem>>
    %298 = arith.index_cast %297 : i32 to index
    %c0_170 = arith.constant 0 : index
    %c0_171 = arith.constant 0 : index
    %299 = vector.load %arg3[%298, %c0_170, %c0_171] : memref<16x1x128xf32, #tpu.memory_space<vmem>>, vector<1x1x128xf32>
    %300 = vector.shape_cast %299 : vector<1x1x128xf32> to vector<1x128xf32>
    %c29 = arith.constant 29 : index
    %c0_172 = arith.constant 0 : index
    %301 = vector.load %arg11[%c29, %c0_172] : memref<64x128xf32, #tpu.memory_space<vmem>>, vector<1x128xf32>
    tpu.vector_store %arg11[%c29, %c0_172], %300 {strides = array<i32>} : memref<64x128xf32, #tpu.memory_space<vmem>>, vector<1x128xf32>,
    %c3_i32_173 = arith.constant 3 : i32
    %302 = arith.addi %0, %c3_i32_173 : i32
    %c8_i32_174 = arith.constant 8 : i32
    %303 = arith.muli %302, %c8_i32_174 : i32
    %304 = arith.addi %303, %1 : i32
    %c6_i32_175 = arith.constant 6 : i32
    %305 = arith.addi %304, %c6_i32_175 : i32
    %306 = arith.index_cast %305 : i32 to index
    %307 = memref.load %arg2[%306] : memref<64xi32, #tpu.memory_space<smem>>
    %308 = arith.index_cast %307 : i32 to index
    %c0_176 = arith.constant 0 : index
    %c0_177 = arith.constant 0 : index
    %309 = vector.load %arg3[%308, %c0_176, %c0_177] : memref<16x1x128xf32, #tpu.memory_space<vmem>>, vector<1x1x128xf32>
    %310 = vector.shape_cast %309 : vector<1x1x128xf32> to vector<1x128xf32>
    %c30 = arith.constant 30 : index
    %c0_178 = arith.constant 0 : index
    %311 = vector.load %arg11[%c30, %c0_178] : memref<64x128xf32, #tpu.memory_space<vmem>>, vector<1x128xf32>
    tpu.vector_store %arg11[%c30, %c0_178], %310 {strides = array<i32>} : memref<64x128xf32, #tpu.memory_space<vmem>>, vector<1x128xf32>,
    %c3_i32_179 = arith.constant 3 : i32
    %312 = arith.addi %0, %c3_i32_179 : i32
    %c8_i32_180 = arith.constant 8 : i32
    %313 = arith.muli %312, %c8_i32_180 : i32
    %314 = arith.addi %313, %1 : i32
    %c7_i32_181 = arith.constant 7 : i32
    %315 = arith.addi %314, %c7_i32_181 : i32
    %316 = arith.index_cast %315 : i32 to index
    %317 = memref.load %arg2[%316] : memref<64xi32, #tpu.memory_space<smem>>
    %318 = arith.index_cast %317 : i32 to index
    %c0_182 = arith.constant 0 : index
    %c0_183 = arith.constant 0 : index
    %319 = vector.load %arg3[%318, %c0_182, %c0_183] : memref<16x1x128xf32, #tpu.memory_space<vmem>>, vector<1x1x128xf32>
    %320 = vector.shape_cast %319 : vector<1x1x128xf32> to vector<1x128xf32>
    %c31 = arith.constant 31 : index
    %c0_184 = arith.constant 0 : index
    %321 = vector.load %arg11[%c31, %c0_184] : memref<64x128xf32, #tpu.memory_space<vmem>>, vector<1x128xf32>
    tpu.vector_store %arg11[%c31, %c0_184], %320 {strides = array<i32>} : memref<64x128xf32, #tpu.memory_space<vmem>>, vector<1x128xf32>,
    %c4_i32_185 = arith.constant 4 : i32
    %322 = arith.addi %0, %c4_i32_185 : i32
    %c8_i32_186 = arith.constant 8 : i32
    %323 = arith.muli %322, %c8_i32_186 : i32
    %324 = arith.addi %323, %1 : i32
    %c0_i32_187 = arith.constant 0 : i32
    %325 = arith.addi %324, %c0_i32_187 : i32
    %326 = arith.index_cast %325 : i32 to index
    %327 = memref.load %arg2[%326] : memref<64xi32, #tpu.memory_space<smem>>
    %328 = arith.index_cast %327 : i32 to index
    %c0_188 = arith.constant 0 : index
    %c0_189 = arith.constant 0 : index
    %329 = vector.load %arg3[%328, %c0_188, %c0_189] : memref<16x1x128xf32, #tpu.memory_space<vmem>>, vector<1x1x128xf32>
    %330 = vector.shape_cast %329 : vector<1x1x128xf32> to vector<1x128xf32>
    %c32 = arith.constant 32 : index
    %c0_190 = arith.constant 0 : index
    %331 = vector.load %arg11[%c32, %c0_190] : memref<64x128xf32, #tpu.memory_space<vmem>>, vector<1x128xf32>
    tpu.vector_store %arg11[%c32, %c0_190], %330 {strides = array<i32>} : memref<64x128xf32, #tpu.memory_space<vmem>>, vector<1x128xf32>,
    %c4_i32_191 = arith.constant 4 : i32
    %332 = arith.addi %0, %c4_i32_191 : i32
    %c8_i32_192 = arith.constant 8 : i32
    %333 = arith.muli %332, %c8_i32_192 : i32
    %334 = arith.addi %333, %1 : i32
    %c1_i32_193 = arith.constant 1 : i32
    %335 = arith.addi %334, %c1_i32_193 : i32
    %336 = arith.index_cast %335 : i32 to index
    %337 = memref.load %arg2[%336] : memref<64xi32, #tpu.memory_space<smem>>
    %338 = arith.index_cast %337 : i32 to index
    %c0_194 = arith.constant 0 : index
    %c0_195 = arith.constant 0 : index
    %339 = vector.load %arg3[%338, %c0_194, %c0_195] : memref<16x1x128xf32, #tpu.memory_space<vmem>>, vector<1x1x128xf32>
    %340 = vector.shape_cast %339 : vector<1x1x128xf32> to vector<1x128xf32>
    %c33 = arith.constant 33 : index
    %c0_196 = arith.constant 0 : index
    %341 = vector.load %arg11[%c33, %c0_196] : memref<64x128xf32, #tpu.memory_space<vmem>>, vector<1x128xf32>
    tpu.vector_store %arg11[%c33, %c0_196], %340 {strides = array<i32>} : memref<64x128xf32, #tpu.memory_space<vmem>>, vector<1x128xf32>,
    %c4_i32_197 = arith.constant 4 : i32
    %342 = arith.addi %0, %c4_i32_197 : i32
    %c8_i32_198 = arith.constant 8 : i32
    %343 = arith.muli %342, %c8_i32_198 : i32
    %344 = arith.addi %343, %1 : i32
    %c2_i32_199 = arith.constant 2 : i32
    %345 = arith.addi %344, %c2_i32_199 : i32
    %346 = arith.index_cast %345 : i32 to index
    %347 = memref.load %arg2[%346] : memref<64xi32, #tpu.memory_space<smem>>
    %348 = arith.index_cast %347 : i32 to index
    %c0_200 = arith.constant 0 : index
    %c0_201 = arith.constant 0 : index
    %349 = vector.load %arg3[%348, %c0_200, %c0_201] : memref<16x1x128xf32, #tpu.memory_space<vmem>>, vector<1x1x128xf32>
    %350 = vector.shape_cast %349 : vector<1x1x128xf32> to vector<1x128xf32>
    %c34 = arith.constant 34 : index
    %c0_202 = arith.constant 0 : index
    %351 = vector.load %arg11[%c34, %c0_202] : memref<64x128xf32, #tpu.memory_space<vmem>>, vector<1x128xf32>
    tpu.vector_store %arg11[%c34, %c0_202], %350 {strides = array<i32>} : memref<64x128xf32, #tpu.memory_space<vmem>>, vector<1x128xf32>,
    %c4_i32_203 = arith.constant 4 : i32
    %352 = arith.addi %0, %c4_i32_203 : i32
    %c8_i32_204 = arith.constant 8 : i32
    %353 = arith.muli %352, %c8_i32_204 : i32
    %354 = arith.addi %353, %1 : i32
    %c3_i32_205 = arith.constant 3 : i32
    %355 = arith.addi %354, %c3_i32_205 : i32
    %356 = arith.index_cast %355 : i32 to index
    %357 = memref.load %arg2[%356] : memref<64xi32, #tpu.memory_space<smem>>
    %358 = arith.index_cast %357 : i32 to index
    %c0_206 = arith.constant 0 : index
    %c0_207 = arith.constant 0 : index
    %359 = vector.load %arg3[%358, %c0_206, %c0_207] : memref<16x1x128xf32, #tpu.memory_space<vmem>>, vector<1x1x128xf32>
    %360 = vector.shape_cast %359 : vector<1x1x128xf32> to vector<1x128xf32>
    %c35 = arith.constant 35 : index
    %c0_208 = arith.constant 0 : index
    %361 = vector.load %arg11[%c35, %c0_208] : memref<64x128xf32, #tpu.memory_space<vmem>>, vector<1x128xf32>
    tpu.vector_store %arg11[%c35, %c0_208], %360 {strides = array<i32>} : memref<64x128xf32, #tpu.memory_space<vmem>>, vector<1x128xf32>,
    %c4_i32_209 = arith.constant 4 : i32
    %362 = arith.addi %0, %c4_i32_209 : i32
    %c8_i32_210 = arith.constant 8 : i32
    %363 = arith.muli %362, %c8_i32_210 : i32
    %364 = arith.addi %363, %1 : i32
    %c4_i32_211 = arith.constant 4 : i32
    %365 = arith.addi %364, %c4_i32_211 : i32
    %366 = arith.index_cast %365 : i32 to index
    %367 = memref.load %arg2[%366] : memref<64xi32, #tpu.memory_space<smem>>
    %368 = arith.index_cast %367 : i32 to index
    %c0_212 = arith.constant 0 : index
    %c0_213 = arith.constant 0 : index
    %369 = vector.load %arg3[%368, %c0_212, %c0_213] : memref<16x1x128xf32, #tpu.memory_space<vmem>>, vector<1x1x128xf32>
    %370 = vector.shape_cast %369 : vector<1x1x128xf32> to vector<1x128xf32>
    %c36 = arith.constant 36 : index
    %c0_214 = arith.constant 0 : index
    %371 = vector.load %arg11[%c36, %c0_214] : memref<64x128xf32, #tpu.memory_space<vmem>>, vector<1x128xf32>
    tpu.vector_store %arg11[%c36, %c0_214], %370 {strides = array<i32>} : memref<64x128xf32, #tpu.memory_space<vmem>>, vector<1x128xf32>,
    %c4_i32_215 = arith.constant 4 : i32
    %372 = arith.addi %0, %c4_i32_215 : i32
    %c8_i32_216 = arith.constant 8 : i32
    %373 = arith.muli %372, %c8_i32_216 : i32
    %374 = arith.addi %373, %1 : i32
    %c5_i32_217 = arith.constant 5 : i32
    %375 = arith.addi %374, %c5_i32_217 : i32
    %376 = arith.index_cast %375 : i32 to index
    %377 = memref.load %arg2[%376] : memref<64xi32, #tpu.memory_space<smem>>
    %378 = arith.index_cast %377 : i32 to index
    %c0_218 = arith.constant 0 : index
    %c0_219 = arith.constant 0 : index
    %379 = vector.load %arg3[%378, %c0_218, %c0_219] : memref<16x1x128xf32, #tpu.memory_space<vmem>>, vector<1x1x128xf32>
    %380 = vector.shape_cast %379 : vector<1x1x128xf32> to vector<1x128xf32>
    %c37 = arith.constant 37 : index
    %c0_220 = arith.constant 0 : index
    %381 = vector.load %arg11[%c37, %c0_220] : memref<64x128xf32, #tpu.memory_space<vmem>>, vector<1x128xf32>
    tpu.vector_store %arg11[%c37, %c0_220], %380 {strides = array<i32>} : memref<64x128xf32, #tpu.memory_space<vmem>>, vector<1x128xf32>,
    %c4_i32_221 = arith.constant 4 : i32
    %382 = arith.addi %0, %c4_i32_221 : i32
    %c8_i32_222 = arith.constant 8 : i32
    %383 = arith.muli %382, %c8_i32_222 : i32
    %384 = arith.addi %383, %1 : i32
    %c6_i32_223 = arith.constant 6 : i32
    %385 = arith.addi %384, %c6_i32_223 : i32
    %386 = arith.index_cast %385 : i32 to index
    %387 = memref.load %arg2[%386] : memref<64xi32, #tpu.memory_space<smem>>
    %388 = arith.index_cast %387 : i32 to index
    %c0_224 = arith.constant 0 : index
    %c0_225 = arith.constant 0 : index
    %389 = vector.load %arg3[%388, %c0_224, %c0_225] : memref<16x1x128xf32, #tpu.memory_space<vmem>>, vector<1x1x128xf32>
    %390 = vector.shape_cast %389 : vector<1x1x128xf32> to vector<1x128xf32>
    %c38 = arith.constant 38 : index
    %c0_226 = arith.constant 0 : index
    %391 = vector.load %arg11[%c38, %c0_226] : memref<64x128xf32, #tpu.memory_space<vmem>>, vector<1x128xf32>
    tpu.vector_store %arg11[%c38, %c0_226], %390 {strides = array<i32>} : memref<64x128xf32, #tpu.memory_space<vmem>>, vector<1x128xf32>,
    %c4_i32_227 = arith.constant 4 : i32
    %392 = arith.addi %0, %c4_i32_227 : i32
    %c8_i32_228 = arith.constant 8 : i32
    %393 = arith.muli %392, %c8_i32_228 : i32
    %394 = arith.addi %393, %1 : i32
    %c7_i32_229 = arith.constant 7 : i32
    %395 = arith.addi %394, %c7_i32_229 : i32
    %396 = arith.index_cast %395 : i32 to index
    %397 = memref.load %arg2[%396] : memref<64xi32, #tpu.memory_space<smem>>
    %398 = arith.index_cast %397 : i32 to index
    %c0_230 = arith.constant 0 : index
    %c0_231 = arith.constant 0 : index
    %399 = vector.load %arg3[%398, %c0_230, %c0_231] : memref<16x1x128xf32, #tpu.memory_space<vmem>>, vector<1x1x128xf32>
    %400 = vector.shape_cast %399 : vector<1x1x128xf32> to vector<1x128xf32>
    %c39 = arith.constant 39 : index
    %c0_232 = arith.constant 0 : index
    %401 = vector.load %arg11[%c39, %c0_232] : memref<64x128xf32, #tpu.memory_space<vmem>>, vector<1x128xf32>
    tpu.vector_store %arg11[%c39, %c0_232], %400 {strides = array<i32>} : memref<64x128xf32, #tpu.memory_space<vmem>>, vector<1x128xf32>,
    %c5_i32_233 = arith.constant 5 : i32
    %402 = arith.addi %0, %c5_i32_233 : i32
    %c8_i32_234 = arith.constant 8 : i32
    %403 = arith.muli %402, %c8_i32_234 : i32
    %404 = arith.addi %403, %1 : i32
    %c0_i32_235 = arith.constant 0 : i32
    %405 = arith.addi %404, %c0_i32_235 : i32
    %406 = arith.index_cast %405 : i32 to index
    %407 = memref.load %arg2[%406] : memref<64xi32, #tpu.memory_space<smem>>
    %408 = arith.index_cast %407 : i32 to index
    %c0_236 = arith.constant 0 : index
    %c0_237 = arith.constant 0 : index
    %409 = vector.load %arg3[%408, %c0_236, %c0_237] : memref<16x1x128xf32, #tpu.memory_space<vmem>>, vector<1x1x128xf32>
    %410 = vector.shape_cast %409 : vector<1x1x128xf32> to vector<1x128xf32>
    %c40 = arith.constant 40 : index
    %c0_238 = arith.constant 0 : index
    %411 = vector.load %arg11[%c40, %c0_238] : memref<64x128xf32, #tpu.memory_space<vmem>>, vector<1x128xf32>
    tpu.vector_store %arg11[%c40, %c0_238], %410 {strides = array<i32>} : memref<64x128xf32, #tpu.memory_space<vmem>>, vector<1x128xf32>,
    %c5_i32_239 = arith.constant 5 : i32
    %412 = arith.addi %0, %c5_i32_239 : i32
    %c8_i32_240 = arith.constant 8 : i32
    %413 = arith.muli %412, %c8_i32_240 : i32
    %414 = arith.addi %413, %1 : i32
    %c1_i32_241 = arith.constant 1 : i32
    %415 = arith.addi %414, %c1_i32_241 : i32
    %416 = arith.index_cast %415 : i32 to index
    %417 = memref.load %arg2[%416] : memref<64xi32, #tpu.memory_space<smem>>
    %418 = arith.index_cast %417 : i32 to index
    %c0_242 = arith.constant 0 : index
    %c0_243 = arith.constant 0 : index
    %419 = vector.load %arg3[%418, %c0_242, %c0_243] : memref<16x1x128xf32, #tpu.memory_space<vmem>>, vector<1x1x128xf32>
    %420 = vector.shape_cast %419 : vector<1x1x128xf32> to vector<1x128xf32>
    %c41 = arith.constant 41 : index
    %c0_244 = arith.constant 0 : index
    %421 = vector.load %arg11[%c41, %c0_244] : memref<64x128xf32, #tpu.memory_space<vmem>>, vector<1x128xf32>
    tpu.vector_store %arg11[%c41, %c0_244], %420 {strides = array<i32>} : memref<64x128xf32, #tpu.memory_space<vmem>>, vector<1x128xf32>,
    %c5_i32_245 = arith.constant 5 : i32
    %422 = arith.addi %0, %c5_i32_245 : i32
    %c8_i32_246 = arith.constant 8 : i32
    %423 = arith.muli %422, %c8_i32_246 : i32
    %424 = arith.addi %423, %1 : i32
    %c2_i32_247 = arith.constant 2 : i32
    %425 = arith.addi %424, %c2_i32_247 : i32
    %426 = arith.index_cast %425 : i32 to index
    %427 = memref.load %arg2[%426] : memref<64xi32, #tpu.memory_space<smem>>
    %428 = arith.index_cast %427 : i32 to index
    %c0_248 = arith.constant 0 : index
    %c0_249 = arith.constant 0 : index
    %429 = vector.load %arg3[%428, %c0_248, %c0_249] : memref<16x1x128xf32, #tpu.memory_space<vmem>>, vector<1x1x128xf32>
    %430 = vector.shape_cast %429 : vector<1x1x128xf32> to vector<1x128xf32>
    %c42 = arith.constant 42 : index
    %c0_250 = arith.constant 0 : index
    %431 = vector.load %arg11[%c42, %c0_250] : memref<64x128xf32, #tpu.memory_space<vmem>>, vector<1x128xf32>
    tpu.vector_store %arg11[%c42, %c0_250], %430 {strides = array<i32>} : memref<64x128xf32, #tpu.memory_space<vmem>>, vector<1x128xf32>,
    %c5_i32_251 = arith.constant 5 : i32
    %432 = arith.addi %0, %c5_i32_251 : i32
    %c8_i32_252 = arith.constant 8 : i32
    %433 = arith.muli %432, %c8_i32_252 : i32
    %434 = arith.addi %433, %1 : i32
    %c3_i32_253 = arith.constant 3 : i32
    %435 = arith.addi %434, %c3_i32_253 : i32
    %436 = arith.index_cast %435 : i32 to index
    %437 = memref.load %arg2[%436] : memref<64xi32, #tpu.memory_space<smem>>
    %438 = arith.index_cast %437 : i32 to index
    %c0_254 = arith.constant 0 : index
    %c0_255 = arith.constant 0 : index
    %439 = vector.load %arg3[%438, %c0_254, %c0_255] : memref<16x1x128xf32, #tpu.memory_space<vmem>>, vector<1x1x128xf32>
    %440 = vector.shape_cast %439 : vector<1x1x128xf32> to vector<1x128xf32>
    %c43 = arith.constant 43 : index
    %c0_256 = arith.constant 0 : index
    %441 = vector.load %arg11[%c43, %c0_256] : memref<64x128xf32, #tpu.memory_space<vmem>>, vector<1x128xf32>
    tpu.vector_store %arg11[%c43, %c0_256], %440 {strides = array<i32>} : memref<64x128xf32, #tpu.memory_space<vmem>>, vector<1x128xf32>,
    %c5_i32_257 = arith.constant 5 : i32
    %442 = arith.addi %0, %c5_i32_257 : i32
    %c8_i32_258 = arith.constant 8 : i32
    %443 = arith.muli %442, %c8_i32_258 : i32
    %444 = arith.addi %443, %1 : i32
    %c4_i32_259 = arith.constant 4 : i32
    %445 = arith.addi %444, %c4_i32_259 : i32
    %446 = arith.index_cast %445 : i32 to index
    %447 = memref.load %arg2[%446] : memref<64xi32, #tpu.memory_space<smem>>
    %448 = arith.index_cast %447 : i32 to index
    %c0_260 = arith.constant 0 : index
    %c0_261 = arith.constant 0 : index
    %449 = vector.load %arg3[%448, %c0_260, %c0_261] : memref<16x1x128xf32, #tpu.memory_space<vmem>>, vector<1x1x128xf32>
    %450 = vector.shape_cast %449 : vector<1x1x128xf32> to vector<1x128xf32>
    %c44 = arith.constant 44 : index
    %c0_262 = arith.constant 0 : index
    %451 = vector.load %arg11[%c44, %c0_262] : memref<64x128xf32, #tpu.memory_space<vmem>>, vector<1x128xf32>
    tpu.vector_store %arg11[%c44, %c0_262], %450 {strides = array<i32>} : memref<64x128xf32, #tpu.memory_space<vmem>>, vector<1x128xf32>,
    %c5_i32_263 = arith.constant 5 : i32
    %452 = arith.addi %0, %c5_i32_263 : i32
    %c8_i32_264 = arith.constant 8 : i32
    %453 = arith.muli %452, %c8_i32_264 : i32
    %454 = arith.addi %453, %1 : i32
    %c5_i32_265 = arith.constant 5 : i32
    %455 = arith.addi %454, %c5_i32_265 : i32
    %456 = arith.index_cast %455 : i32 to index
    %457 = memref.load %arg2[%456] : memref<64xi32, #tpu.memory_space<smem>>
    %458 = arith.index_cast %457 : i32 to index
    %c0_266 = arith.constant 0 : index
    %c0_267 = arith.constant 0 : index
    %459 = vector.load %arg3[%458, %c0_266, %c0_267] : memref<16x1x128xf32, #tpu.memory_space<vmem>>, vector<1x1x128xf32>
    %460 = vector.shape_cast %459 : vector<1x1x128xf32> to vector<1x128xf32>
    %c45 = arith.constant 45 : index
    %c0_268 = arith.constant 0 : index
    %461 = vector.load %arg11[%c45, %c0_268] : memref<64x128xf32, #tpu.memory_space<vmem>>, vector<1x128xf32>
    tpu.vector_store %arg11[%c45, %c0_268], %460 {strides = array<i32>} : memref<64x128xf32, #tpu.memory_space<vmem>>, vector<1x128xf32>,
    %c5_i32_269 = arith.constant 5 : i32
    %462 = arith.addi %0, %c5_i32_269 : i32
    %c8_i32_270 = arith.constant 8 : i32
    %463 = arith.muli %462, %c8_i32_270 : i32
    %464 = arith.addi %463, %1 : i32
    %c6_i32_271 = arith.constant 6 : i32
    %465 = arith.addi %464, %c6_i32_271 : i32
    %466 = arith.index_cast %465 : i32 to index
    %467 = memref.load %arg2[%466] : memref<64xi32, #tpu.memory_space<smem>>
    %468 = arith.index_cast %467 : i32 to index
    %c0_272 = arith.constant 0 : index
    %c0_273 = arith.constant 0 : index
    %469 = vector.load %arg3[%468, %c0_272, %c0_273] : memref<16x1x128xf32, #tpu.memory_space<vmem>>, vector<1x1x128xf32>
    %470 = vector.shape_cast %469 : vector<1x1x128xf32> to vector<1x128xf32>
    %c46 = arith.constant 46 : index
    %c0_274 = arith.constant 0 : index
    %471 = vector.load %arg11[%c46, %c0_274] : memref<64x128xf32, #tpu.memory_space<vmem>>, vector<1x128xf32>
    tpu.vector_store %arg11[%c46, %c0_274], %470 {strides = array<i32>} : memref<64x128xf32, #tpu.memory_space<vmem>>, vector<1x128xf32>,
    %c5_i32_275 = arith.constant 5 : i32
    %472 = arith.addi %0, %c5_i32_275 : i32
    %c8_i32_276 = arith.constant 8 : i32
    %473 = arith.muli %472, %c8_i32_276 : i32
    %474 = arith.addi %473, %1 : i32
    %c7_i32_277 = arith.constant 7 : i32
    %475 = arith.addi %474, %c7_i32_277 : i32
    %476 = arith.index_cast %475 : i32 to index
    %477 = memref.load %arg2[%476] : memref<64xi32, #tpu.memory_space<smem>>
    %478 = arith.index_cast %477 : i32 to index
    %c0_278 = arith.constant 0 : index
    %c0_279 = arith.constant 0 : index
    %479 = vector.load %arg3[%478, %c0_278, %c0_279] : memref<16x1x128xf32, #tpu.memory_space<vmem>>, vector<1x1x128xf32>
    %480 = vector.shape_cast %479 : vector<1x1x128xf32> to vector<1x128xf32>
    %c47 = arith.constant 47 : index
    %c0_280 = arith.constant 0 : index
    %481 = vector.load %arg11[%c47, %c0_280] : memref<64x128xf32, #tpu.memory_space<vmem>>, vector<1x128xf32>
    tpu.vector_store %arg11[%c47, %c0_280], %480 {strides = array<i32>} : memref<64x128xf32, #tpu.memory_space<vmem>>, vector<1x128xf32>,
    %c6_i32_281 = arith.constant 6 : i32
    %482 = arith.addi %0, %c6_i32_281 : i32
    %c8_i32_282 = arith.constant 8 : i32
    %483 = arith.muli %482, %c8_i32_282 : i32
    %484 = arith.addi %483, %1 : i32
    %c0_i32_283 = arith.constant 0 : i32
    %485 = arith.addi %484, %c0_i32_283 : i32
    %486 = arith.index_cast %485 : i32 to index
    %487 = memref.load %arg2[%486] : memref<64xi32, #tpu.memory_space<smem>>
    %488 = arith.index_cast %487 : i32 to index
    %c0_284 = arith.constant 0 : index
    %c0_285 = arith.constant 0 : index
    %489 = vector.load %arg3[%488, %c0_284, %c0_285] : memref<16x1x128xf32, #tpu.memory_space<vmem>>, vector<1x1x128xf32>
    %490 = vector.shape_cast %489 : vector<1x1x128xf32> to vector<1x128xf32>
    %c48 = arith.constant 48 : index
    %c0_286 = arith.constant 0 : index
    %491 = vector.load %arg11[%c48, %c0_286] : memref<64x128xf32, #tpu.memory_space<vmem>>, vector<1x128xf32>
    tpu.vector_store %arg11[%c48, %c0_286], %490 {strides = array<i32>} : memref<64x128xf32, #tpu.memory_space<vmem>>, vector<1x128xf32>,
    %c6_i32_287 = arith.constant 6 : i32
    %492 = arith.addi %0, %c6_i32_287 : i32
    %c8_i32_288 = arith.constant 8 : i32
    %493 = arith.muli %492, %c8_i32_288 : i32
    %494 = arith.addi %493, %1 : i32
    %c1_i32_289 = arith.constant 1 : i32
    %495 = arith.addi %494, %c1_i32_289 : i32
    %496 = arith.index_cast %495 : i32 to index
    %497 = memref.load %arg2[%496] : memref<64xi32, #tpu.memory_space<smem>>
    %498 = arith.index_cast %497 : i32 to index
    %c0_290 = arith.constant 0 : index
    %c0_291 = arith.constant 0 : index
    %499 = vector.load %arg3[%498, %c0_290, %c0_291] : memref<16x1x128xf32, #tpu.memory_space<vmem>>, vector<1x1x128xf32>
    %500 = vector.shape_cast %499 : vector<1x1x128xf32> to vector<1x128xf32>
    %c49 = arith.constant 49 : index
    %c0_292 = arith.constant 0 : index
    %501 = vector.load %arg11[%c49, %c0_292] : memref<64x128xf32, #tpu.memory_space<vmem>>, vector<1x128xf32>
    tpu.vector_store %arg11[%c49, %c0_292], %500 {strides = array<i32>} : memref<64x128xf32, #tpu.memory_space<vmem>>, vector<1x128xf32>,
    %c6_i32_293 = arith.constant 6 : i32
    %502 = arith.addi %0, %c6_i32_293 : i32
    %c8_i32_294 = arith.constant 8 : i32
    %503 = arith.muli %502, %c8_i32_294 : i32
    %504 = arith.addi %503, %1 : i32
    %c2_i32_295 = arith.constant 2 : i32
    %505 = arith.addi %504, %c2_i32_295 : i32
    %506 = arith.index_cast %505 : i32 to index
    %507 = memref.load %arg2[%506] : memref<64xi32, #tpu.memory_space<smem>>
    %508 = arith.index_cast %507 : i32 to index
    %c0_296 = arith.constant 0 : index
    %c0_297 = arith.constant 0 : index
    %509 = vector.load %arg3[%508, %c0_296, %c0_297] : memref<16x1x128xf32, #tpu.memory_space<vmem>>, vector<1x1x128xf32>
    %510 = vector.shape_cast %509 : vector<1x1x128xf32> to vector<1x128xf32>
    %c50 = arith.constant 50 : index
    %c0_298 = arith.constant 0 : index
    %511 = vector.load %arg11[%c50, %c0_298] : memref<64x128xf32, #tpu.memory_space<vmem>>, vector<1x128xf32>
    tpu.vector_store %arg11[%c50, %c0_298], %510 {strides = array<i32>} : memref<64x128xf32, #tpu.memory_space<vmem>>, vector<1x128xf32>,
    %c6_i32_299 = arith.constant 6 : i32
    %512 = arith.addi %0, %c6_i32_299 : i32
    %c8_i32_300 = arith.constant 8 : i32
    %513 = arith.muli %512, %c8_i32_300 : i32
    %514 = arith.addi %513, %1 : i32
    %c3_i32_301 = arith.constant 3 : i32
    %515 = arith.addi %514, %c3_i32_301 : i32
    %516 = arith.index_cast %515 : i32 to index
    %517 = memref.load %arg2[%516] : memref<64xi32, #tpu.memory_space<smem>>
    %518 = arith.index_cast %517 : i32 to index
    %c0_302 = arith.constant 0 : index
    %c0_303 = arith.constant 0 : index
    %519 = vector.load %arg3[%518, %c0_302, %c0_303] : memref<16x1x128xf32, #tpu.memory_space<vmem>>, vector<1x1x128xf32>
    %520 = vector.shape_cast %519 : vector<1x1x128xf32> to vector<1x128xf32>
    %c51 = arith.constant 51 : index
    %c0_304 = arith.constant 0 : index
    %521 = vector.load %arg11[%c51, %c0_304] : memref<64x128xf32, #tpu.memory_space<vmem>>, vector<1x128xf32>
    tpu.vector_store %arg11[%c51, %c0_304], %520 {strides = array<i32>} : memref<64x128xf32, #tpu.memory_space<vmem>>, vector<1x128xf32>,
    %c6_i32_305 = arith.constant 6 : i32
    %522 = arith.addi %0, %c6_i32_305 : i32
    %c8_i32_306 = arith.constant 8 : i32
    %523 = arith.muli %522, %c8_i32_306 : i32
    %524 = arith.addi %523, %1 : i32
    %c4_i32_307 = arith.constant 4 : i32
    %525 = arith.addi %524, %c4_i32_307 : i32
    %526 = arith.index_cast %525 : i32 to index
    %527 = memref.load %arg2[%526] : memref<64xi32, #tpu.memory_space<smem>>
    %528 = arith.index_cast %527 : i32 to index
    %c0_308 = arith.constant 0 : index
    %c0_309 = arith.constant 0 : index
    %529 = vector.load %arg3[%528, %c0_308, %c0_309] : memref<16x1x128xf32, #tpu.memory_space<vmem>>, vector<1x1x128xf32>
    %530 = vector.shape_cast %529 : vector<1x1x128xf32> to vector<1x128xf32>
    %c52 = arith.constant 52 : index
    %c0_310 = arith.constant 0 : index
    %531 = vector.load %arg11[%c52, %c0_310] : memref<64x128xf32, #tpu.memory_space<vmem>>, vector<1x128xf32>
    tpu.vector_store %arg11[%c52, %c0_310], %530 {strides = array<i32>} : memref<64x128xf32, #tpu.memory_space<vmem>>, vector<1x128xf32>,
    %c6_i32_311 = arith.constant 6 : i32
    %532 = arith.addi %0, %c6_i32_311 : i32
    %c8_i32_312 = arith.constant 8 : i32
    %533 = arith.muli %532, %c8_i32_312 : i32
    %534 = arith.addi %533, %1 : i32
    %c5_i32_313 = arith.constant 5 : i32
    %535 = arith.addi %534, %c5_i32_313 : i32
    %536 = arith.index_cast %535 : i32 to index
    %537 = memref.load %arg2[%536] : memref<64xi32, #tpu.memory_space<smem>>
    %538 = arith.index_cast %537 : i32 to index
    %c0_314 = arith.constant 0 : index
    %c0_315 = arith.constant 0 : index
    %539 = vector.load %arg3[%538, %c0_314, %c0_315] : memref<16x1x128xf32, #tpu.memory_space<vmem>>, vector<1x1x128xf32>
    %540 = vector.shape_cast %539 : vector<1x1x128xf32> to vector<1x128xf32>
    %c53 = arith.constant 53 : index
    %c0_316 = arith.constant 0 : index
    %541 = vector.load %arg11[%c53, %c0_316] : memref<64x128xf32, #tpu.memory_space<vmem>>, vector<1x128xf32>
    tpu.vector_store %arg11[%c53, %c0_316], %540 {strides = array<i32>} : memref<64x128xf32, #tpu.memory_space<vmem>>, vector<1x128xf32>,
    %c6_i32_317 = arith.constant 6 : i32
    %542 = arith.addi %0, %c6_i32_317 : i32
    %c8_i32_318 = arith.constant 8 : i32
    %543 = arith.muli %542, %c8_i32_318 : i32
    %544 = arith.addi %543, %1 : i32
    %c6_i32_319 = arith.constant 6 : i32
    %545 = arith.addi %544, %c6_i32_319 : i32
    %546 = arith.index_cast %545 : i32 to index
    %547 = memref.load %arg2[%546] : memref<64xi32, #tpu.memory_space<smem>>
    %548 = arith.index_cast %547 : i32 to index
    %c0_320 = arith.constant 0 : index
    %c0_321 = arith.constant 0 : index
    %549 = vector.load %arg3[%548, %c0_320, %c0_321] : memref<16x1x128xf32, #tpu.memory_space<vmem>>, vector<1x1x128xf32>
    %550 = vector.shape_cast %549 : vector<1x1x128xf32> to vector<1x128xf32>
    %c54 = arith.constant 54 : index
    %c0_322 = arith.constant 0 : index
    %551 = vector.load %arg11[%c54, %c0_322] : memref<64x128xf32, #tpu.memory_space<vmem>>, vector<1x128xf32>
    tpu.vector_store %arg11[%c54, %c0_322], %550 {strides = array<i32>} : memref<64x128xf32, #tpu.memory_space<vmem>>, vector<1x128xf32>,
    %c6_i32_323 = arith.constant 6 : i32
    %552 = arith.addi %0, %c6_i32_323 : i32
    %c8_i32_324 = arith.constant 8 : i32
    %553 = arith.muli %552, %c8_i32_324 : i32
    %554 = arith.addi %553, %1 : i32
    %c7_i32_325 = arith.constant 7 : i32
    %555 = arith.addi %554, %c7_i32_325 : i32
    %556 = arith.index_cast %555 : i32 to index
    %557 = memref.load %arg2[%556] : memref<64xi32, #tpu.memory_space<smem>>
    %558 = arith.index_cast %557 : i32 to index
    %c0_326 = arith.constant 0 : index
    %c0_327 = arith.constant 0 : index
    %559 = vector.load %arg3[%558, %c0_326, %c0_327] : memref<16x1x128xf32, #tpu.memory_space<vmem>>, vector<1x1x128xf32>
    %560 = vector.shape_cast %559 : vector<1x1x128xf32> to vector<1x128xf32>
    %c55 = arith.constant 55 : index
    %c0_328 = arith.constant 0 : index
    %561 = vector.load %arg11[%c55, %c0_328] : memref<64x128xf32, #tpu.memory_space<vmem>>, vector<1x128xf32>
    tpu.vector_store %arg11[%c55, %c0_328], %560 {strides = array<i32>} : memref<64x128xf32, #tpu.memory_space<vmem>>, vector<1x128xf32>,
    %c7_i32_329 = arith.constant 7 : i32
    %562 = arith.addi %0, %c7_i32_329 : i32
    %c8_i32_330 = arith.constant 8 : i32
    %563 = arith.muli %562, %c8_i32_330 : i32
    %564 = arith.addi %563, %1 : i32
    %c0_i32_331 = arith.constant 0 : i32
    %565 = arith.addi %564, %c0_i32_331 : i32
    %566 = arith.index_cast %565 : i32 to index
    %567 = memref.load %arg2[%566] : memref<64xi32, #tpu.memory_space<smem>>
    %568 = arith.index_cast %567 : i32 to index
    %c0_332 = arith.constant 0 : index
    %c0_333 = arith.constant 0 : index
    %569 = vector.load %arg3[%568, %c0_332, %c0_333] : memref<16x1x128xf32, #tpu.memory_space<vmem>>, vector<1x1x128xf32>
    %570 = vector.shape_cast %569 : vector<1x1x128xf32> to vector<1x128xf32>
    %c56 = arith.constant 56 : index
    %c0_334 = arith.constant 0 : index
    %571 = vector.load %arg11[%c56, %c0_334] : memref<64x128xf32, #tpu.memory_space<vmem>>, vector<1x128xf32>
    tpu.vector_store %arg11[%c56, %c0_334], %570 {strides = array<i32>} : memref<64x128xf32, #tpu.memory_space<vmem>>, vector<1x128xf32>,
    %c7_i32_335 = arith.constant 7 : i32
    %572 = arith.addi %0, %c7_i32_335 : i32
    %c8_i32_336 = arith.constant 8 : i32
    %573 = arith.muli %572, %c8_i32_336 : i32
    %574 = arith.addi %573, %1 : i32
    %c1_i32_337 = arith.constant 1 : i32
    %575 = arith.addi %574, %c1_i32_337 : i32
    %576 = arith.index_cast %575 : i32 to index
    %577 = memref.load %arg2[%576] : memref<64xi32, #tpu.memory_space<smem>>
    %578 = arith.index_cast %577 : i32 to index
    %c0_338 = arith.constant 0 : index
    %c0_339 = arith.constant 0 : index
    %579 = vector.load %arg3[%578, %c0_338, %c0_339] : memref<16x1x128xf32, #tpu.memory_space<vmem>>, vector<1x1x128xf32>
    %580 = vector.shape_cast %579 : vector<1x1x128xf32> to vector<1x128xf32>
    %c57 = arith.constant 57 : index
    %c0_340 = arith.constant 0 : index
    %581 = vector.load %arg11[%c57, %c0_340] : memref<64x128xf32, #tpu.memory_space<vmem>>, vector<1x128xf32>
    tpu.vector_store %arg11[%c57, %c0_340], %580 {strides = array<i32>} : memref<64x128xf32, #tpu.memory_space<vmem>>, vector<1x128xf32>,
    %c7_i32_341 = arith.constant 7 : i32
    %582 = arith.addi %0, %c7_i32_341 : i32
    %c8_i32_342 = arith.constant 8 : i32
    %583 = arith.muli %582, %c8_i32_342 : i32
    %584 = arith.addi %583, %1 : i32
    %c2_i32_343 = arith.constant 2 : i32
    %585 = arith.addi %584, %c2_i32_343 : i32
    %586 = arith.index_cast %585 : i32 to index
    %587 = memref.load %arg2[%586] : memref<64xi32, #tpu.memory_space<smem>>
    %588 = arith.index_cast %587 : i32 to index
    %c0_344 = arith.constant 0 : index
    %c0_345 = arith.constant 0 : index
    %589 = vector.load %arg3[%588, %c0_344, %c0_345] : memref<16x1x128xf32, #tpu.memory_space<vmem>>, vector<1x1x128xf32>
    %590 = vector.shape_cast %589 : vector<1x1x128xf32> to vector<1x128xf32>
    %c58 = arith.constant 58 : index
    %c0_346 = arith.constant 0 : index
    %591 = vector.load %arg11[%c58, %c0_346] : memref<64x128xf32, #tpu.memory_space<vmem>>, vector<1x128xf32>
    tpu.vector_store %arg11[%c58, %c0_346], %590 {strides = array<i32>} : memref<64x128xf32, #tpu.memory_space<vmem>>, vector<1x128xf32>,
    %c7_i32_347 = arith.constant 7 : i32
    %592 = arith.addi %0, %c7_i32_347 : i32
    %c8_i32_348 = arith.constant 8 : i32
    %593 = arith.muli %592, %c8_i32_348 : i32
    %594 = arith.addi %593, %1 : i32
    %c3_i32_349 = arith.constant 3 : i32
    %595 = arith.addi %594, %c3_i32_349 : i32
    %596 = arith.index_cast %595 : i32 to index
    %597 = memref.load %arg2[%596] : memref<64xi32, #tpu.memory_space<smem>>
    %598 = arith.index_cast %597 : i32 to index
    %c0_350 = arith.constant 0 : index
    %c0_351 = arith.constant 0 : index
    %599 = vector.load %arg3[%598, %c0_350, %c0_351] : memref<16x1x128xf32, #tpu.memory_space<vmem>>, vector<1x1x128xf32>
    %600 = vector.shape_cast %599 : vector<1x1x128xf32> to vector<1x128xf32>
    %c59 = arith.constant 59 : index
    %c0_352 = arith.constant 0 : index
    %601 = vector.load %arg11[%c59, %c0_352] : memref<64x128xf32, #tpu.memory_space<vmem>>, vector<1x128xf32>
    tpu.vector_store %arg11[%c59, %c0_352], %600 {strides = array<i32>} : memref<64x128xf32, #tpu.memory_space<vmem>>, vector<1x128xf32>,
    %c7_i32_353 = arith.constant 7 : i32
    %602 = arith.addi %0, %c7_i32_353 : i32
    %c8_i32_354 = arith.constant 8 : i32
    %603 = arith.muli %602, %c8_i32_354 : i32
    %604 = arith.addi %603, %1 : i32
    %c4_i32_355 = arith.constant 4 : i32
    %605 = arith.addi %604, %c4_i32_355 : i32
    %606 = arith.index_cast %605 : i32 to index
    %607 = memref.load %arg2[%606] : memref<64xi32, #tpu.memory_space<smem>>
    %608 = arith.index_cast %607 : i32 to index
    %c0_356 = arith.constant 0 : index
    %c0_357 = arith.constant 0 : index
    %609 = vector.load %arg3[%608, %c0_356, %c0_357] : memref<16x1x128xf32, #tpu.memory_space<vmem>>, vector<1x1x128xf32>
    %610 = vector.shape_cast %609 : vector<1x1x128xf32> to vector<1x128xf32>
    %c60 = arith.constant 60 : index
    %c0_358 = arith.constant 0 : index
    %611 = vector.load %arg11[%c60, %c0_358] : memref<64x128xf32, #tpu.memory_space<vmem>>, vector<1x128xf32>
    tpu.vector_store %arg11[%c60, %c0_358], %610 {strides = array<i32>} : memref<64x128xf32, #tpu.memory_space<vmem>>, vector<1x128xf32>,
    %c7_i32_359 = arith.constant 7 : i32
    %612 = arith.addi %0, %c7_i32_359 : i32
    %c8_i32_360 = arith.constant 8 : i32
    %613 = arith.muli %612, %c8_i32_360 : i32
    %614 = arith.addi %613, %1 : i32
    %c5_i32_361 = arith.constant 5 : i32
    %615 = arith.addi %614, %c5_i32_361 : i32
    %616 = arith.index_cast %615 : i32 to index
    %617 = memref.load %arg2[%616] : memref<64xi32, #tpu.memory_space<smem>>
    %618 = arith.index_cast %617 : i32 to index
    %c0_362 = arith.constant 0 : index
    %c0_363 = arith.constant 0 : index
    %619 = vector.load %arg3[%618, %c0_362, %c0_363] : memref<16x1x128xf32, #tpu.memory_space<vmem>>, vector<1x1x128xf32>
    %620 = vector.shape_cast %619 : vector<1x1x128xf32> to vector<1x128xf32>
    %c61 = arith.constant 61 : index
    %c0_364 = arith.constant 0 : index
    %621 = vector.load %arg11[%c61, %c0_364] : memref<64x128xf32, #tpu.memory_space<vmem>>, vector<1x128xf32>
    tpu.vector_store %arg11[%c61, %c0_364], %620 {strides = array<i32>} : memref<64x128xf32, #tpu.memory_space<vmem>>, vector<1x128xf32>,
    %c7_i32_365 = arith.constant 7 : i32
    %622 = arith.addi %0, %c7_i32_365 : i32
    %c8_i32_366 = arith.constant 8 : i32
    %623 = arith.muli %622, %c8_i32_366 : i32
    %624 = arith.addi %623, %1 : i32
    %c6_i32_367 = arith.constant 6 : i32
    %625 = arith.addi %624, %c6_i32_367 : i32
    %626 = arith.index_cast %625 : i32 to index
    %627 = memref.load %arg2[%626] : memref<64xi32, #tpu.memory_space<smem>>
    %628 = arith.index_cast %627 : i32 to index
    %c0_368 = arith.constant 0 : index
    %c0_369 = arith.constant 0 : index
    %629 = vector.load %arg3[%628, %c0_368, %c0_369] : memref<16x1x128xf32, #tpu.memory_space<vmem>>, vector<1x1x128xf32>
    %630 = vector.shape_cast %629 : vector<1x1x128xf32> to vector<1x128xf32>
    %c62 = arith.constant 62 : index
    %c0_370 = arith.constant 0 : index
    %631 = vector.load %arg11[%c62, %c0_370] : memref<64x128xf32, #tpu.memory_space<vmem>>, vector<1x128xf32>
    tpu.vector_store %arg11[%c62, %c0_370], %630 {strides = array<i32>} : memref<64x128xf32, #tpu.memory_space<vmem>>, vector<1x128xf32>,
    %c7_i32_371 = arith.constant 7 : i32
    %632 = arith.addi %0, %c7_i32_371 : i32
    %c8_i32_372 = arith.constant 8 : i32
    %633 = arith.muli %632, %c8_i32_372 : i32
    %634 = arith.addi %633, %1 : i32
    %c7_i32_373 = arith.constant 7 : i32
    %635 = arith.addi %634, %c7_i32_373 : i32
    %636 = arith.index_cast %635 : i32 to index
    %637 = memref.load %arg2[%636] : memref<64xi32, #tpu.memory_space<smem>>
    %638 = arith.index_cast %637 : i32 to index
    %c0_374 = arith.constant 0 : index
    %c0_375 = arith.constant 0 : index
    %639 = vector.load %arg3[%638, %c0_374, %c0_375] : memref<16x1x128xf32, #tpu.memory_space<vmem>>, vector<1x1x128xf32>
    %640 = vector.shape_cast %639 : vector<1x1x128xf32> to vector<1x128xf32>
    %c63 = arith.constant 63 : index
    %c0_376 = arith.constant 0 : index
    %641 = vector.load %arg11[%c63, %c0_376] : memref<64x128xf32, #tpu.memory_space<vmem>>, vector<1x128xf32>
    tpu.vector_store %arg11[%c63, %c0_376], %640 {strides = array<i32>} : memref<64x128xf32, #tpu.memory_space<vmem>>, vector<1x128xf32>,
    %c0_i32_377 = arith.constant 0 : i32
    %642 = arith.cmpi eq, %arg1, %c0_i32_377 : i32
    %643 = arith.extui %642 : i1 to i32
    %c0_i32_378 = arith.constant 0 : i32
    %644 = arith.cmpi ne, %643, %c0_i32_378 : i32
    scf.if %644 {
      %c0_457 = arith.constant 0 : index
      %c0_458 = arith.constant 0 : index
      %729 = vector.load %arg4[%c0_457, %c0_458] : memref<8x128xf32, #tpu.memory_space<vmem>>, vector<8x128xf32>
      %c0_459 = arith.constant 0 : index
      %c0_460 = arith.constant 0 : index
      %730 = vector.load %arg10[%c0_459, %c0_460] : memref<8x128xf32, #tpu.memory_space<vmem>>, vector<8x128xf32>
      tpu.vector_store %arg10[%c0_459, %c0_460], %729 {strides = array<i32>} : memref<8x128xf32, #tpu.memory_space<vmem>>, vector<8x128xf32>,
    } else {
    }
    %c0_379 = arith.constant 0 : index
    %c0_380 = arith.constant 0 : index
    %645 = vector.load %arg10[%c0_379, %c0_380] : memref<8x128xf32, #tpu.memory_space<vmem>>, vector<8x128xf32>
    %c0_381 = arith.constant 0 : index
    %c0_382 = arith.constant 0 : index
    %646 = vector.load %arg5[%c0_381, %c0_382] : memref<128x128xf32, #tpu.memory_space<vmem>>, vector<128x128xf32>
    %c0_383 = arith.constant 0 : index
    %c0_384 = arith.constant 0 : index
    %647 = vector.load %arg11[%c0_383, %c0_384] : memref<64x128xf32, #tpu.memory_space<vmem>>, vector<8x128xf32>
    %cst = arith.constant dense<0.000000e+00> : vector<8x128xf32>
    %648 = tpu.matmul %645, %646, %cst {dimension_numbers = #tpu.dot_dimension_numbers<[1], [0], [0], [1], [0, 0, 1, 1], [], []>} : vector<8x128xf32>, vector<128x128xf32>, vector<8x128xf32> -> vector<8x128xf32>
    %649 = arith.addf %647, %648 : vector<8x128xf32>
    %650 = math.tanh %649 : vector<8x128xf32>
    %c0_385 = arith.constant 0 : index
    %c0_386 = arith.constant 0 : index
    %651 = vector.load %arg12[%c0_385, %c0_386] : memref<64x128xf32, #tpu.memory_space<vmem>>, vector<8x128xf32>
    tpu.vector_store %arg12[%c0_385, %c0_386], %650 {strides = array<i32>} : memref<64x128xf32, #tpu.memory_space<vmem>>, vector<8x128xf32>,
    %c8_387 = arith.constant 8 : index
    %c0_388 = arith.constant 0 : index
    %652 = vector.load %arg11[%c8_387, %c0_388] : memref<64x128xf32, #tpu.memory_space<vmem>>, vector<8x128xf32>
    %cst_389 = arith.constant dense<0.000000e+00> : vector<8x128xf32>
    %653 = tpu.matmul %650, %646, %cst_389 {dimension_numbers = #tpu.dot_dimension_numbers<[1], [0], [0], [1], [0, 0, 1, 1], [], []>} : vector<8x128xf32>, vector<128x128xf32>, vector<8x128xf32> -> vector<8x128xf32>
    %654 = arith.addf %652, %653 : vector<8x128xf32>
    %655 = math.tanh %654 : vector<8x128xf32>
    %c8_390 = arith.constant 8 : index
    %c0_391 = arith.constant 0 : index
    %656 = vector.load %arg12[%c8_390, %c0_391] : memref<64x128xf32, #tpu.memory_space<vmem>>, vector<8x128xf32>
    tpu.vector_store %arg12[%c8_390, %c0_391], %655 {strides = array<i32>} : memref<64x128xf32, #tpu.memory_space<vmem>>, vector<8x128xf32>,
    %c16_392 = arith.constant 16 : index
    %c0_393 = arith.constant 0 : index
    %657 = vector.load %arg11[%c16_392, %c0_393] : memref<64x128xf32, #tpu.memory_space<vmem>>, vector<8x128xf32>
    %cst_394 = arith.constant dense<0.000000e+00> : vector<8x128xf32>
    %658 = tpu.matmul %655, %646, %cst_394 {dimension_numbers = #tpu.dot_dimension_numbers<[1], [0], [0], [1], [0, 0, 1, 1], [], []>} : vector<8x128xf32>, vector<128x128xf32>, vector<8x128xf32> -> vector<8x128xf32>
    %659 = arith.addf %657, %658 : vector<8x128xf32>
    %660 = math.tanh %659 : vector<8x128xf32>
    %c16_395 = arith.constant 16 : index
    %c0_396 = arith.constant 0 : index
    %661 = vector.load %arg12[%c16_395, %c0_396] : memref<64x128xf32, #tpu.memory_space<vmem>>, vector<8x128xf32>
    tpu.vector_store %arg12[%c16_395, %c0_396], %660 {strides = array<i32>} : memref<64x128xf32, #tpu.memory_space<vmem>>, vector<8x128xf32>,
    %c24_397 = arith.constant 24 : index
    %c0_398 = arith.constant 0 : index
    %662 = vector.load %arg11[%c24_397, %c0_398] : memref<64x128xf32, #tpu.memory_space<vmem>>, vector<8x128xf32>
    %cst_399 = arith.constant dense<0.000000e+00> : vector<8x128xf32>
    %663 = tpu.matmul %660, %646, %cst_399 {dimension_numbers = #tpu.dot_dimension_numbers<[1], [0], [0], [1], [0, 0, 1, 1], [], []>} : vector<8x128xf32>, vector<128x128xf32>, vector<8x128xf32> -> vector<8x128xf32>
    %664 = arith.addf %662, %663 : vector<8x128xf32>
    %665 = math.tanh %664 : vector<8x128xf32>
    %c24_400 = arith.constant 24 : index
    %c0_401 = arith.constant 0 : index
    %666 = vector.load %arg12[%c24_400, %c0_401] : memref<64x128xf32, #tpu.memory_space<vmem>>, vector<8x128xf32>
    tpu.vector_store %arg12[%c24_400, %c0_401], %665 {strides = array<i32>} : memref<64x128xf32, #tpu.memory_space<vmem>>, vector<8x128xf32>,
    %c32_402 = arith.constant 32 : index
    %c0_403 = arith.constant 0 : index
    %667 = vector.load %arg11[%c32_402, %c0_403] : memref<64x128xf32, #tpu.memory_space<vmem>>, vector<8x128xf32>
    %cst_404 = arith.constant dense<0.000000e+00> : vector<8x128xf32>
    %668 = tpu.matmul %665, %646, %cst_404 {dimension_numbers = #tpu.dot_dimension_numbers<[1], [0], [0], [1], [0, 0, 1, 1], [], []>} : vector<8x128xf32>, vector<128x128xf32>, vector<8x128xf32> -> vector<8x128xf32>
    %669 = arith.addf %667, %668 : vector<8x128xf32>
    %670 = math.tanh %669 : vector<8x128xf32>
    %c32_405 = arith.constant 32 : index
    %c0_406 = arith.constant 0 : index
    %671 = vector.load %arg12[%c32_405, %c0_406] : memref<64x128xf32, #tpu.memory_space<vmem>>, vector<8x128xf32>
    tpu.vector_store %arg12[%c32_405, %c0_406], %670 {strides = array<i32>} : memref<64x128xf32, #tpu.memory_space<vmem>>, vector<8x128xf32>,
    %c40_407 = arith.constant 40 : index
    %c0_408 = arith.constant 0 : index
    %672 = vector.load %arg11[%c40_407, %c0_408] : memref<64x128xf32, #tpu.memory_space<vmem>>, vector<8x128xf32>
    %cst_409 = arith.constant dense<0.000000e+00> : vector<8x128xf32>
    %673 = tpu.matmul %670, %646, %cst_409 {dimension_numbers = #tpu.dot_dimension_numbers<[1], [0], [0], [1], [0, 0, 1, 1], [], []>} : vector<8x128xf32>, vector<128x128xf32>, vector<8x128xf32> -> vector<8x128xf32>
    %674 = arith.addf %672, %673 : vector<8x128xf32>
    %675 = math.tanh %674 : vector<8x128xf32>
    %c40_410 = arith.constant 40 : index
    %c0_411 = arith.constant 0 : index
    %676 = vector.load %arg12[%c40_410, %c0_411] : memref<64x128xf32, #tpu.memory_space<vmem>>, vector<8x128xf32>
    tpu.vector_store %arg12[%c40_410, %c0_411], %675 {strides = array<i32>} : memref<64x128xf32, #tpu.memory_space<vmem>>, vector<8x128xf32>,
    %c48_412 = arith.constant 48 : index
    %c0_413 = arith.constant 0 : index
    %677 = vector.load %arg11[%c48_412, %c0_413] : memref<64x128xf32, #tpu.memory_space<vmem>>, vector<8x128xf32>
    %cst_414 = arith.constant dense<0.000000e+00> : vector<8x128xf32>
    %678 = tpu.matmul %675, %646, %cst_414 {dimension_numbers = #tpu.dot_dimension_numbers<[1], [0], [0], [1], [0, 0, 1, 1], [], []>} : vector<8x128xf32>, vector<128x128xf32>, vector<8x128xf32> -> vector<8x128xf32>
    %679 = arith.addf %677, %678 : vector<8x128xf32>
    %680 = math.tanh %679 : vector<8x128xf32>
    %c48_415 = arith.constant 48 : index
    %c0_416 = arith.constant 0 : index
    %681 = vector.load %arg12[%c48_415, %c0_416] : memref<64x128xf32, #tpu.memory_space<vmem>>, vector<8x128xf32>
    tpu.vector_store %arg12[%c48_415, %c0_416], %680 {strides = array<i32>} : memref<64x128xf32, #tpu.memory_space<vmem>>, vector<8x128xf32>,
    %c56_417 = arith.constant 56 : index
    %c0_418 = arith.constant 0 : index
    %682 = vector.load %arg11[%c56_417, %c0_418] : memref<64x128xf32, #tpu.memory_space<vmem>>, vector<8x128xf32>
    %cst_419 = arith.constant dense<0.000000e+00> : vector<8x128xf32>
    %683 = tpu.matmul %680, %646, %cst_419 {dimension_numbers = #tpu.dot_dimension_numbers<[1], [0], [0], [1], [0, 0, 1, 1], [], []>} : vector<8x128xf32>, vector<128x128xf32>, vector<8x128xf32> -> vector<8x128xf32>
    %684 = arith.addf %682, %683 : vector<8x128xf32>
    %685 = math.tanh %684 : vector<8x128xf32>
    %c56_420 = arith.constant 56 : index
    %c0_421 = arith.constant 0 : index
    %686 = vector.load %arg12[%c56_420, %c0_421] : memref<64x128xf32, #tpu.memory_space<vmem>>, vector<8x128xf32>
    tpu.vector_store %arg12[%c56_420, %c0_421], %685 {strides = array<i32>} : memref<64x128xf32, #tpu.memory_space<vmem>>, vector<8x128xf32>,
    %c0_422 = arith.constant 0 : index
    %c0_423 = arith.constant 0 : index
    %687 = vector.load %arg10[%c0_422, %c0_423] : memref<8x128xf32, #tpu.memory_space<vmem>>, vector<8x128xf32>
    tpu.vector_store %arg10[%c0_422, %c0_423], %685 {strides = array<i32>} : memref<8x128xf32, #tpu.memory_space<vmem>>, vector<8x128xf32>,
    %c0_424 = arith.constant 0 : index
    %c0_425 = arith.constant 0 : index
    %688 = vector.load %arg12[%c0_424, %c0_425] : memref<64x128xf32, #tpu.memory_space<vmem>>, vector<64x128xf32>
    %c0_426 = arith.constant 0 : index
    %c0_427 = arith.constant 0 : index
    %689 = vector.load %arg6[%c0_426, %c0_427] : memref<128x128xf32, #tpu.memory_space<vmem>>, vector<128x128xf32>
    %cst_428 = arith.constant dense<0.000000e+00> : vector<64x128xf32>
    %690 = tpu.matmul %688, %689, %cst_428 {dimension_numbers = #tpu.dot_dimension_numbers<[1], [0], [0], [1], [0, 0, 1, 1], [], []>} : vector<64x128xf32>, vector<128x128xf32>, vector<64x128xf32> -> vector<64x128xf32>
    %c0_429 = arith.constant 0 : index
    %c0_430 = arith.constant 0 : index
    %691 = vector.load %arg7[%c0_429, %c0_430] : memref<1x128xf32, #tpu.memory_space<vmem>>, vector<1x128xf32>
    %692 = vector.broadcast %691 : vector<1x128xf32> to vector<64x128xf32>
    %693 = arith.addf %690, %692 : vector<64x128xf32>
    %694 = vector.extract_strided_slice %693 {offsets = [0, 0], sizes = [8, 128], strides = [1, 1]} : vector<64x128xf32> to vector<8x128xf32>
    %c0_431 = arith.constant 0 : index
    %c0_432 = arith.constant 0 : index
    %c0_433 = arith.constant 0 : index
    %695 = vector.load %arg8[%c0_431, %c0_432, %c0_433] : memref<8x8x128xf32, #tpu.memory_space<vmem>>, vector<1x8x128xf32>
    %696 = vector.shape_cast %695 : vector<1x8x128xf32> to vector<8x128xf32>
    %697 = vector.shape_cast %694 : vector<8x128xf32> to vector<1x8x128xf32>
    tpu.vector_store %arg8[%c0_431, %c0_432, %c0_433], %697 {strides = array<i32>} : memref<8x8x128xf32, #tpu.memory_space<vmem>>, vector<1x8x128xf32>,
    %698 = vector.extract_strided_slice %693 {offsets = [8, 0], sizes = [8, 128], strides = [1, 1]} : vector<64x128xf32> to vector<8x128xf32>
    %c1_434 = arith.constant 1 : index
    %c0_435 = arith.constant 0 : index
    %c0_436 = arith.constant 0 : index
    %699 = vector.load %arg8[%c1_434, %c0_435, %c0_436] : memref<8x8x128xf32, #tpu.memory_space<vmem>>, vector<1x8x128xf32>
    %700 = vector.shape_cast %699 : vector<1x8x128xf32> to vector<8x128xf32>
    %701 = vector.shape_cast %698 : vector<8x128xf32> to vector<1x8x128xf32>
    tpu.vector_store %arg8[%c1_434, %c0_435, %c0_436], %701 {strides = array<i32>} : memref<8x8x128xf32, #tpu.memory_space<vmem>>, vector<1x8x128xf32>,
    %702 = vector.extract_strided_slice %693 {offsets = [16, 0], sizes = [8, 128], strides = [1, 1]} : vector<64x128xf32> to vector<8x128xf32>
    %c2_437 = arith.constant 2 : index
    %c0_438 = arith.constant 0 : index
    %c0_439 = arith.constant 0 : index
    %703 = vector.load %arg8[%c2_437, %c0_438, %c0_439] : memref<8x8x128xf32, #tpu.memory_space<vmem>>, vector<1x8x128xf32>
    %704 = vector.shape_cast %703 : vector<1x8x128xf32> to vector<8x128xf32>
    %705 = vector.shape_cast %702 : vector<8x128xf32> to vector<1x8x128xf32>
    tpu.vector_store %arg8[%c2_437, %c0_438, %c0_439], %705 {strides = array<i32>} : memref<8x8x128xf32, #tpu.memory_space<vmem>>, vector<1x8x128xf32>,
    %706 = vector.extract_strided_slice %693 {offsets = [24, 0], sizes = [8, 128], strides = [1, 1]} : vector<64x128xf32> to vector<8x128xf32>
    %c3_440 = arith.constant 3 : index
    %c0_441 = arith.constant 0 : index
    %c0_442 = arith.constant 0 : index
    %707 = vector.load %arg8[%c3_440, %c0_441, %c0_442] : memref<8x8x128xf32, #tpu.memory_space<vmem>>, vector<1x8x128xf32>
    %708 = vector.shape_cast %707 : vector<1x8x128xf32> to vector<8x128xf32>
    %709 = vector.shape_cast %706 : vector<8x128xf32> to vector<1x8x128xf32>
    tpu.vector_store %arg8[%c3_440, %c0_441, %c0_442], %709 {strides = array<i32>} : memref<8x8x128xf32, #tpu.memory_space<vmem>>, vector<1x8x128xf32>,
    %710 = vector.extract_strided_slice %693 {offsets = [32, 0], sizes = [8, 128], strides = [1, 1]} : vector<64x128xf32> to vector<8x128xf32>
    %c4_443 = arith.constant 4 : index
    %c0_444 = arith.constant 0 : index
    %c0_445 = arith.constant 0 : index
    %711 = vector.load %arg8[%c4_443, %c0_444, %c0_445] : memref<8x8x128xf32, #tpu.memory_space<vmem>>, vector<1x8x128xf32>
    %712 = vector.shape_cast %711 : vector<1x8x128xf32> to vector<8x128xf32>
    %713 = vector.shape_cast %710 : vector<8x128xf32> to vector<1x8x128xf32>
    tpu.vector_store %arg8[%c4_443, %c0_444, %c0_445], %713 {strides = array<i32>} : memref<8x8x128xf32, #tpu.memory_space<vmem>>, vector<1x8x128xf32>,
    %714 = vector.extract_strided_slice %693 {offsets = [40, 0], sizes = [8, 128], strides = [1, 1]} : vector<64x128xf32> to vector<8x128xf32>
    %c5_446 = arith.constant 5 : index
    %c0_447 = arith.constant 0 : index
    %c0_448 = arith.constant 0 : index
    %715 = vector.load %arg8[%c5_446, %c0_447, %c0_448] : memref<8x8x128xf32, #tpu.memory_space<vmem>>, vector<1x8x128xf32>
    %716 = vector.shape_cast %715 : vector<1x8x128xf32> to vector<8x128xf32>
    %717 = vector.shape_cast %714 : vector<8x128xf32> to vector<1x8x128xf32>
    tpu.vector_store %arg8[%c5_446, %c0_447, %c0_448], %717 {strides = array<i32>} : memref<8x8x128xf32, #tpu.memory_space<vmem>>, vector<1x8x128xf32>,
    %718 = vector.extract_strided_slice %693 {offsets = [48, 0], sizes = [8, 128], strides = [1, 1]} : vector<64x128xf32> to vector<8x128xf32>
    %c6_449 = arith.constant 6 : index
    %c0_450 = arith.constant 0 : index
    %c0_451 = arith.constant 0 : index
    %719 = vector.load %arg8[%c6_449, %c0_450, %c0_451] : memref<8x8x128xf32, #tpu.memory_space<vmem>>, vector<1x8x128xf32>
    %720 = vector.shape_cast %719 : vector<1x8x128xf32> to vector<8x128xf32>
    %721 = vector.shape_cast %718 : vector<8x128xf32> to vector<1x8x128xf32>
    tpu.vector_store %arg8[%c6_449, %c0_450, %c0_451], %721 {strides = array<i32>} : memref<8x8x128xf32, #tpu.memory_space<vmem>>, vector<1x8x128xf32>,
    %722 = vector.extract_strided_slice %693 {offsets = [56, 0], sizes = [8, 128], strides = [1, 1]} : vector<64x128xf32> to vector<8x128xf32>
    %c7_452 = arith.constant 7 : index
    %c0_453 = arith.constant 0 : index
    %c0_454 = arith.constant 0 : index
    %723 = vector.load %arg8[%c7_452, %c0_453, %c0_454] : memref<8x8x128xf32, #tpu.memory_space<vmem>>, vector<1x8x128xf32>
    %724 = vector.shape_cast %723 : vector<1x8x128xf32> to vector<8x128xf32>
    %725 = vector.shape_cast %722 : vector<8x128xf32> to vector<1x8x128xf32>
    tpu.vector_store %arg8[%c7_452, %c0_453, %c0_454], %725 {strides = array<i32>} : memref<8x8x128xf32, #tpu.memory_space<vmem>>, vector<1x8x128xf32>,
    %c0_i32_455 = arith.constant 0 : i32
    %726 = arith.cmpi eq, %arg1, %c0_i32_455 : i32
    %727 = arith.extui %726 : i1 to i32
    %c0_i32_456 = arith.constant 0 : i32
    %728 = arith.cmpi ne, %727, %c0_i32_456 : i32
    scf.if %728 {
      %c0_457 = arith.constant 0 : index
      %c0_458 = arith.constant 0 : index
      %729 = vector.load %arg9[%c0_457, %c0_458] : memref<8x128xf32, #tpu.memory_space<vmem>>, vector<8x128xf32>
      tpu.vector_store %arg9[%c0_457, %c0_458], %685 {strides = array<i32>} : memref<8x128xf32, #tpu.memory_space<vmem>>, vector<8x128xf32>,
    } else {
    }
    return
  }
  func.func @transform_0(%arg0: i32, %arg1: i32, %arg2: memref<64xi32, #tpu.memory_space<smem>>) -> (i32, i32, i32) {
    %c0_i32 = arith.constant 0 : i32
    %c0_i32_0 = arith.constant 0 : i32
    %c0_i32_1 = arith.constant 0 : i32
    %c0_i32_2 = arith.constant 0 : i32
    return %c0_i32, %c0_i32_0, %c0_i32_1 : i32, i32, i32
  }
  func.func @transform_1(%arg0: i32, %arg1: i32, %arg2: memref<64xi32, #tpu.memory_space<smem>>) -> (i32, i32) {
    %c0_i32 = arith.constant 0 : i32
    %c0_i32_0 = arith.constant 0 : i32
    return %arg0, %c0_i32 : i32, i32
  }
  func.func @transform_2(%arg0: i32, %arg1: i32, %arg2: memref<64xi32, #tpu.memory_space<smem>>) -> (i32, i32) {
    %c0_i32 = arith.constant 0 : i32
    %c0_i32_0 = arith.constant 0 : i32
    %c0_i32_1 = arith.constant 0 : i32
    return %c0_i32, %c0_i32_0 : i32, i32
  }
  func.func @transform_3(%arg0: i32, %arg1: i32, %arg2: memref<64xi32, #tpu.memory_space<smem>>) -> (i32, i32) {
    %c0_i32 = arith.constant 0 : i32
    %c0_i32_0 = arith.constant 0 : i32
    %c0_i32_1 = arith.constant 0 : i32
    return %c0_i32, %c0_i32_0 : i32, i32
  }
  func.func @transform_4(%arg0: i32, %arg1: i32, %arg2: memref<64xi32, #tpu.memory_space<smem>>) -> (i32, i32) {
    %c0_i32 = arith.constant 0 : i32
    %c0_i32_0 = arith.constant 0 : i32
    %c0_i32_1 = arith.constant 0 : i32
    return %c0_i32, %c0_i32_0 : i32, i32
  }
  func.func @transform_5(%arg0: i32, %arg1: i32, %arg2: memref<64xi32, #tpu.memory_space<smem>>) -> (i32, i32, i32) {
    %c0_i32 = arith.constant 0 : i32
    %c0_i32_0 = arith.constant 0 : i32
    return %arg1, %arg0, %c0_i32 : i32, i32, i32
  }
  func.func @transform_6(%arg0: i32, %arg1: i32, %arg2: memref<64xi32, #tpu.memory_space<smem>>) -> (i32, i32) {
    %c0_i32 = arith.constant 0 : i32
    %c0_i32_0 = arith.constant 0 : i32
    return %arg0, %c0_i32 : i32, i32
  }
}

</mosaic_0001>

<llo_original>
// kernel: char_rnn_forward.2
$region0: #{char_rnn_forward.2}
  #allocation0 [shape = 'u32[]', space=smem, size = 0x4, offset = 0x4, fixed_abs, tag = 'smem constant byte address 0x4 - core index']
  #allocation1 [shape = 'u32[144,128]{1,0:T(1,128)}', space=vmem, size = 0x12000, scoped, tag = 'internal scratch']
  %s0 = inlined_call_operand.vmem [shape: f32[16,128], index: 0, kind: input, shape index: {}]
  %s1 = inlined_call_operand.vmem [shape: f32[128,128], index: 1, kind: input, shape index: {}]
  %s2 = inlined_call_operand.vmem [shape: f32[1,128], index: 2, kind: input, shape index: {}]
  %s3 = inlined_call_operand.vmem [shape: f32[16,128], index: 3, kind: output, shape index: {}]
  %s4 = sld [smem:[#allocation0]]
  $region22: #{char_rnn_forward.2} parent=0
    _
  %s6 = ssub.s32 1, %s4
  %s7 = scalar_select 0, %s6, %s4
  // Predicated region
  $region2: #{char_rnn_forward.2} parent=0 // pred_check
    _
  $region3: #{char_rnn_forward.2} parent=0 // pred_check_branch
    %9 = sbr.rel (0) target = $region5
  $region4: #{char_rnn_forward.2} parent=0 // pred_region
    _
  $region5: #{char_rnn_forward.2} parent=0 // pred_fallthru
    _
  // Predicated region
  $region6: #{char_rnn_forward.2} parent=0 // pred_check
    _
  $region7: #{char_rnn_forward.2} parent=0 // pred_check_branch
    %11 = sbr.rel (0) target = $region9
  $region8: #{char_rnn_forward.2} parent=0 // pred_region
    _
  $region9: #{char_rnn_forward.2} parent=0 // pred_fallthru
    _
  // Predicated region
  $region10: #{char_rnn_forward.2} parent=0 // pred_check
    _
  $region11: #{char_rnn_forward.2} parent=0 // pred_check_branch
    %13 = sbr.rel (0) target = $region13
  $region12: #{char_rnn_forward.2} parent=0 // pred_region
    _
  $region13: #{char_rnn_forward.2} parent=0 // pred_fallthru
    _
  %v14 = vld [vmem:[%s0] sm:$0xff]
  %v15 = vld [vmem:[%s0 + $0x8] sm:$0xff]
  %v16 = vld [vmem:[%s1] sm:$0xff]
  %v17 = vld [vmem:[%s1 + $0x8] sm:$0xff]
  %v18 = vld [vmem:[%s1 + $0x10] sm:$0xff]
  %v19 = vld [vmem:[%s1 + $0x18] sm:$0xff]
  %v20 = vld [vmem:[%s1 + $0x20] sm:$0xff]
  %v21 = vld [vmem:[%s1 + $0x28] sm:$0xff]
  %v22 = vld [vmem:[%s1 + $0x30] sm:$0xff]
  %v23 = vld [vmem:[%s1 + $0x38] sm:$0xff]
  %v24 = vld [vmem:[%s1 + $0x40] sm:$0xff]
  %v25 = vld [vmem:[%s1 + $0x48] sm:$0xff]
  %v26 = vld [vmem:[%s1 + $0x50] sm:$0xff]
  %v27 = vld [vmem:[%s1 + $0x58] sm:$0xff]
  %v28 = vld [vmem:[%s1 + $0x60] sm:$0xff]
  %v29 = vld [vmem:[%s1 + $0x68] sm:$0xff]
  %v30 = vld [vmem:[%s1 + $0x70] sm:$0xff]
  %v31 = vld [vmem:[%s1 + $0x78] sm:$0xff]
  %v32 = vld [vmem:[%s2] sm:$0x1]
  %v34 = vlaneseq
  %v35 = vshrl.u32 %v34, 7
  %v36 = vsub.s32 0, %v35
  %v37 = vrot.slane %v32, %v36
  %39 = vmatprep.subr.mxu0 0.0
  %40 = vmatpush1.msra.mxu0 %v16
  %41 = vmatprep.subr.mxu0 0.0
  %42 = vmatpush1.msra.mxu0 %v17
  %43 = vmatprep.subr.mxu0 0.0
  %44 = vmatpush1.msra.mxu0 %v18
  %45 = vmatprep.subr.mxu0 0.0
  %46 = vmatpush1.msra.mxu0 %v19
  %47 = vmatprep.subr.mxu0 0.0
  %48 = vmatpush1.msra.mxu0 %v20
  %49 = vmatprep.subr.mxu0 0.0
  %50 = vmatpush1.msra.mxu0 %v21
  %51 = vmatprep.subr.mxu0 0.0
  %52 = vmatpush1.msra.mxu0 %v22
  %53 = vmatprep.subr.mxu0 0.0
  %54 = vmatpush1.msra.mxu0 %v23
  %55 = vmatprep.subr.mxu0 0.0
  %56 = vmatpush1.msra.mxu0 %v24
  %57 = vmatprep.subr.mxu0 0.0
  %58 = vmatpush1.msra.mxu0 %v25
  %59 = vmatprep.subr.mxu0 0.0
  %60 = vmatpush1.msra.mxu0 %v26
  %61 = vmatprep.subr.mxu0 0.0
  %62 = vmatpush1.msra.mxu0 %v27
  %63 = vmatprep.subr.mxu0 0.0
  %64 = vmatpush1.msra.mxu0 %v28
  %65 = vmatprep.subr.mxu0 0.0
  %66 = vmatpush1.msra.mxu0 %v29
  %67 = vmatprep.subr.mxu0 0.0
  %68 = vmatpush1.msra.mxu0 %v30
  %69 = vmatprep.subr.mxu0 0.0
  %70 = vmatpush1.msra.mxu0 %v31
  %71 = vmatprep.subr.mxu0 0.0
  %72 = vmatpush1.msra.mxu0 0.0
  %73 = vmatprep.subr.mxu0 0.0
  %74 = vmatpush1.msra.mxu0 0.0
  %75 = vmatprep.subr.mxu0 0.0
  %76 = vmatpush1.msra.mxu0 0.0
  %77 = vmatprep.subr.mxu0 0.0
  %78 = vmatpush1.msra.mxu0 0.0
  %79 = vmatprep.subr.mxu0 0.0
  %80 = vmatpush1.msra.mxu0 0.0
  %81 = vmatprep.subr.mxu0 0.0
  %82 = vmatpush1.msra.mxu0 0.0
  %83 = vmatprep.subr.mxu0 0.0
  %84 = vmatpush1.msra.mxu0 0.0
  %85 = vmatprep.subr.mxu0 0.0
  %86 = vmatpush1.msra.mxu0 0.0
  %87 = vmatprep.subr.mxu0 0.0
  %88 = vmatpush1.msra.mxu0 0.0
  %89 = vmatprep.subr.mxu0 0.0
  %90 = vmatpush1.msra.mxu0 0.0
  %91 = vmatprep.subr.mxu0 0.0
  %92 = vmatpush1.msra.mxu0 0.0
  %93 = vmatprep.subr.mxu0 0.0
  %94 = vmatpush1.msra.mxu0 0.0
  %95 = vmatprep.subr.mxu0 0.0
  %96 = vmatpush1.msra.mxu0 0.0
  %97 = vmatprep.subr.mxu0 0.0
  %98 = vmatpush1.msra.mxu0 0.0
  %99 = vmatprep.subr.mxu0 0.0
  %100 = vmatpush1.msra.mxu0 0.0
  %101 = vmatprep.subr.mxu0 0.0
  %102 = vmatpush1.msra.mxu0 0.0
  %103 = vmatprep.mubr.f32.mxu0 0.0
  %104 = vmatmul.mubr.f32.gmra.mrb[0].mxu0 %v14
  %v105 = vpop.f32.mrb[0].mxu0
  %v106 = vadd.f32 %v37, %v105
  %v107 = vpop.f32.mrb[0].mxu0
  %108 = vmatprep.mubr.f32.mxu0 0.0
  %109 = vmatmul.mubr.f32.gmra.mrb[0].mxu0 %v15
  %v110 = vpop.f32.mrb[0].mxu0
  %v111 = vadd.f32 %v37, %v110
  %v112 = vpop.f32.mrb[0].mxu0
  %113 = vdwg.mxu0
  %114 = vst [vmem:[%s3] sm:$0xff] %v106
  %115 = vst [vmem:[%s3 + $0x8] sm:$0xff] %v111
  // Predicated region
  $region14: #{char_rnn_forward.2} parent=0 // pred_check
    _
  $region15: #{char_rnn_forward.2} parent=0 // pred_check_branch
    %117 = sbr.rel (0) target = $region17
  $region16: #{char_rnn_forward.2} parent=0 // pred_region
    _
  $region17: #{char_rnn_forward.2} parent=0 // pred_fallthru
    _
  // Predicated region
  $region18: #{char_rnn_forward.2} parent=0 // pred_check
    _
  $region19: #{char_rnn_forward.2} parent=0 // pred_check_branch
    %119 = sbr.rel (0) target = $region21
  $region20: #{char_rnn_forward.2} parent=0 // pred_region
    _
  $region21: #{char_rnn_forward.2} parent=0 // pred_fallthru
    _

// kernel: char_rnn_forward.3
$region0: #{char_rnn_forward.3}
  #allocation0 [shape = 'u32[]', space=smem, size = 0x4, offset = 0x4, fixed_abs, tag = 'smem constant byte address 0x4 - core index']
  #allocation1 [shape = 'u32[144,128]{1,0:T(1,128)}', space=vmem, size = 0x12000, scoped, tag = 'internal scratch']
  #allocation2 [shape = 'f32[8,128]{1,0:T(8,128)}', space=vmem, size = 0x1000, scoped, tag = 'scratch operand']
  #allocation3 [shape = 'f32[64,128]{1,0:T(8,128)}', space=vmem, size = 0x8000, scoped, tag = 'scratch operand']
  #allocation4 [shape = 'f32[64,128]{1,0:T(8,128)}', space=vmem, size = 0x8000, scoped, tag = 'scratch operand']
  #allocation5 [shape = 's32[1]{0}', space=sflag, size = 0x4, scoped, tag = 'scoped memory for char_rnn_forward.3']
  #allocation6 [shape = 'u8[512]{0}', space=smem, size = 0x200, scoped, tag = 'prefetched SMEM operand 0']
  %s0 = inlined_call_operand.vmem [shape: s32[64], index: 0, kind: input, shape index: {}]
  %s1 = inlined_call_operand.vmem [shape: f32[16,1,128], index: 1, kind: input, shape index: {}]
  %s2 = inlined_call_operand.vmem [shape: f32[8,128], index: 2, kind: input, shape index: {}]
  %s3 = inlined_call_operand.vmem [shape: f32[128,128], index: 3, kind: input, shape index: {}]
  %s4 = inlined_call_operand.vmem [shape: f32[128,128], index: 4, kind: input, shape index: {}]
  %s5 = inlined_call_operand.vmem [shape: f32[1,128], index: 5, kind: input, shape index: {}]
  %s6 = inlined_call_operand.vmem [shape: f32[8,8,128], index: 6, kind: output, shape index: {0}]
  %s7 = inlined_call_operand.vmem [shape: f32[8,128], index: 7, kind: output, shape index: {1}]
  %8 = xla_tuple %s6, %s7
  %s9 = sld [smem:[#allocation0]]
  $region46: #{char_rnn_forward.3} parent=0
    _
  %s11 = ssub.s32 1, %s9
  %s12 = scalar_select 0, %s11, %s9
  %s13 = sshll.u32 %s0, 4
  %s14 = int_to_ptr.vmem [resolvable:$true] %s13
  %16 = dma.vmem_to_smem %s14, 16, [#allocation6], [#allocation5]
  %17 = dma.done [#allocation5], 16
  %18 = sfence
  // Predicated region
  $region2: #{char_rnn_forward.3} parent=0 // pred_check
    _
  $region3: #{char_rnn_forward.3} parent=0 // pred_check_branch
    %20 = sbr.rel (0) target = $region5
  $region4: #{char_rnn_forward.3} parent=0 // pred_region
    _
  $region5: #{char_rnn_forward.3} parent=0 // pred_fallthru
    _
  // Predicated region
  $region6: #{char_rnn_forward.3} parent=0 // pred_check
    _
  $region7: #{char_rnn_forward.3} parent=0 // pred_check_branch
    %22 = sbr.rel (0) target = $region9
  $region8: #{char_rnn_forward.3} parent=0 // pred_region
    _
  $region9: #{char_rnn_forward.3} parent=0 // pred_fallthru
    _
  // Predicated region
  $region10: #{char_rnn_forward.3} parent=0 // pred_check
    _
  $region11: #{char_rnn_forward.3} parent=0 // pred_check_branch
    %24 = sbr.rel (0) target = $region13
  $region12: #{char_rnn_forward.3} parent=0 // pred_region
    _
  $region13: #{char_rnn_forward.3} parent=0 // pred_fallthru
    _
  // Predicated region
  $region14: #{char_rnn_forward.3} parent=0 // pred_check
    _
  $region15: #{char_rnn_forward.3} parent=0 // pred_check_branch
    %26 = sbr.rel (0) target = $region17
  $region16: #{char_rnn_forward.3} parent=0 // pred_region
    _
  $region17: #{char_rnn_forward.3} parent=0 // pred_fallthru
    _
  // Predicated region
  $region18: #{char_rnn_forward.3} parent=0 // pred_check
    _
  $region19: #{char_rnn_forward.3} parent=0 // pred_check_branch
    %28 = sbr.rel (0) target = $region21
  $region20: #{char_rnn_forward.3} parent=0 // pred_region
    _
  $region21: #{char_rnn_forward.3} parent=0 // pred_fallthru
    _
  %s29 = smul.u32 0, 8
  %s30 = smul.u32 0, 8
  %s31 = smul.u32 0, 64
  %s32 = sadd.s32 %s31, %s30
  %s33 = sld [smem:[#allocation6 + %s32]]
  %s34 = scalar_lea.vmem %s1, %s33
  %v35 = vld [vmem:[%s34] sm:$0x1]
  %36 = vst [vmem:[#allocation3] sm:$0x1] %v35
  %s37 = sadd.s32 %s32, 1
  %s38 = sld [smem:[#allocation6 + %s37]]
  %s39 = scalar_lea.vmem %s1, %s38
  %v40 = vld [vmem:[%s39] sm:$0x1]
  %41 = vst [vmem:[#allocation3 + $0x1] sm:$0x1] %v40
  %s42 = sadd.s32 %s32, 2
  %s43 = sld [smem:[#allocation6 + %s42]]
  %s44 = scalar_lea.vmem %s1, %s43
  %v45 = vld [vmem:[%s44] sm:$0x1]
  %46 = vst [vmem:[#allocation3 + $0x2] sm:$0x1] %v45
  %s47 = sadd.s32 %s32, 3
  %s48 = sld [smem:[#allocation6 + %s47]]
  %s49 = scalar_lea.vmem %s1, %s48
  %v50 = vld [vmem:[%s49] sm:$0x1]
  %51 = vst [vmem:[#allocation3 + $0x3] sm:$0x1] %v50
  %s52 = sadd.s32 %s32, 4
  %s53 = sld [smem:[#allocation6 + %s52]]
  %s54 = scalar_lea.vmem %s1, %s53
  %v55 = vld [vmem:[%s54] sm:$0x1]
  %56 = vst [vmem:[#allocation3 + $0x4] sm:$0x1] %v55
  %s57 = sadd.s32 %s32, 5
  %s58 = sld [smem:[#allocation6 + %s57]]
  %s59 = scalar_lea.vmem %s1, %s58
  %v60 = vld [vmem:[%s59] sm:$0x1]
  %61 = vst [vmem:[#allocation3 + $0x5] sm:$0x1] %v60
  %s62 = sadd.s32 %s32, 6
  %s63 = sld [smem:[#allocation6 + %s62]]
  %s64 = scalar_lea.vmem %s1, %s63
  %v65 = vld [vmem:[%s64] sm:$0x1]
  %66 = vst [vmem:[#allocation3 + $0x6] sm:$0x1] %v65
  %s67 = sadd.s32 %s32, 7
  %s68 = sld [smem:[#allocation6 + %s67]]
  %s69 = scalar_lea.vmem %s1, %s68
  %v70 = vld [vmem:[%s69] sm:$0x1]
  %71 = vst [vmem:[#allocation3 + $0x7] sm:$0x1] %v70
  %s72 = sadd.s32 %s29, 1
  %s73 = smul.u32 %s72, 8
  %s74 = sadd.s32 %s73, %s30
  %s75 = sld [smem:[#allocation6 + %s74]]
  %s76 = scalar_lea.vmem %s1, %s75
  %v77 = vld [vmem:[%s76] sm:$0x1]
  %78 = vst [vmem:[#allocation3 + $0x8] sm:$0x1] %v77
  %s79 = sadd.s32 %s74, 1
  %s80 = sld [smem:[#allocation6 + %s79]]
  %s81 = scalar_lea.vmem %s1, %s80
  %v82 = vld [vmem:[%s81] sm:$0x1]
  %83 = vst [vmem:[#allocation3 + $0x9] sm:$0x1] %v82
  %s84 = sadd.s32 %s74, 2
  %s85 = sld [smem:[#allocation6 + %s84]]
  %s86 = scalar_lea.vmem %s1, %s85
  %v87 = vld [vmem:[%s86] sm:$0x1]
  %88 = vst [vmem:[#allocation3 + $0xa] sm:$0x1] %v87
  %s89 = sadd.s32 %s74, 3
  %s90 = sld [smem:[#allocation6 + %s89]]
  %s91 = scalar_lea.vmem %s1, %s90
  %v92 = vld [vmem:[%s91] sm:$0x1]
  %93 = vst [vmem:[#allocation3 + $0xb] sm:$0x1] %v92
  %s94 = sadd.s32 %s74, 4
  %s95 = sld [smem:[#allocation6 + %s94]]
  %s96 = scalar_lea.vmem %s1, %s95
  %v97 = vld [vmem:[%s96] sm:$0x1]
  %98 = vst [vmem:[#allocation3 + $0xc] sm:$0x1] %v97
  %s99 = sadd.s32 %s74, 5
  %s100 = sld [smem:[#allocation6 + %s99]]
  %s101 = scalar_lea.vmem %s1, %s100
  %v102 = vld [vmem:[%s101] sm:$0x1]
  %103 = vst [vmem:[#allocation3 + $0xd] sm:$0x1] %v102
  %s104 = sadd.s32 %s74, 6
  %s105 = sld [smem:[#allocation6 + %s104]]
  %s106 = scalar_lea.vmem %s1, %s105
  %v107 = vld [vmem:[%s106] sm:$0x1]
  %108 = vst [vmem:[#allocation3 + $0xe] sm:$0x1] %v107
  %s109 = sadd.s32 %s74, 7
  %s110 = sld [smem:[#allocation6 + %s109]]
  %s111 = scalar_lea.vmem %s1, %s110
  %v112 = vld [vmem:[%s111] sm:$0x1]
  %113 = vst [vmem:[#allocation3 + $0xf] sm:$0x1] %v112
  %s114 = sadd.s32 %s29, 2
  %s115 = smul.u32 %s114, 8
  %s116 = sadd.s32 %s115, %s30
  %s117 = sld [smem:[#allocation6 + %s116]]
  %s118 = scalar_lea.vmem %s1, %s117
  %v119 = vld [vmem:[%s118] sm:$0x1]
  %120 = vst [vmem:[#allocation3 + $0x10] sm:$0x1] %v119
  %s121 = sadd.s32 %s116, 1
  %s122 = sld [smem:[#allocation6 + %s121]]
  %s123 = scalar_lea.vmem %s1, %s122
  %v124 = vld [vmem:[%s123] sm:$0x1]
  %125 = vst [vmem:[#allocation3 + $0x11] sm:$0x1] %v124
  %s126 = sadd.s32 %s116, 2
  %s127 = sld [smem:[#allocation6 + %s126]]
  %s128 = scalar_lea.vmem %s1, %s127
  %v129 = vld [vmem:[%s128] sm:$0x1]
  %130 = vst [vmem:[#allocation3 + $0x12] sm:$0x1] %v129
  %s131 = sadd.s32 %s116, 3
  %s132 = sld [smem:[#allocation6 + %s131]]
  %s133 = scalar_lea.vmem %s1, %s132
  %v134 = vld [vmem:[%s133] sm:$0x1]
  %135 = vst [vmem:[#allocation3 + $0x13] sm:$0x1] %v134
  %s136 = sadd.s32 %s116, 4
  %s137 = sld [smem:[#allocation6 + %s136]]
  %s138 = scalar_lea.vmem %s1, %s137
  %v139 = vld [vmem:[%s138] sm:$0x1]
  %140 = vst [vmem:[#allocation3 + $0x14] sm:$0x1] %v139
  %s141 = sadd.s32 %s116, 5
  %s142 = sld [smem:[#allocation6 + %s141]]
  %s143 = scalar_lea.vmem %s1, %s142
  %v144 = vld [vmem:[%s143] sm:$0x1]
  %145 = vst [vmem:[#allocation3 + $0x15] sm:$0x1] %v144
  %s146 = sadd.s32 %s116, 6
  %s147 = sld [smem:[#allocation6 + %s146]]
  %s148 = scalar_lea.vmem %s1, %s147
  %v149 = vld [vmem:[%s148] sm:$0x1]
  %150 = vst [vmem:[#allocation3 + $0x16] sm:$0x1] %v149
  %s151 = sadd.s32 %s116, 7
  %s152 = sld [smem:[#allocation6 + %s151]]
  %s153 = scalar_lea.vmem %s1, %s152
  %v154 = vld [vmem:[%s153] sm:$0x1]
  %155 = vst [vmem:[#allocation3 + $0x17] sm:$0x1] %v154
  %s156 = sadd.s32 %s29, 3
  %s157 = smul.u32 %s156, 8
  %s158 = sadd.s32 %s157, %s30
  %s159 = sld [smem:[#allocation6 + %s158]]
  %s160 = scalar_lea.vmem %s1, %s159
  %v161 = vld [vmem:[%s160] sm:$0x1]
  %162 = vst [vmem:[#allocation3 + $0x18] sm:$0x1] %v161
  %s163 = sadd.s32 %s158, 1
  %s164 = sld [smem:[#allocation6 + %s163]]
  %s165 = scalar_lea.vmem %s1, %s164
  %v166 = vld [vmem:[%s165] sm:$0x1]
  %167 = vst [vmem:[#allocation3 + $0x19] sm:$0x1] %v166
  %s168 = sadd.s32 %s158, 2
  %s169 = sld [smem:[#allocation6 + %s168]]
  %s170 = scalar_lea.vmem %s1, %s169
  %v171 = vld [vmem:[%s170] sm:$0x1]
  %172 = vst [vmem:[#allocation3 + $0x1a] sm:$0x1] %v171
  %s173 = sadd.s32 %s158, 3
  %s174 = sld [smem:[#allocation6 + %s173]]
  %s175 = scalar_lea.vmem %s1, %s174
  %v176 = vld [vmem:[%s175] sm:$0x1]
  %177 = vst [vmem:[#allocation3 + $0x1b] sm:$0x1] %v176
  %s178 = sadd.s32 %s158, 4
  %s179 = sld [smem:[#allocation6 + %s178]]
  %s180 = scalar_lea.vmem %s1, %s179
  %v181 = vld [vmem:[%s180] sm:$0x1]
  %182 = vst [vmem:[#allocation3 + $0x1c] sm:$0x1] %v181
  %s183 = sadd.s32 %s158, 5
  %s184 = sld [smem:[#allocation6 + %s183]]
  %s185 = scalar_lea.vmem %s1, %s184
  %v186 = vld [vmem:[%s185] sm:$0x1]
  %187 = vst [vmem:[#allocation3 + $0x1d] sm:$0x1] %v186
  %s188 = sadd.s32 %s158, 6
  %s189 = sld [smem:[#allocation6 + %s188]]
  %s190 = scalar_lea.vmem %s1, %s189
  %v191 = vld [vmem:[%s190] sm:$0x1]
  %192 = vst [vmem:[#allocation3 + $0x1e] sm:$0x1] %v191
  %s193 = sadd.s32 %s158, 7
  %s194 = sld [smem:[#allocation6 + %s193]]
  %s195 = scalar_lea.vmem %s1, %s194
  %v196 = vld [vmem:[%s195] sm:$0x1]
  %197 = vst [vmem:[#allocation3 + $0x1f] sm:$0x1] %v196
  %s198 = sadd.s32 %s29, 4
  %s199 = smul.u32 %s198, 8
  %s200 = sadd.s32 %s199, %s30
  %s201 = sld [smem:[#allocation6 + %s200]]
  %s202 = scalar_lea.vmem %s1, %s201
  %v203 = vld [vmem:[%s202] sm:$0x1]
  %204 = vst [vmem:[#allocation3 + $0x20] sm:$0x1] %v203
  %s205 = sadd.s32 %s200, 1
  %s206 = sld [smem:[#allocation6 + %s205]]
  %s207 = scalar_lea.vmem %s1, %s206
  %v208 = vld [vmem:[%s207] sm:$0x1]
  %209 = vst [vmem:[#allocation3 + $0x21] sm:$0x1] %v208
  %s210 = sadd.s32 %s200, 2
  %s211 = sld [smem:[#allocation6 + %s210]]
  %s212 = scalar_lea.vmem %s1, %s211
  %v213 = vld [vmem:[%s212] sm:$0x1]
  %214 = vst [vmem:[#allocation3 + $0x22] sm:$0x1] %v213
  %s215 = sadd.s32 %s200, 3
  %s216 = sld [smem:[#allocation6 + %s215]]
  %s217 = scalar_lea.vmem %s1, %s216
  %v218 = vld [vmem:[%s217] sm:$0x1]
  %219 = vst [vmem:[#allocation3 + $0x23] sm:$0x1] %v218
  %s220 = sadd.s32 %s200, 4
  %s221 = sld [smem:[#allocation6 + %s220]]
  %s222 = scalar_lea.vmem %s1, %s221
  %v223 = vld [vmem:[%s222] sm:$0x1]
  %224 = vst [vmem:[#allocation3 + $0x24] sm:$0x1] %v223
  %s225 = sadd.s32 %s200, 5
  %s226 = sld [smem:[#allocation6 + %s225]]
  %s227 = scalar_lea.vmem %s1, %s226
  %v228 = vld [vmem:[%s227] sm:$0x1]
  %229 = vst [vmem:[#allocation3 + $0x25] sm:$0x1] %v228
  %s230 = sadd.s32 %s200, 6
  %s231 = sld [smem:[#allocation6 + %s230]]
  %s232 = scalar_lea.vmem %s1, %s231
  %v233 = vld [vmem:[%s232] sm:$0x1]
  %234 = vst [vmem:[#allocation3 + $0x26] sm:$0x1] %v233
  %s235 = sadd.s32 %s200, 7
  %s236 = sld [smem:[#allocation6 + %s235]]
  %s237 = scalar_lea.vmem %s1, %s236
  %v238 = vld [vmem:[%s237] sm:$0x1]
  %239 = vst [vmem:[#allocation3 + $0x27] sm:$0x1] %v238
  %s240 = sadd.s32 %s29, 5
  %s241 = smul.u32 %s240, 8
  %s242 = sadd.s32 %s241, %s30
  %s243 = sld [smem:[#allocation6 + %s242]]
  %s244 = scalar_lea.vmem %s1, %s243
  %v245 = vld [vmem:[%s244] sm:$0x1]
  %246 = vst [vmem:[#allocation3 + $0x28] sm:$0x1] %v245
  %s247 = sadd.s32 %s242, 1
  %s248 = sld [smem:[#allocation6 + %s247]]
  %s249 = scalar_lea.vmem %s1, %s248
  %v250 = vld [vmem:[%s249] sm:$0x1]
  %251 = vst [vmem:[#allocation3 + $0x29] sm:$0x1] %v250
  %s252 = sadd.s32 %s242, 2
  %s253 = sld [smem:[#allocation6 + %s252]]
  %s254 = scalar_lea.vmem %s1, %s253
  %v255 = vld [vmem:[%s254] sm:$0x1]
  %256 = vst [vmem:[#allocation3 + $0x2a] sm:$0x1] %v255
  %s257 = sadd.s32 %s242, 3
  %s258 = sld [smem:[#allocation6 + %s257]]
  %s259 = scalar_lea.vmem %s1, %s258
  %v260 = vld [vmem:[%s259] sm:$0x1]
  %261 = vst [vmem:[#allocation3 + $0x2b] sm:$0x1] %v260
  %s262 = sadd.s32 %s242, 4
  %s263 = sld [smem:[#allocation6 + %s262]]
  %s264 = scalar_lea.vmem %s1, %s263
  %v265 = vld [vmem:[%s264] sm:$0x1]
  %266 = vst [vmem:[#allocation3 + $0x2c] sm:$0x1] %v265
  %s267 = sadd.s32 %s242, 5
  %s268 = sld [smem:[#allocation6 + %s267]]
  %s269 = scalar_lea.vmem %s1, %s268
  %v270 = vld [vmem:[%s269] sm:$0x1]
  %271 = vst [vmem:[#allocation3 + $0x2d] sm:$0x1] %v270
  %s272 = sadd.s32 %s242, 6
  %s273 = sld [smem:[#allocation6 + %s272]]
  %s274 = scalar_lea.vmem %s1, %s273
  %v275 = vld [vmem:[%s274] sm:$0x1]
  %276 = vst [vmem:[#allocation3 + $0x2e] sm:$0x1] %v275
  %s277 = sadd.s32 %s242, 7
  %s278 = sld [smem:[#allocation6 + %s277]]
  %s279 = scalar_lea.vmem %s1, %s278
  %v280 = vld [vmem:[%s279] sm:$0x1]
  %281 = vst [vmem:[#allocation3 + $0x2f] sm:$0x1] %v280
  %s282 = sadd.s32 %s29, 6
  %s283 = smul.u32 %s282, 8
  %s284 = sadd.s32 %s283, %s30
  %s285 = sld [smem:[#allocation6 + %s284]]
  %s286 = scalar_lea.vmem %s1, %s285
  %v287 = vld [vmem:[%s286] sm:$0x1]
  %288 = vst [vmem:[#allocation3 + $0x30] sm:$0x1] %v287
  %s289 = sadd.s32 %s284, 1
  %s290 = sld [smem:[#allocation6 + %s289]]
  %s291 = scalar_lea.vmem %s1, %s290
  %v292 = vld [vmem:[%s291] sm:$0x1]
  %293 = vst [vmem:[#allocation3 + $0x31] sm:$0x1] %v292
  %s294 = sadd.s32 %s284, 2
  %s295 = sld [smem:[#allocation6 + %s294]]
  %s296 = scalar_lea.vmem %s1, %s295
  %v297 = vld [vmem:[%s296] sm:$0x1]
  %298 = vst [vmem:[#allocation3 + $0x32] sm:$0x1] %v297
  %s299 = sadd.s32 %s284, 3
  %s300 = sld [smem:[#allocation6 + %s299]]
  %s301 = scalar_lea.vmem %s1, %s300
  %v302 = vld [vmem:[%s301] sm:$0x1]
  %303 = vst [vmem:[#allocation3 + $0x33] sm:$0x1] %v302
  %s304 = sadd.s32 %s284, 4
  %s305 = sld [smem:[#allocation6 + %s304]]
  %s306 = scalar_lea.vmem %s1, %s305
  %v307 = vld [vmem:[%s306] sm:$0x1]
  %308 = vst [vmem:[#allocation3 + $0x34] sm:$0x1] %v307
  %s309 = sadd.s32 %s284, 5
  %s310 = sld [smem:[#allocation6 + %s309]]
  %s311 = scalar_lea.vmem %s1, %s310
  %v312 = vld [vmem:[%s311] sm:$0x1]
  %313 = vst [vmem:[#allocation3 + $0x35] sm:$0x1] %v312
  %s314 = sadd.s32 %s284, 6
  %s315 = sld [smem:[#allocation6 + %s314]]
  %s316 = scalar_lea.vmem %s1, %s315
  %v317 = vld [vmem:[%s316] sm:$0x1]
  %318 = vst [vmem:[#allocation3 + $0x36] sm:$0x1] %v317
  %s319 = sadd.s32 %s284, 7
  %s320 = sld [smem:[#allocation6 + %s319]]
  %s321 = scalar_lea.vmem %s1, %s320
  %v322 = vld [vmem:[%s321] sm:$0x1]
  %323 = vst [vmem:[#allocation3 + $0x37] sm:$0x1] %v322
  %s324 = sadd.s32 %s29, 7
  %s325 = smul.u32 %s324, 8
  %s326 = sadd.s32 %s325, %s30
  %s327 = sld [smem:[#allocation6 + %s326]]
  %s328 = scalar_lea.vmem %s1, %s327
  %v329 = vld [vmem:[%s328] sm:$0x1]
  %330 = vst [vmem:[#allocation3 + $0x38] sm:$0x1] %v329
  %s331 = sadd.s32 %s326, 1
  %s332 = sld [smem:[#allocation6 + %s331]]
  %s333 = scalar_lea.vmem %s1, %s332
  %v334 = vld [vmem:[%s333] sm:$0x1]
  %335 = vst [vmem:[#allocation3 + $0x39] sm:$0x1] %v334
  %s336 = sadd.s32 %s326, 2
  %s337 = sld [smem:[#allocation6 + %s336]]
  %s338 = scalar_lea.vmem %s1, %s337
  %v339 = vld [vmem:[%s338] sm:$0x1]
  %340 = vst [vmem:[#allocation3 + $0x3a] sm:$0x1] %v339
  %s341 = sadd.s32 %s326, 3
  %s342 = sld [smem:[#allocation6 + %s341]]
  %s343 = scalar_lea.vmem %s1, %s342
  %v344 = vld [vmem:[%s343] sm:$0x1]
  %345 = vst [vmem:[#allocation3 + $0x3b] sm:$0x1] %v344
  %s346 = sadd.s32 %s326, 4
  %s347 = sld [smem:[#allocation6 + %s346]]
  %s348 = scalar_lea.vmem %s1, %s347
  %v349 = vld [vmem:[%s348] sm:$0x1]
  %350 = vst [vmem:[#allocation3 + $0x3c] sm:$0x1] %v349
  %s351 = sadd.s32 %s326, 5
  %s352 = sld [smem:[#allocation6 + %s351]]
  %s353 = scalar_lea.vmem %s1, %s352
  %v354 = vld [vmem:[%s353] sm:$0x1]
  %355 = vst [vmem:[#allocation3 + $0x3d] sm:$0x1] %v354
  %s356 = sadd.s32 %s326, 6
  %s357 = sld [smem:[#allocation6 + %s356]]
  %s358 = scalar_lea.vmem %s1, %s357
  %v359 = vld [vmem:[%s358] sm:$0x1]
  %360 = vst [vmem:[#allocation3 + $0x3e] sm:$0x1] %v359
  %s361 = sadd.s32 %s326, 7
  %s362 = sld [smem:[#allocation6 + %s361]]
  %s363 = scalar_lea.vmem %s1, %s362
  %v364 = vld [vmem:[%s363] sm:$0x1]
  %365 = vst [vmem:[#allocation3 + $0x3f] sm:$0x1] %v364
  %p366 = scmp.eq.s32.totalorder 0, 0
  // Predicated region
  $region22: #{char_rnn_forward.3} parent=0 // pred_check
    %p367 = pneg %p366
  $region23: #{char_rnn_forward.3} parent=0 // pred_check_branch
    %369 = sbr.rel (%p367) target = $region25
  $region24: #{char_rnn_forward.3} parent=0 // pred_region
    %v370 = vld [vmem:[%s2] sm:$0xff]
    %371 = vst [vmem:[#allocation2] sm:$0xff] %v370
  $region25: #{char_rnn_forward.3} parent=0 // pred_fallthru
    _
  %v372 = vld [vmem:[#allocation2] sm:$0xff]
  %v373 = vld [vmem:[%s3] sm:$0xff]
  %v374 = vld [vmem:[%s3 + $0x8] sm:$0xff]
  %v375 = vld [vmem:[%s3 + $0x10] sm:$0xff]
  %v376 = vld [vmem:[%s3 + $0x18] sm:$0xff]
  %v377 = vld [vmem:[%s3 + $0x20] sm:$0xff]
  %v378 = vld [vmem:[%s3 + $0x28] sm:$0xff]
  %v379 = vld [vmem:[%s3 + $0x30] sm:$0xff]
  %v380 = vld [vmem:[%s3 + $0x38] sm:$0xff]
  %v381 = vld [vmem:[%s3 + $0x40] sm:$0xff]
  %v382 = vld [vmem:[%s3 + $0x48] sm:$0xff]
  %v383 = vld [vmem:[%s3 + $0x50] sm:$0xff]
  %v384 = vld [vmem:[%s3 + $0x58] sm:$0xff]
  %v385 = vld [vmem:[%s3 + $0x60] sm:$0xff]
  %v386 = vld [vmem:[%s3 + $0x68] sm:$0xff]
  %v387 = vld [vmem:[%s3 + $0x70] sm:$0xff]
  %v388 = vld [vmem:[%s3 + $0x78] sm:$0xff]
  %v389 = vld [vmem:[#allocation3] sm:$0xff]
  %390 = vmatprep.subr.mxu0 0.0
  %391 = vmatpush1.msra.mxu0 %v373
  %392 = vmatprep.subr.mxu0 0.0
  %393 = vmatpush1.msra.mxu0 %v374
  %394 = vmatprep.subr.mxu0 0.0
  %395 = vmatpush1.msra.mxu0 %v375
  %396 = vmatprep.subr.mxu0 0.0
  %397 = vmatpush1.msra.mxu0 %v376
  %398 = vmatprep.subr.mxu0 0.0
  %399 = vmatpush1.msra.mxu0 %v377
  %400 = vmatprep.subr.mxu0 0.0
  %401 = vmatpush1.msra.mxu0 %v378
  %402 = vmatprep.subr.mxu0 0.0
  %403 = vmatpush1.msra.mxu0 %v379
  %404 = vmatprep.subr.mxu0 0.0
  %405 = vmatpush1.msra.mxu0 %v380
  %406 = vmatprep.subr.mxu0 0.0
  %407 = vmatpush1.msra.mxu0 %v381
  %408 = vmatprep.subr.mxu0 0.0
  %409 = vmatpush1.msra.mxu0 %v382
  %410 = vmatprep.subr.mxu0 0.0
  %411 = vmatpush1.msra.mxu0 %v383
  %412 = vmatprep.subr.mxu0 0.0
  %413 = vmatpush1.msra.mxu0 %v384
  %414 = vmatprep.subr.mxu0 0.0
  %415 = vmatpush1.msra.mxu0 %v385
  %416 = vmatprep.subr.mxu0 0.0
  %417 = vmatpush1.msra.mxu0 %v386
  %418 = vmatprep.subr.mxu0 0.0
  %419 = vmatpush1.msra.mxu0 %v387
  %420 = vmatprep.subr.mxu0 0.0
  %421 = vmatpush1.msra.mxu0 %v388
  %422 = vmatprep.subr.mxu0 0.0
  %423 = vmatpush1.msra.mxu0 0.0
  %424 = vmatprep.subr.mxu0 0.0
  %425 = vmatpush1.msra.mxu0 0.0
  %426 = vmatprep.subr.mxu0 0.0
  %427 = vmatpush1.msra.mxu0 0.0
  %428 = vmatprep.subr.mxu0 0.0
  %429 = vmatpush1.msra.mxu0 0.0
  %430 = vmatprep.subr.mxu0 0.0
  %431 = vmatpush1.msra.mxu0 0.0
  %432 = vmatprep.subr.mxu0 0.0
  %433 = vmatpush1.msra.mxu0 0.0
  %434 = vmatprep.subr.mxu0 0.0
  %435 = vmatpush1.msra.mxu0 0.0
  %436 = vmatprep.subr.mxu0 0.0
  %437 = vmatpush1.msra.mxu0 0.0
  %438 = vmatprep.subr.mxu0 0.0
  %439 = vmatpush1.msra.mxu0 0.0
  %440 = vmatprep.subr.mxu0 0.0
  %441 = vmatpush1.msra.mxu0 0.0
  %442 = vmatprep.subr.mxu0 0.0
  %443 = vmatpush1.msra.mxu0 0.0
  %444 = vmatprep.subr.mxu0 0.0
  %445 = vmatpush1.msra.mxu0 0.0
  %446 = vmatprep.subr.mxu0 0.0
  %447 = vmatpush1.msra.mxu0 0.0
  %448 = vmatprep.subr.mxu0 0.0
  %449 = vmatpush1.msra.mxu0 0.0
  %450 = vmatprep.subr.mxu0 0.0
  %451 = vmatpush1.msra.mxu0 0.0
  %452 = vmatprep.subr.mxu0 0.0
  %453 = vmatpush1.msra.mxu0 0.0
  %454 = vmatprep.mubr.f32.mxu0 0.0
  %455 = vmatmul.mubr.f32.gmra.mrb[0].mxu0 %v372
  %v456 = vpop.f32.mrb[0].mxu0
  %v457 = vadd.f32 0.0, %v456
  %v458 = vpop.f32.mrb[0].mxu0
  %459 = vdwg.mxu0
  %v460 = vadd.f32 %v389, %v457
  %v461 = vtanh.pop %v460
  %462 = vst [vmem:[#allocation4] sm:$0xff] %v461
  %v463 = vld [vmem:[#allocation3 + $0x8] sm:$0xff]
  %464 = vmatprep.subr.mxu0 0.0
  %465 = vmatpush1.msra.mxu0 %v373
  %466 = vmatprep.subr.mxu0 0.0
  %467 = vmatpush1.msra.mxu0 %v374
  %468 = vmatprep.subr.mxu0 0.0
  %469 = vmatpush1.msra.mxu0 %v375
  %470 = vmatprep.subr.mxu0 0.0
  %471 = vmatpush1.msra.mxu0 %v376
  %472 = vmatprep.subr.mxu0 0.0
  %473 = vmatpush1.msra.mxu0 %v377
  %474 = vmatprep.subr.mxu0 0.0
  %475 = vmatpush1.msra.mxu0 %v378
  %476 = vmatprep.subr.mxu0 0.0
  %477 = vmatpush1.msra.mxu0 %v379
  %478 = vmatprep.subr.mxu0 0.0
  %479 = vmatpush1.msra.mxu0 %v380
  %480 = vmatprep.subr.mxu0 0.0
  %481 = vmatpush1.msra.mxu0 %v381
  %482 = vmatprep.subr.mxu0 0.0
  %483 = vmatpush1.msra.mxu0 %v382
  %484 = vmatprep.subr.mxu0 0.0
  %485 = vmatpush1.msra.mxu0 %v383
  %486 = vmatprep.subr.mxu0 0.0
  %487 = vmatpush1.msra.mxu0 %v384
  %488 = vmatprep.subr.mxu0 0.0
  %489 = vmatpush1.msra.mxu0 %v385
  %490 = vmatprep.subr.mxu0 0.0
  %491 = vmatpush1.msra.mxu0 %v386
  %492 = vmatprep.subr.mxu0 0.0
  %493 = vmatpush1.msra.mxu0 %v387
  %494 = vmatprep.subr.mxu0 0.0
  %495 = vmatpush1.msra.mxu0 %v388
  %496 = vmatprep.subr.mxu0 0.0
  %497 = vmatpush1.msra.mxu0 0.0
  %498 = vmatprep.subr.mxu0 0.0
  %499 = vmatpush1.msra.mxu0 0.0
  %500 = vmatprep.subr.mxu0 0.0
  %501 = vmatpush1.msra.mxu0 0.0
  %502 = vmatprep.subr.mxu0 0.0
  %503 = vmatpush1.msra.mxu0 0.0
  %504 = vmatprep.subr.mxu0 0.0
  %505 = vmatpush1.msra.mxu0 0.0
  %506 = vmatprep.subr.mxu0 0.0
  %507 = vmatpush1.msra.mxu0 0.0
  %508 = vmatprep.subr.mxu0 0.0
  %509 = vmatpush1.msra.mxu0 0.0
  %510 = vmatprep.subr.mxu0 0.0
  %511 = vmatpush1.msra.mxu0 0.0
  %512 = vmatprep.subr.mxu0 0.0
  %513 = vmatpush1.msra.mxu0 0.0
  %514 = vmatprep.subr.mxu0 0.0
  %515 = vmatpush1.msra.mxu0 0.0
  %516 = vmatprep.subr.mxu0 0.0
  %517 = vmatpush1.msra.mxu0 0.0
  %518 = vmatprep.subr.mxu0 0.0
  %519 = vmatpush1.msra.mxu0 0.0
  %520 = vmatprep.subr.mxu0 0.0
  %521 = vmatpush1.msra.mxu0 0.0
  %522 = vmatprep.subr.mxu0 0.0
  %523 = vmatpush1.msra.mxu0 0.0
  %524 = vmatprep.subr.mxu0 0.0
  %525 = vmatpush1.msra.mxu0 0.0
  %526 = vmatprep.subr.mxu0 0.0
  %527 = vmatpush1.msra.mxu0 0.0
  %528 = vmatprep.mubr.f32.mxu0 0.0
  %529 = vmatmul.mubr.f32.gmra.mrb[0].mxu0 %v461
  %v530 = vpop.f32.mrb[0].mxu0
  %v531 = vadd.f32 0.0, %v530
  %v532 = vpop.f32.mrb[0].mxu0
  %533 = vdwg.mxu0
  %v534 = vadd.f32 %v463, %v531
  %v535 = vtanh.pop %v534
  %536 = vst [vmem:[#allocation4 + $0x8] sm:$0xff] %v535
  %v537 = vld [vmem:[#allocation3 + $0x10] sm:$0xff]
  %538 = vmatprep.subr.mxu0 0.0
  %539 = vmatpush1.msra.mxu0 %v373
  %540 = vmatprep.subr.mxu0 0.0
  %541 = vmatpush1.msra.mxu0 %v374
  %542 = vmatprep.subr.mxu0 0.0
  %543 = vmatpush1.msra.mxu0 %v375
  %544 = vmatprep.subr.mxu0 0.0
  %545 = vmatpush1.msra.mxu0 %v376
  %546 = vmatprep.subr.mxu0 0.0
  %547 = vmatpush1.msra.mxu0 %v377
  %548 = vmatprep.subr.mxu0 0.0
  %549 = vmatpush1.msra.mxu0 %v378
  %550 = vmatprep.subr.mxu0 0.0
  %551 = vmatpush1.msra.mxu0 %v379
  %552 = vmatprep.subr.mxu0 0.0
  %553 = vmatpush1.msra.mxu0 %v380
  %554 = vmatprep.subr.mxu0 0.0
  %555 = vmatpush1.msra.mxu0 %v381
  %556 = vmatprep.subr.mxu0 0.0
  %557 = vmatpush1.msra.mxu0 %v382
  %558 = vmatprep.subr.mxu0 0.0
  %559 = vmatpush1.msra.mxu0 %v383
  %560 = vmatprep.subr.mxu0 0.0
  %561 = vmatpush1.msra.mxu0 %v384
  %562 = vmatprep.subr.mxu0 0.0
  %563 = vmatpush1.msra.mxu0 %v385
  %564 = vmatprep.subr.mxu0 0.0
  %565 = vmatpush1.msra.mxu0 %v386
  %566 = vmatprep.subr.mxu0 0.0
  %567 = vmatpush1.msra.mxu0 %v387
  %568 = vmatprep.subr.mxu0 0.0
  %569 = vmatpush1.msra.mxu0 %v388
  %570 = vmatprep.subr.mxu0 0.0
  %571 = vmatpush1.msra.mxu0 0.0
  %572 = vmatprep.subr.mxu0 0.0
  %573 = vmatpush1.msra.mxu0 0.0
  %574 = vmatprep.subr.mxu0 0.0
  %575 = vmatpush1.msra.mxu0 0.0
  %576 = vmatprep.subr.mxu0 0.0
  %577 = vmatpush1.msra.mxu0 0.0
  %578 = vmatprep.subr.mxu0 0.0
  %579 = vmatpush1.msra.mxu0 0.0
  %580 = vmatprep.subr.mxu0 0.0
  %581 = vmatpush1.msra.mxu0 0.0
  %582 = vmatprep.subr.mxu0 0.0
  %583 = vmatpush1.msra.mxu0 0.0
  %584 = vmatprep.subr.mxu0 0.0
  %585 = vmatpush1.msra.mxu0 0.0
  %586 = vmatprep.subr.mxu0 0.0
  %587 = vmatpush1.msra.mxu0 0.0
  %588 = vmatprep.subr.mxu0 0.0
  %589 = vmatpush1.msra.mxu0 0.0
  %590 = vmatprep.subr.mxu0 0.0
  %591 = vmatpush1.msra.mxu0 0.0
  %592 = vmatprep.subr.mxu0 0.0
  %593 = vmatpush1.msra.mxu0 0.0
  %594 = vmatprep.subr.mxu0 0.0
  %595 = vmatpush1.msra.mxu0 0.0
  %596 = vmatprep.subr.mxu0 0.0
  %597 = vmatpush1.msra.mxu0 0.0
  %598 = vmatprep.subr.mxu0 0.0
  %599 = vmatpush1.msra.mxu0 0.0
  %600 = vmatprep.subr.mxu0 0.0
  %601 = vmatpush1.msra.mxu0 0.0
  %602 = vmatprep.mubr.f32.mxu0 0.0
  %603 = vmatmul.mubr.f32.gmra.mrb[0].mxu0 %v535
  %v604 = vpop.f32.mrb[0].mxu0
  %v605 = vadd.f32 0.0, %v604
  %v606 = vpop.f32.mrb[0].mxu0
  %607 = vdwg.mxu0
  %v608 = vadd.f32 %v537, %v605
  %v609 = vtanh.pop %v608
  %610 = vst [vmem:[#allocation4 + $0x10] sm:$0xff] %v609
  %v611 = vld [vmem:[#allocation3 + $0x18] sm:$0xff]
  %612 = vmatprep.subr.mxu0 0.0
  %613 = vmatpush1.msra.mxu0 %v373
  %614 = vmatprep.subr.mxu0 0.0
  %615 = vmatpush1.msra.mxu0 %v374
  %616 = vmatprep.subr.mxu0 0.0
  %617 = vmatpush1.msra.mxu0 %v375
  %618 = vmatprep.subr.mxu0 0.0
  %619 = vmatpush1.msra.mxu0 %v376
  %620 = vmatprep.subr.mxu0 0.0
  %621 = vmatpush1.msra.mxu0 %v377
  %622 = vmatprep.subr.mxu0 0.0
  %623 = vmatpush1.msra.mxu0 %v378
  %624 = vmatprep.subr.mxu0 0.0
  %625 = vmatpush1.msra.mxu0 %v379
  %626 = vmatprep.subr.mxu0 0.0
  %627 = vmatpush1.msra.mxu0 %v380
  %628 = vmatprep.subr.mxu0 0.0
  %629 = vmatpush1.msra.mxu0 %v381
  %630 = vmatprep.subr.mxu0 0.0
  %631 = vmatpush1.msra.mxu0 %v382
  %632 = vmatprep.subr.mxu0 0.0
  %633 = vmatpush1.msra.mxu0 %v383
  %634 = vmatprep.subr.mxu0 0.0
  %635 = vmatpush1.msra.mxu0 %v384
  %636 = vmatprep.subr.mxu0 0.0
  %637 = vmatpush1.msra.mxu0 %v385
  %638 = vmatprep.subr.mxu0 0.0
  %639 = vmatpush1.msra.mxu0 %v386
  %640 = vmatprep.subr.mxu0 0.0
  %641 = vmatpush1.msra.mxu0 %v387
  %642 = vmatprep.subr.mxu0 0.0
  %643 = vmatpush1.msra.mxu0 %v388
  %644 = vmatprep.subr.mxu0 0.0
  %645 = vmatpush1.msra.mxu0 0.0
  %646 = vmatprep.subr.mxu0 0.0
  %647 = vmatpush1.msra.mxu0 0.0
  %648 = vmatprep.subr.mxu0 0.0
  %649 = vmatpush1.msra.mxu0 0.0
  %650 = vmatprep.subr.mxu0 0.0
  %651 = vmatpush1.msra.mxu0 0.0
  %652 = vmatprep.subr.mxu0 0.0
  %653 = vmatpush1.msra.mxu0 0.0
  %654 = vmatprep.subr.mxu0 0.0
  %655 = vmatpush1.msra.mxu0 0.0
  %656 = vmatprep.subr.mxu0 0.0
  %657 = vmatpush1.msra.mxu0 0.0
  %658 = vmatprep.subr.mxu0 0.0
  %659 = vmatpush1.msra.mxu0 0.0
  %660 = vmatprep.subr.mxu0 0.0
  %661 = vmatpush1.msra.mxu0 0.0
  %662 = vmatprep.subr.mxu0 0.0
  %663 = vmatpush1.msra.mxu0 0.0
  %664 = vmatprep.subr.mxu0 0.0
  %665 = vmatpush1.msra.mxu0 0.0
  %666 = vmatprep.subr.mxu0 0.0
  %667 = vmatpush1.msra.mxu0 0.0
  %668 = vmatprep.subr.mxu0 0.0
  %669 = vmatpush1.msra.mxu0 0.0
  %670 = vmatprep.subr.mxu0 0.0
  %671 = vmatpush1.msra.mxu0 0.0
  %672 = vmatprep.subr.mxu0 0.0
  %673 = vmatpush1.msra.mxu0 0.0
  %674 = vmatprep.subr.mxu0 0.0
  %675 = vmatpush1.msra.mxu0 0.0
  %676 = vmatprep.mubr.f32.mxu0 0.0
  %677 = vmatmul.mubr.f32.gmra.mrb[0].mxu0 %v609
  %v678 = vpop.f32.mrb[0].mxu0
  %v679 = vadd.f32 0.0, %v678
  %v680 = vpop.f32.mrb[0].mxu0
  %681 = vdwg.mxu0
  %v682 = vadd.f32 %v611, %v679
  %v683 = vtanh.pop %v682
  %684 = vst [vmem:[#allocation4 + $0x18] sm:$0xff] %v683
  %v685 = vld [vmem:[#allocation3 + $0x20] sm:$0xff]
  %686 = vmatprep.subr.mxu0 0.0
  %687 = vmatpush1.msra.mxu0 %v373
  %688 = vmatprep.subr.mxu0 0.0
  %689 = vmatpush1.msra.mxu0 %v374
  %690 = vmatprep.subr.mxu0 0.0
  %691 = vmatpush1.msra.mxu0 %v375
  %692 = vmatprep.subr.mxu0 0.0
  %693 = vmatpush1.msra.mxu0 %v376
  %694 = vmatprep.subr.mxu0 0.0
  %695 = vmatpush1.msra.mxu0 %v377
  %696 = vmatprep.subr.mxu0 0.0
  %697 = vmatpush1.msra.mxu0 %v378
  %698 = vmatprep.subr.mxu0 0.0
  %699 = vmatpush1.msra.mxu0 %v379
  %700 = vmatprep.subr.mxu0 0.0
  %701 = vmatpush1.msra.mxu0 %v380
  %702 = vmatprep.subr.mxu0 0.0
  %703 = vmatpush1.msra.mxu0 %v381
  %704 = vmatprep.subr.mxu0 0.0
  %705 = vmatpush1.msra.mxu0 %v382
  %706 = vmatprep.subr.mxu0 0.0
  %707 = vmatpush1.msra.mxu0 %v383
  %708 = vmatprep.subr.mxu0 0.0
  %709 = vmatpush1.msra.mxu0 %v384
  %710 = vmatprep.subr.mxu0 0.0
  %711 = vmatpush1.msra.mxu0 %v385
  %712 = vmatprep.subr.mxu0 0.0
  %713 = vmatpush1.msra.mxu0 %v386
  %714 = vmatprep.subr.mxu0 0.0
  %715 = vmatpush1.msra.mxu0 %v387
  %716 = vmatprep.subr.mxu0 0.0
  %717 = vmatpush1.msra.mxu0 %v388
  %718 = vmatprep.subr.mxu0 0.0
  %719 = vmatpush1.msra.mxu0 0.0
  %720 = vmatprep.subr.mxu0 0.0
  %721 = vmatpush1.msra.mxu0 0.0
  %722 = vmatprep.subr.mxu0 0.0
  %723 = vmatpush1.msra.mxu0 0.0
  %724 = vmatprep.subr.mxu0 0.0
  %725 = vmatpush1.msra.mxu0 0.0
  %726 = vmatprep.subr.mxu0 0.0
  %727 = vmatpush1.msra.mxu0 0.0
  %728 = vmatprep.subr.mxu0 0.0
  %729 = vmatpush1.msra.mxu0 0.0
  %730 = vmatprep.subr.mxu0 0.0
  %731 = vmatpush1.msra.mxu0 0.0
  %732 = vmatprep.subr.mxu0 0.0
  %733 = vmatpush1.msra.mxu0 0.0
  %734 = vmatprep.subr.mxu0 0.0
  %735 = vmatpush1.msra.mxu0 0.0
  %736 = vmatprep.subr.mxu0 0.0
  %737 = vmatpush1.msra.mxu0 0.0
  %738 = vmatprep.subr.mxu0 0.0
  %739 = vmatpush1.msra.mxu0 0.0
  %740 = vmatprep.subr.mxu0 0.0
  %741 = vmatpush1.msra.mxu0 0.0
  %742 = vmatprep.subr.mxu0 0.0
  %743 = vmatpush1.msra.mxu0 0.0
  %744 = vmatprep.subr.mxu0 0.0
  %745 = vmatpush1.msra.mxu0 0.0
  %746 = vmatprep.subr.mxu0 0.0
  %747 = vmatpush1.msra.mxu0 0.0
  %748 = vmatprep.subr.mxu0 0.0
  %749 = vmatpush1.msra.mxu0 0.0
  %750 = vmatprep.mubr.f32.mxu0 0.0
  %751 = vmatmul.mubr.f32.gmra.mrb[0].mxu0 %v683
  %v752 = vpop.f32.mrb[0].mxu0
  %v753 = vadd.f32 0.0, %v752
  %v754 = vpop.f32.mrb[0].mxu0
  %755 = vdwg.mxu0
  %v756 = vadd.f32 %v685, %v753
  %v757 = vtanh.pop %v756
  %758 = vst [vmem:[#allocation4 + $0x20] sm:$0xff] %v757
  %v759 = vld [vmem:[#allocation3 + $0x28] sm:$0xff]
  %760 = vmatprep.subr.mxu0 0.0
  %761 = vmatpush1.msra.mxu0 %v373
  %762 = vmatprep.subr.mxu0 0.0
  %763 = vmatpush1.msra.mxu0 %v374
  %764 = vmatprep.subr.mxu0 0.0
  %765 = vmatpush1.msra.mxu0 %v375
  %766 = vmatprep.subr.mxu0 0.0
  %767 = vmatpush1.msra.mxu0 %v376
  %768 = vmatprep.subr.mxu0 0.0
  %769 = vmatpush1.msra.mxu0 %v377
  %770 = vmatprep.subr.mxu0 0.0
  %771 = vmatpush1.msra.mxu0 %v378
  %772 = vmatprep.subr.mxu0 0.0
  %773 = vmatpush1.msra.mxu0 %v379
  %774 = vmatprep.subr.mxu0 0.0
  %775 = vmatpush1.msra.mxu0 %v380
  %776 = vmatprep.subr.mxu0 0.0
  %777 = vmatpush1.msra.mxu0 %v381
  %778 = vmatprep.subr.mxu0 0.0
  %779 = vmatpush1.msra.mxu0 %v382
  %780 = vmatprep.subr.mxu0 0.0
  %781 = vmatpush1.msra.mxu0 %v383
  %782 = vmatprep.subr.mxu0 0.0
  %783 = vmatpush1.msra.mxu0 %v384
  %784 = vmatprep.subr.mxu0 0.0
  %785 = vmatpush1.msra.mxu0 %v385
  %786 = vmatprep.subr.mxu0 0.0
  %787 = vmatpush1.msra.mxu0 %v386
  %788 = vmatprep.subr.mxu0 0.0
  %789 = vmatpush1.msra.mxu0 %v387
  %790 = vmatprep.subr.mxu0 0.0
  %791 = vmatpush1.msra.mxu0 %v388
  %792 = vmatprep.subr.mxu0 0.0
  %793 = vmatpush1.msra.mxu0 0.0
  %794 = vmatprep.subr.mxu0 0.0
  %795 = vmatpush1.msra.mxu0 0.0
  %796 = vmatprep.subr.mxu0 0.0
  %797 = vmatpush1.msra.mxu0 0.0
  %798 = vmatprep.subr.mxu0 0.0
  %799 = vmatpush1.msra.mxu0 0.0
  %800 = vmatprep.subr.mxu0 0.0
  %801 = vmatpush1.msra.mxu0 0.0
  %802 = vmatprep.subr.mxu0 0.0
  %803 = vmatpush1.msra.mxu0 0.0
  %804 = vmatprep.subr.mxu0 0.0
  %805 = vmatpush1.msra.mxu0 0.0
  %806 = vmatprep.subr.mxu0 0.0
  %807 = vmatpush1.msra.mxu0 0.0
  %808 = vmatprep.subr.mxu0 0.0
  %809 = vmatpush1.msra.mxu0 0.0
  %810 = vmatprep.subr.mxu0 0.0
  %811 = vmatpush1.msra.mxu0 0.0
  %812 = vmatprep.subr.mxu0 0.0
  %813 = vmatpush1.msra.mxu0 0.0
  %814 = vmatprep.subr.mxu0 0.0
  %815 = vmatpush1.msra.mxu0 0.0
  %816 = vmatprep.subr.mxu0 0.0
  %817 = vmatpush1.msra.mxu0 0.0
  %818 = vmatprep.subr.mxu0 0.0
  %819 = vmatpush1.msra.mxu0 0.0
  %820 = vmatprep.subr.mxu0 0.0
  %821 = vmatpush1.msra.mxu0 0.0
  %822 = vmatprep.subr.mxu0 0.0
  %823 = vmatpush1.msra.mxu0 0.0
  %824 = vmatprep.mubr.f32.mxu0 0.0
  %825 = vmatmul.mubr.f32.gmra.mrb[0].mxu0 %v757
  %v826 = vpop.f32.mrb[0].mxu0
  %v827 = vadd.f32 0.0, %v826
  %v828 = vpop.f32.mrb[0].mxu0
  %829 = vdwg.mxu0
  %v830 = vadd.f32 %v759, %v827
  %v831 = vtanh.pop %v830
  %832 = vst [vmem:[#allocation4 + $0x28] sm:$0xff] %v831
  %v833 = vld [vmem:[#allocation3 + $0x30] sm:$0xff]
  %834 = vmatprep.subr.mxu0 0.0
  %835 = vmatpush1.msra.mxu0 %v373
  %836 = vmatprep.subr.mxu0 0.0
  %837 = vmatpush1.msra.mxu0 %v374
  %838 = vmatprep.subr.mxu0 0.0
  %839 = vmatpush1.msra.mxu0 %v375
  %840 = vmatprep.subr.mxu0 0.0
  %841 = vmatpush1.msra.mxu0 %v376
  %842 = vmatprep.subr.mxu0 0.0
  %843 = vmatpush1.msra.mxu0 %v377
  %844 = vmatprep.subr.mxu0 0.0
  %845 = vmatpush1.msra.mxu0 %v378
  %846 = vmatprep.subr.mxu0 0.0
  %847 = vmatpush1.msra.mxu0 %v379
  %848 = vmatprep.subr.mxu0 0.0
  %849 = vmatpush1.msra.mxu0 %v380
  %850 = vmatprep.subr.mxu0 0.0
  %851 = vmatpush1.msra.mxu0 %v381
  %852 = vmatprep.subr.mxu0 0.0
  %853 = vmatpush1.msra.mxu0 %v382
  %854 = vmatprep.subr.mxu0 0.0
  %855 = vmatpush1.msra.mxu0 %v383
  %856 = vmatprep.subr.mxu0 0.0
  %857 = vmatpush1.msra.mxu0 %v384
  %858 = vmatprep.subr.mxu0 0.0
  %859 = vmatpush1.msra.mxu0 %v385
  %860 = vmatprep.subr.mxu0 0.0
  %861 = vmatpush1.msra.mxu0 %v386
  %862 = vmatprep.subr.mxu0 0.0
  %863 = vmatpush1.msra.mxu0 %v387
  %864 = vmatprep.subr.mxu0 0.0
  %865 = vmatpush1.msra.mxu0 %v388
  %866 = vmatprep.subr.mxu0 0.0
  %867 = vmatpush1.msra.mxu0 0.0
  %868 = vmatprep.subr.mxu0 0.0
  %869 = vmatpush1.msra.mxu0 0.0
  %870 = vmatprep.subr.mxu0 0.0
  %871 = vmatpush1.msra.mxu0 0.0
  %872 = vmatprep.subr.mxu0 0.0
  %873 = vmatpush1.msra.mxu0 0.0
  %874 = vmatprep.subr.mxu0 0.0
  %875 = vmatpush1.msra.mxu0 0.0
  %876 = vmatprep.subr.mxu0 0.0
  %877 = vmatpush1.msra.mxu0 0.0
  %878 = vmatprep.subr.mxu0 0.0
  %879 = vmatpush1.msra.mxu0 0.0
  %880 = vmatprep.subr.mxu0 0.0
  %881 = vmatpush1.msra.mxu0 0.0
  %882 = vmatprep.subr.mxu0 0.0
  %883 = vmatpush1.msra.mxu0 0.0
  %884 = vmatprep.subr.mxu0 0.0
  %885 = vmatpush1.msra.mxu0 0.0
  %886 = vmatprep.subr.mxu0 0.0
  %887 = vmatpush1.msra.mxu0 0.0
  %888 = vmatprep.subr.mxu0 0.0
  %889 = vmatpush1.msra.mxu0 0.0
  %890 = vmatprep.subr.mxu0 0.0
  %891 = vmatpush1.msra.mxu0 0.0
  %892 = vmatprep.subr.mxu0 0.0
  %893 = vmatpush1.msra.mxu0 0.0
  %894 = vmatprep.subr.mxu0 0.0
  %895 = vmatpush1.msra.mxu0 0.0
  %896 = vmatprep.subr.mxu0 0.0
  %897 = vmatpush1.msra.mxu0 0.0
  %898 = vmatprep.mubr.f32.mxu0 0.0
  %899 = vmatmul.mubr.f32.gmra.mrb[0].mxu0 %v831
  %v900 = vpop.f32.mrb[0].mxu0
  %v901 = vadd.f32 0.0, %v900
  %v902 = vpop.f32.mrb[0].mxu0
  %903 = vdwg.mxu0
  %v904 = vadd.f32 %v833, %v901
  %v905 = vtanh.pop %v904
  %906 = vst [vmem:[#allocation4 + $0x30] sm:$0xff] %v905
  %v907 = vld [vmem:[#allocation3 + $0x38] sm:$0xff]
  %908 = vmatprep.subr.mxu0 0.0
  %909 = vmatpush1.msra.mxu0 %v373
  %910 = vmatprep.subr.mxu0 0.0
  %911 = vmatpush1.msra.mxu0 %v374
  %912 = vmatprep.subr.mxu0 0.0
  %913 = vmatpush1.msra.mxu0 %v375
  %914 = vmatprep.subr.mxu0 0.0
  %915 = vmatpush1.msra.mxu0 %v376
  %916 = vmatprep.subr.mxu0 0.0
  %917 = vmatpush1.msra.mxu0 %v377
  %918 = vmatprep.subr.mxu0 0.0
  %919 = vmatpush1.msra.mxu0 %v378
  %920 = vmatprep.subr.mxu0 0.0
  %921 = vmatpush1.msra.mxu0 %v379
  %922 = vmatprep.subr.mxu0 0.0
  %923 = vmatpush1.msra.mxu0 %v380
  %924 = vmatprep.subr.mxu0 0.0
  %925 = vmatpush1.msra.mxu0 %v381
  %926 = vmatprep.subr.mxu0 0.0
  %927 = vmatpush1.msra.mxu0 %v382
  %928 = vmatprep.subr.mxu0 0.0
  %929 = vmatpush1.msra.mxu0 %v383
  %930 = vmatprep.subr.mxu0 0.0
  %931 = vmatpush1.msra.mxu0 %v384
  %932 = vmatprep.subr.mxu0 0.0
  %933 = vmatpush1.msra.mxu0 %v385
  %934 = vmatprep.subr.mxu0 0.0
  %935 = vmatpush1.msra.mxu0 %v386
  %936 = vmatprep.subr.mxu0 0.0
  %937 = vmatpush1.msra.mxu0 %v387
  %938 = vmatprep.subr.mxu0 0.0
  %939 = vmatpush1.msra.mxu0 %v388
  %940 = vmatprep.subr.mxu0 0.0
  %941 = vmatpush1.msra.mxu0 0.0
  %942 = vmatprep.subr.mxu0 0.0
  %943 = vmatpush1.msra.mxu0 0.0
  %944 = vmatprep.subr.mxu0 0.0
  %945 = vmatpush1.msra.mxu0 0.0
  %946 = vmatprep.subr.mxu0 0.0
  %947 = vmatpush1.msra.mxu0 0.0
  %948 = vmatprep.subr.mxu0 0.0
  %949 = vmatpush1.msra.mxu0 0.0
  %950 = vmatprep.subr.mxu0 0.0
  %951 = vmatpush1.msra.mxu0 0.0
  %952 = vmatprep.subr.mxu0 0.0
  %953 = vmatpush1.msra.mxu0 0.0
  %954 = vmatprep.subr.mxu0 0.0
  %955 = vmatpush1.msra.mxu0 0.0
  %956 = vmatprep.subr.mxu0 0.0
  %957 = vmatpush1.msra.mxu0 0.0
  %958 = vmatprep.subr.mxu0 0.0
  %959 = vmatpush1.msra.mxu0 0.0
  %960 = vmatprep.subr.mxu0 0.0
  %961 = vmatpush1.msra.mxu0 0.0
  %962 = vmatprep.subr.mxu0 0.0
  %963 = vmatpush1.msra.mxu0 0.0
  %964 = vmatprep.subr.mxu0 0.0
  %965 = vmatpush1.msra.mxu0 0.0
  %966 = vmatprep.subr.mxu0 0.0
  %967 = vmatpush1.msra.mxu0 0.0
  %968 = vmatprep.subr.mxu0 0.0
  %969 = vmatpush1.msra.mxu0 0.0
  %970 = vmatprep.subr.mxu0 0.0
  %971 = vmatpush1.msra.mxu0 0.0
  %972 = vmatprep.mubr.f32.mxu0 0.0
  %973 = vmatmul.mubr.f32.gmra.mrb[0].mxu0 %v905
  %v974 = vpop.f32.mrb[0].mxu0
  %v975 = vadd.f32 0.0, %v974
  %v976 = vpop.f32.mrb[0].mxu0
  %977 = vdwg.mxu0
  %v978 = vadd.f32 %v907, %v975
  %v979 = vtanh.pop %v978
  %980 = vst [vmem:[#allocation4 + $0x38] sm:$0xff] %v979
  %981 = vst [vmem:[#allocation2] sm:$0xff] %v979
  %v982 = vld [vmem:[#allocation4] sm:$0xff]
  %v983 = vld [vmem:[#allocation4 + $0x8] sm:$0xff]
  %v984 = vld [vmem:[#allocation4 + $0x10] sm:$0xff]
  %v985 = vld [vmem:[#allocation4 + $0x18] sm:$0xff]
  %v986 = vld [vmem:[#allocation4 + $0x20] sm:$0xff]
  %v987 = vld [vmem:[#allocation4 + $0x28] sm:$0xff]
  %v988 = vld [vmem:[#allocation4 + $0x30] sm:$0xff]
  %v989 = vld [vmem:[#allocation4 + $0x38] sm:$0xff]
  %v990 = vld [vmem:[%s4] sm:$0xff]
  %v991 = vld [vmem:[%s4 + $0x8] sm:$0xff]
  %v992 = vld [vmem:[%s4 + $0x10] sm:$0xff]
  %v993 = vld [vmem:[%s4 + $0x18] sm:$0xff]
  %v994 = vld [vmem:[%s4 + $0x20] sm:$0xff]
  %v995 = vld [vmem:[%s4 + $0x28] sm:$0xff]
  %v996 = vld [vmem:[%s4 + $0x30] sm:$0xff]
  %v997 = vld [vmem:[%s4 + $0x38] sm:$0xff]
  %v998 = vld [vmem:[%s4 + $0x40] sm:$0xff]
  %v999 = vld [vmem:[%s4 + $0x48] sm:$0xff]
  %v1000 = vld [vmem:[%s4 + $0x50] sm:$0xff]
  %v1001 = vld [vmem:[%s4 + $0x58] sm:$0xff]
  %v1002 = vld [vmem:[%s4 + $0x60] sm:$0xff]
  %v1003 = vld [vmem:[%s4 + $0x68] sm:$0xff]
  %v1004 = vld [vmem:[%s4 + $0x70] sm:$0xff]
  %v1005 = vld [vmem:[%s4 + $0x78] sm:$0xff]
  %v1006 = vld [vmem:[%s5] sm:$0x1]
  %v1008 = vlaneseq
  %v1009 = vshrl.u32 %v1008, 7
  %v1010 = vsub.s32 0, %v1009
  %v1011 = vrot.slane %v1006, %v1010
  %1013 = vmatprep.subr.mxu0 0.0
  %1014 = vmatpush1.msra.mxu0 %v990
  %1015 = vmatprep.subr.mxu0 0.0
  %1016 = vmatpush1.msra.mxu0 %v991
  %1017 = vmatprep.subr.mxu0 0.0
  %1018 = vmatpush1.msra.mxu0 %v992
  %1019 = vmatprep.subr.mxu0 0.0
  %1020 = vmatpush1.msra.mxu0 %v993
  %1021 = vmatprep.subr.mxu0 0.0
  %1022 = vmatpush1.msra.mxu0 %v994
  %1023 = vmatprep.subr.mxu0 0.0
  %1024 = vmatpush1.msra.mxu0 %v995
  %1025 = vmatprep.subr.mxu0 0.0
  %1026 = vmatpush1.msra.mxu0 %v996
  %1027 = vmatprep.subr.mxu0 0.0
  %1028 = vmatpush1.msra.mxu0 %v997
  %1029 = vmatprep.subr.mxu0 0.0
  %1030 = vmatpush1.msra.mxu0 %v998
  %1031 = vmatprep.subr.mxu0 0.0
  %1032 = vmatpush1.msra.mxu0 %v999
  %1033 = vmatprep.subr.mxu0 0.0
  %1034 = vmatpush1.msra.mxu0 %v1000
  %1035 = vmatprep.subr.mxu0 0.0
  %1036 = vmatpush1.msra.mxu0 %v1001
  %1037 = vmatprep.subr.mxu0 0.0
  %1038 = vmatpush1.msra.mxu0 %v1002
  %1039 = vmatprep.subr.mxu0 0.0
  %1040 = vmatpush1.msra.mxu0 %v1003
  %1041 = vmatprep.subr.mxu0 0.0
  %1042 = vmatpush1.msra.mxu0 %v1004
  %1043 = vmatprep.subr.mxu0 0.0
  %1044 = vmatpush1.msra.mxu0 %v1005
  %1045 = vmatprep.subr.mxu0 0.0
  %1046 = vmatpush1.msra.mxu0 0.0
  %1047 = vmatprep.subr.mxu0 0.0
  %1048 = vmatpush1.msra.mxu0 0.0
  %1049 = vmatprep.subr.mxu0 0.0
  %1050 = vmatpush1.msra.mxu0 0.0
  %1051 = vmatprep.subr.mxu0 0.0
  %1052 = vmatpush1.msra.mxu0 0.0
  %1053 = vmatprep.subr.mxu0 0.0
  %1054 = vmatpush1.msra.mxu0 0.0
  %1055 = vmatprep.subr.mxu0 0.0
  %1056 = vmatpush1.msra.mxu0 0.0
  %1057 = vmatprep.subr.mxu0 0.0
  %1058 = vmatpush1.msra.mxu0 0.0
  %1059 = vmatprep.subr.mxu0 0.0
  %1060 = vmatpush1.msra.mxu0 0.0
  %1061 = vmatprep.subr.mxu0 0.0
  %1062 = vmatpush1.msra.mxu0 0.0
  %1063 = vmatprep.subr.mxu0 0.0
  %1064 = vmatpush1.msra.mxu0 0.0
  %1065 = vmatprep.subr.mxu0 0.0
  %1066 = vmatpush1.msra.mxu0 0.0
  %1067 = vmatprep.subr.mxu0 0.0
  %1068 = vmatpush1.msra.mxu0 0.0
  %1069 = vmatprep.subr.mxu0 0.0
  %1070 = vmatpush1.msra.mxu0 0.0
  %1071 = vmatprep.subr.mxu0 0.0
  %1072 = vmatpush1.msra.mxu0 0.0
  %1073 = vmatprep.subr.mxu0 0.0
  %1074 = vmatpush1.msra.mxu0 0.0
  %1075 = vmatprep.subr.mxu0 0.0
  %1076 = vmatpush1.msra.mxu0 0.0
  %1077 = vmatprep.mubr.f32.mxu0 0.0
  %1078 = vmatmul.mubr.f32.gmra.mrb[0].mxu0 %v982
  %v1079 = vpop.f32.mrb[0].mxu0
  %v1080 = vadd.f32 %v1011, %v1079
  %v1081 = vpop.f32.mrb[0].mxu0
  %1082 = vmatprep.mubr.f32.mxu0 0.0
  %1083 = vmatmul.mubr.f32.gmra.mrb[0].mxu0 %v983
  %v1084 = vpop.f32.mrb[0].mxu0
  %v1085 = vadd.f32 %v1011, %v1084
  %v1086 = vpop.f32.mrb[0].mxu0
  %1087 = vmatprep.mubr.f32.mxu0 0.0
  %1088 = vmatmul.mubr.f32.gmra.mrb[0].mxu0 %v984
  %v1089 = vpop.f32.mrb[0].mxu0
  %v1090 = vadd.f32 %v1011, %v1089
  %v1091 = vpop.f32.mrb[0].mxu0
  %1092 = vmatprep.mubr.f32.mxu0 0.0
  %1093 = vmatmul.mubr.f32.gmra.mrb[0].mxu0 %v985
  %v1094 = vpop.f32.mrb[0].mxu0
  %v1095 = vadd.f32 %v1011, %v1094
  %v1096 = vpop.f32.mrb[0].mxu0
  %1097 = vmatprep.mubr.f32.mxu0 0.0
  %1098 = vmatmul.mubr.f32.gmra.mrb[0].mxu0 %v986
  %v1099 = vpop.f32.mrb[0].mxu0
  %v1100 = vadd.f32 %v1011, %v1099
  %v1101 = vpop.f32.mrb[0].mxu0
  %1102 = vmatprep.mubr.f32.mxu0 0.0
  %1103 = vmatmul.mubr.f32.gmra.mrb[0].mxu0 %v987
  %v1104 = vpop.f32.mrb[0].mxu0
  %v1105 = vadd.f32 %v1011, %v1104
  %v1106 = vpop.f32.mrb[0].mxu0
  %1107 = vmatprep.mubr.f32.mxu0 0.0
  %1108 = vmatmul.mubr.f32.gmra.mrb[0].mxu0 %v988
  %v1109 = vpop.f32.mrb[0].mxu0
  %v1110 = vadd.f32 %v1011, %v1109
  %v1111 = vpop.f32.mrb[0].mxu0
  %1112 = vmatprep.mubr.f32.mxu0 0.0
  %1113 = vmatmul.mubr.f32.gmra.mrb[0].mxu0 %v989
  %v1114 = vpop.f32.mrb[0].mxu0
  %v1115 = vadd.f32 %v1011, %v1114
  %v1116 = vpop.f32.mrb[0].mxu0
  %1117 = vdwg.mxu0
  %1118 = vst [vmem:[%s6] sm:$0xff] %v1080
  %s1119 = scalar_lea.vmem %s6, 8
  %1120 = vst [vmem:[%s1119] sm:$0xff] %v1085
  %s1121 = scalar_lea.vmem %s6, 16
  %1122 = vst [vmem:[%s1121] sm:$0xff] %v1090
  %s1123 = scalar_lea.vmem %s6, 24
  %1124 = vst [vmem:[%s1123] sm:$0xff] %v1095
  %s1125 = scalar_lea.vmem %s6, 32
  %1126 = vst [vmem:[%s1125] sm:$0xff] %v1100
  %s1127 = scalar_lea.vmem %s6, 40
  %1128 = vst [vmem:[%s1127] sm:$0xff] %v1105
  %s1129 = scalar_lea.vmem %s6, 48
  %1130 = vst [vmem:[%s1129] sm:$0xff] %v1110
  %s1131 = scalar_lea.vmem %s6, 56
  %1132 = vst [vmem:[%s1131] sm:$0xff] %v1115
  // Predicated region
  $region26: #{char_rnn_forward.3} parent=0 // pred_check
    %p1133 = pneg %p366
  $region27: #{char_rnn_forward.3} parent=0 // pred_check_branch
    %1135 = sbr.rel (%p1133) target = $region29
  $region28: #{char_rnn_forward.3} parent=0 // pred_region
    %1136 = vst [vmem:[%s7] sm:$0xff] %v979
  $region29: #{char_rnn_forward.3} parent=0 // pred_fallthru
    _
  // Predicated region
  $region30: #{char_rnn_forward.3} parent=0 // pred_check
    _
  $region31: #{char_rnn_forward.3} parent=0 // pred_check_branch
    %1138 = sbr.rel (0) target = $region33
  $region32: #{char_rnn_forward.3} parent=0 // pred_region
    _
  $region33: #{char_rnn_forward.3} parent=0 // pred_fallthru
    _
  // Predicated region
  $region34: #{char_rnn_forward.3} parent=0 // pred_check
    _
  $region35: #{char_rnn_forward.3} parent=0 // pred_check_branch
    %1140 = sbr.rel (0) target = $region37
  $region36: #{char_rnn_forward.3} parent=0 // pred_region
    _
  $region37: #{char_rnn_forward.3} parent=0 // pred_fallthru
    _
  // Predicated region
  $region38: #{char_rnn_forward.3} parent=0 // pred_check
    _
  $region39: #{char_rnn_forward.3} parent=0 // pred_check_branch
    %1142 = sbr.rel (0) target = $region41
  $region40: #{char_rnn_forward.3} parent=0 // pred_region
    _
  $region41: #{char_rnn_forward.3} parent=0 // pred_fallthru
    _
  // Predicated region
  $region42: #{char_rnn_forward.3} parent=0 // pred_check
    _
  $region43: #{char_rnn_forward.3} parent=0 // pred_check_branch
    %1144 = sbr.rel (0) target = $region45
  $region44: #{char_rnn_forward.3} parent=0 // pred_region
    _
  $region45: #{char_rnn_forward.3} parent=0 // pred_fallthru
    _

</llo_original>
